<compile_context>
chip_gen: v7x
topology: tpu7x:2x2x1
jax: 0.10.0
libtpu: 0.0.40
codegen_flags: <defaults>
</compile_context>

<pallas_src>
import math
import functools

import jax
import jax.numpy as jnp
import numpy as np
from jax.experimental import pallas as pl
from jax.experimental.pallas import tpu as pltpu

KSIZE = 7      # CausalConv1d kernel size
N_HEADS = 5    # branch-2 head count (torch.chunk(..., 5, dim=2)); needs L % 5 == 0
BN_EPS = 1e-5

# dtype of the big folded (CL, CL) matrices.  Keep f32 at this toy size so the
# 1e-4-level check against the unfused reference holds; switch to jnp.bfloat16
# at scaled CL (halves VMEM/HBM bytes, bf16 MXU fast path) and loosen the
# tolerance in __main__ accordingly.
WEIGHT_DTYPE = jnp.float32


# ----------------------------------------------------------------------------
# Fused kernel: entire TCE forward for TB batch elements per grid step.
# ----------------------------------------------------------------------------
def _tce_fused_kernel(x_ref, cw_ref, cb_ref, bd_ref, hm_ref, g_ref, d_ref,
                      out_ref, *, C, L, TB):
    """Shapes seen by the kernel (one grid step = TB batch elements):

    x_ref  : (TB*C, L)         input rows in natural order r = b*C + c
    cw_ref : (7*TB*C, K*TB*C)  block-diag-over-batch conv weight; row blocks are
                               [x-copy, b1x1, b1x2, b1x3, b2x1, b2x2, b2x3] and
                               rows inside a block are channel-major: o*TB + b
    cb_ref : (7*TB*C, 1)       matching bias column (zeros for the x-copy block)
    bd_ref : (TB*C, TB*C)      same-batch mask, pre-scaled by 1/sqrt(L)
    hm_ref : (N_HEADS, 1, L)   0/1 lane masks for the branch-2 heads
    g_ref  : (2*C, L, C*L)     folded BN1->lin1->lin2->residual->BN2->converge
                               weight, split per input channel (branch-major)
    d_ref  : (1, C*L)          folded bias of the whole post-attention chain
    out_ref: (TB, C*L)         flattened output rows (single lane-dense store)
    """
    K = KSIZE
    TBC = TB * C
    CL = C * L

    # --- causal left-pad (in-kernel) + shared im2col slab ----------------------
    x2d = x_ref[...]                                                    # (TBC, L)
    xpad = jnp.concatenate(
        [jnp.zeros((TBC, K - 1), jnp.float32), x2d], axis=1)            # (TBC, L+K-1)
    slab = jnp.concatenate([xpad[:, k:k + L] for k in range(K)], axis=0)  # (K*TBC, L)

    # --- ALL six causal convs (+ channel-major x copy) in ONE MXU matmul -------
    conv = jnp.dot(cw_ref[...], slab,
                   preferred_element_type=jnp.float32) + cb_ref[...]    # (7*TBC, L)
    xcm = conv[0 * TBC:1 * TBC]          # x with rows c*TB + b (channel-major)

    bd = bd_ref[...]                     # same-batch mask / sqrt(L), (TBC, TBC)

    # --- branch 1: single-head self-attention as full-width 2-D matmuls --------
    x1 = conv[1 * TBC:2 * TBC]
    x2 = conv[2 * TBC:3 * TBC]
    x3 = conv[3 * TBC:4 * TBC]
    s = jax.lax.dot_general(x1, x2, (((1,), (1,)), ((), ())),
                            preferred_element_type=jnp.float32) * bd
    z1 = jax.nn.sigmoid(jnp.dot(s, x3, preferred_element_type=jnp.float32)) + xcm

    # --- branch 2: 5-head attention via lane masks (no slices / stacks) --------
    x1 = conv[4 * TBC:5 * TBC]
    x2 = conv[5 * TBC:6 * TBC]
    x3 = conv[6 * TBC:7 * TBC]
    pre = jnp.zeros((TBC, L), jnp.float32)
    for h in range(N_HEADS):
        m = hm_ref[h]                                     # (1, L) 0/1 head mask
        sh = jax.lax.dot_general(x1, x2 * m, (((1,), (1,)), ((), ())),
                                 preferred_element_type=jnp.float32) * bd
        pre = pre + jnp.dot(sh, x3 * m, preferred_element_type=jnp.float32)
    z2 = jax.nn.sigmoid(pre) + xcm

    # --- fully folded linear chain + converge: 2*C accumulating matmuls --------
    acc = jnp.zeros((TB, CL), jnp.float32)
    for c in range(C):
        zc1 = z1[c * TB:(c + 1) * TB, :].astype(g_ref.dtype)   # z[:, c, :]
        zc2 = z2[c * TB:(c + 1) * TB, :].astype(g_ref.dtype)
        acc = acc + jnp.dot(zc1, g_ref[c], preferred_element_type=jnp.float32)
        acc = acc + jnp.dot(zc2, g_ref[C + c], preferred_element_type=jnp.float32)
    out_ref[...] = (acc + d_ref[...]).astype(out_ref.dtype)


# ----------------------------------------------------------------------------
# One-time parameter preparation: layout + algebraic folding (eval mode).
# ----------------------------------------------------------------------------
def prepare_params(params, *, C, L, TB):
    CL = C * L
    TBC = TB * C
    K = KSIZE

    # ---- block-diag-over-batch conv mega-weight (one matmul = all convs) ------
    wbig = np.zeros((7 * TBC, K * TBC), np.float32)
    bbig = np.zeros((7 * TBC, 1), np.float32)
    for b in range(TB):                               # x-copy block (tap k = K-1)
        for c in range(C):
            wbig[c * TB + b, (K - 1) * TBC + b * C + c] = 1.0
    for br, bp in enumerate((params["b1"], params["b2"])):
        cw = np.asarray(bp["conv_w"])                 # (3, C, C, K)
        cb = np.asarray(bp["conv_b"])                 # (3, C)
        for ci in range(3):
            blk = 1 + br * 3 + ci
            for b in range(TB):
                for o in range(C):
                    row = blk * TBC + o * TB + b
                    bbig[row, 0] = cb[ci, o]
                    for k in range(K):
                        for cin in range(C):
                            wbig[row, k * TBC + b * C + cin] = cw[ci, o, cin, k]

    # ---- same-batch attention mask, pre-scaled by 1/sqrt(L) -------------------
    batch_of_row = np.arange(TBC) % TB                # rows are c*TB + b
    bdscale = (batch_of_row[:, None] == batch_of_row[None, :]).astype(np.float32)
    bdscale /= math.sqrt(L)

    # ---- branch-2 head lane masks ---------------------------------------------
    hl = L // N_HEADS
    hmask = np.zeros((N_HEADS, 1, L), np.float32)
    for h in range(N_HEADS):
        hmask[h, 0, h * hl:(h + 1) * hl] = 1.0

    # ---- fold BN1 -> lin1 -> dropout(id) -> lin2 -> residual -> BN2 -> converge
    def fold(bp, wc_half):
        S1 = jnp.repeat(bp["bn1_scale"], L)
        T1 = jnp.repeat(bp["bn1_shift"], L)
        S2 = jnp.repeat(bp["bn2_scale"], L)
        T2 = jnp.repeat(bp["bn2_shift"], L)
        W12 = bp["lin1_w"].T @ bp["lin2_w"].T                      # (CL, CL)
        b12 = bp["lin1_b"] @ bp["lin2_w"].T + bp["lin2_b"]         # (CL,)
        M = (jnp.eye(CL, dtype=jnp.float32) + W12) * S2[None, :]
        A = S1[:, None] * M                    # acts on f0 = flatten(att + x)
        e = T1 @ M + b12 * S2 + T2
        wct = wc_half.T                                            # (CL, CL)
        return A @ wct, e @ wct

    g1, d1 = fold(params["b1"], params["converge_w"][:, :CL])
    g2, d2 = fold(params["b2"], params["converge_w"][:, CL:])
    g = jnp.concatenate([g1.reshape(C, L, CL), g2.reshape(C, L, CL)], axis=0)

    return dict(
        conv_w=jnp.asarray(wbig),
        conv_b=jnp.asarray(bbig),
        bdscale=jnp.asarray(bdscale),
        headmask=jnp.asarray(hmask),
        G=g.astype(WEIGHT_DTYPE),
        d=(d1 + d2 + params["converge_b"]).reshape(1, CL).astype(jnp.float32),
    )


# ----------------------------------------------------------------------------
# Forward: one fused pallas_call, grid over batch tiles ("parallel").
# ----------------------------------------------------------------------------
def tce_forward(x, prep, *, C, L, TB=8):
    B = x.shape[0]
    CL = C * L
    assert L % N_HEADS == 0, "torch.chunk(.,5,dim=2) equal-head split needs L % 5 == 0"
    assert B % TB == 0, "batch must be a multiple of the batch tile"
    TBC = TB * C

    x2d = x.reshape(B * C, L)                 # metadata-only flatten

    def _const_spec(a):
        nd = a.ndim
        return pl.BlockSpec(a.shape, lambda g, _n=nd: (0,) * _n)

    consts = (prep["conv_w"], prep["conv_b"], prep["bdscale"], prep["headmask"],
              prep["G"], prep["d"])

    kernel = functools.partial(_tce_fused_kernel, C=C, L=L, TB=TB)
    out2d = pl.pallas_call(
        kernel,
        out_shape=jax.ShapeDtypeStruct((B, CL), jnp.float32),
        grid=(B // TB,),
        in_specs=[pl.BlockSpec((TBC, L), lambda g: (g, 0))]
                 + [_const_spec(a) for a in consts],
        out_specs=pl.BlockSpec((TB, CL), lambda g: (g, 0)),
        compiler_params=pltpu.CompilerParams(
            dimension_semantics=("parallel",),
            vmem_limit_bytes=32 * 1024 * 1024,
        ),
    )(x2d, *consts)
    return out2d.reshape(B, C, L)             # metadata-only unflatten


# ----------------------------------------------------------------------------
# Parameters (deterministic, PyTorch-default-style init; BN as fresh eval BN)
# ----------------------------------------------------------------------------
def init_params(key, C, L):
    CL = C * L
    keys = iter(jax.random.split(key, 16))

    def conv_stack():
        bound = 1.0 / math.sqrt(C * KSIZE)
        w = jax.random.uniform(next(keys), (3, C, C, KSIZE), jnp.float32, -bound, bound)
        b = jax.random.uniform(next(keys), (3, C), jnp.float32, -bound, bound)
        return w, b

    def linear(n_in, n_out):
        bound = 1.0 / math.sqrt(n_in)
        w = jax.random.uniform(next(keys), (n_out, n_in), jnp.float32, -bound, bound)
        b = jax.random.uniform(next(keys), (n_out,), jnp.float32, -bound, bound)
        return w, b

    def bnorm():
        gamma = jnp.ones((C,), jnp.float32)
        beta = jnp.zeros((C,), jnp.float32)
        mean = jnp.zeros((C,), jnp.float32)
        var = jnp.ones((C,), jnp.float32)
        scale = gamma / jnp.sqrt(var + BN_EPS)
        shift = beta - mean * scale
        return scale, shift

    params = {}
    for br in ("b1", "b2"):
        cw, cb = conv_stack()
        l1w, l1b = linear(CL, CL)
        l2w, l2b = linear(CL, CL)
        bn1s, bn1b = bnorm()
        bn2s, bn2b = bnorm()
        params[br] = dict(conv_w=cw, conv_b=cb,
                          lin1_w=l1w, lin1_b=l1b, lin2_w=l2w, lin2_b=l2b,
                          bn1_scale=bn1s, bn1_shift=bn1b,
                          bn2_scale=bn2s, bn2_shift=bn2b)
    cw_, cb_ = linear(2 * CL, CL)
    params["converge_w"] = cw_
    params["converge_b"] = cb_
    return params


# ----------------------------------------------------------------------------
# Pure-JAX reference (mirrors the PyTorch forward, eval mode)
# ----------------------------------------------------------------------------
def tce_reference(x, params, *, C, L):
    B = x.shape[0]
    CL = C * L
    xpad = jnp.pad(x, ((0, 0), (0, 0), (KSIZE - 1, 0)))

    def causal_conv(w, b):
        y = jnp.zeros((B, C, L), jnp.float32)
        for k in range(KSIZE):
            y = y + jnp.einsum("oc,bcl->bol", w[:, :, k], xpad[:, :, k:k + L])
        return y + b[None, :, None]

    def branch(p, n_heads):
        x1 = causal_conv(p["conv_w"][0], p["conv_b"][0])
        x2 = causal_conv(p["conv_w"][1], p["conv_b"][1])
        x3 = causal_conv(p["conv_w"][2], p["conv_b"][2])
        hl = L // n_heads
        parts = []
        for h in range(n_heads):
            sl = slice(h * hl, (h + 1) * hl)
            s = jnp.einsum("bcl,bdl->bcd", x1[:, :, sl], x2[:, :, sl]) / math.sqrt(L)
            parts.append(jax.nn.sigmoid(jnp.einsum("bcd,bdl->bcl", s, x3[:, :, sl])))
        att = jnp.concatenate(parts, axis=-1)
        att = (att + x) * p["bn1_scale"][None, :, None] + p["bn1_shift"][None, :, None]
        f = att.reshape(B, CL)
        h1 = f @ p["lin1_w"].T + p["lin1_b"]
        h2 = h1 @ p["lin2_w"].T + p["lin2_b"]
        o = (f + h2).reshape(B, C, L)
        return o * p["bn2_scale"][None, :, None] + p["bn2_shift"][None, :, None]

    o1 = branch(params["b1"], 1)
    o2 = branch(params["b2"], N_HEADS)
    merged = jnp.concatenate([o1, o2], axis=1).reshape(B, 2 * CL)
    out = merged @ params["converge_w"].T + params["converge_b"]
    return out.reshape(B, C, L)


if __name__ == "__main__":
    # L % 5 == 0 for the 5-head chunk; B = 2 batch tiles so both v7x TCs get work.
    B, C, L = 16, 4, 20
    TB = 8
    key = jax.random.PRNGKey(0)
    kx, kp = jax.random.split(key)
    x = jax.random.normal(kx, (B, C, L), jnp.float32)
    params = init_params(kp, C, L)

    prep = jax.tree_util.tree_map(jax.block_until_ready,
                                  prepare_params(params, C=C, L=L, TB=TB))

    fwd = jax.jit(functools.partial(tce_forward, C=C, L=L, TB=TB))
    out = jax.block_until_ready(fwd(x, prep))
    assert out.shape == (B, C, L), out.shape

    ref = jax.block_until_ready(tce_reference(x, params, C=C, L=L))
    err = float(jnp.max(jnp.abs(out - ref)))
    tol = 2e-4 if WEIGHT_DTYPE == jnp.float32 else 5e-2
    assert err < tol, f"mismatch vs pure-JAX reference: {err}"
    print("KERNEL_OK")
</pallas_src>

<mosaic_0001>
module attributes {stable_mosaic.version = 11 : i64} {
  func.func @_tce_fused_kernel(%arg0: i32, %arg1: memref<32x20xf32, #tpu.memory_space<vmem>>, %arg2: memref<224x224xf32, #tpu.memory_space<vmem>>, %arg3: memref<224x1xf32, #tpu.memory_space<vmem>>, %arg4: memref<32x32xf32, #tpu.memory_space<vmem>>, %arg5: memref<5x1x20xf32, #tpu.memory_space<vmem>>, %arg6: memref<8x20x80xf32, #tpu.memory_space<vmem>>, %arg7: memref<1x80xf32, #tpu.memory_space<vmem>>, %arg8: memref<8x80xf32, #tpu.memory_space<vmem>>) attributes {dimension_semantics = [#tpu.dimension_semantics<parallel>], iteration_bounds = array<i64: 2>, scalar_prefetch = 0 : i64, scratch_operands = 0 : i64, tpu.core_type = #tpu.core_type<tc>, window_params = [{transform_indices = @transform_0, window_bounds = array<i64: 32, 20>}, {pipeline_mode = #tpu.pipeline_mode<synchronous>, transform_indices = @transform_1, window_bounds = array<i64: 224, 224>}, {pipeline_mode = #tpu.pipeline_mode<synchronous>, transform_indices = @transform_2, window_bounds = array<i64: 224, 1>}, {pipeline_mode = #tpu.pipeline_mode<synchronous>, transform_indices = @transform_3, window_bounds = array<i64: 32, 32>}, {pipeline_mode = #tpu.pipeline_mode<synchronous>, transform_indices = @transform_4, window_bounds = array<i64: 5, 1, 20>}, {pipeline_mode = #tpu.pipeline_mode<synchronous>, transform_indices = @transform_5, window_bounds = array<i64: 8, 20, 80>}, {pipeline_mode = #tpu.pipeline_mode<synchronous>, transform_indices = @transform_6, window_bounds = array<i64: 1, 80>}, {transform_indices = @transform_7, window_bounds = array<i64: 8, 80>}]} {
    %c0 = arith.constant 0 : index
    %c0_0 = arith.constant 0 : index
    %0 = vector.load %arg1[%c0, %c0_0] : memref<32x20xf32, #tpu.memory_space<vmem>>, vector<32x20xf32>
    %cst = arith.constant 0.000000e+00 : f32
    %1 = vector.broadcast %cst : f32 to vector<32x6xf32>
    %2 = tpu.concatenate %1, %0 in 1 : vector<32x6xf32>, vector<32x20xf32> -> vector<32x26xf32>
    %3 = vector.extract_strided_slice %2 {offsets = [0, 0], sizes = [32, 20], strides = [1, 1]} : vector<32x26xf32> to vector<32x20xf32>
    %4 = vector.extract_strided_slice %2 {offsets = [0, 1], sizes = [32, 20], strides = [1, 1]} : vector<32x26xf32> to vector<32x20xf32>
    %5 = vector.extract_strided_slice %2 {offsets = [0, 2], sizes = [32, 20], strides = [1, 1]} : vector<32x26xf32> to vector<32x20xf32>
    %6 = vector.extract_strided_slice %2 {offsets = [0, 3], sizes = [32, 20], strides = [1, 1]} : vector<32x26xf32> to vector<32x20xf32>
    %7 = vector.extract_strided_slice %2 {offsets = [0, 4], sizes = [32, 20], strides = [1, 1]} : vector<32x26xf32> to vector<32x20xf32>
    %8 = vector.extract_strided_slice %2 {offsets = [0, 5], sizes = [32, 20], strides = [1, 1]} : vector<32x26xf32> to vector<32x20xf32>
    %9 = vector.extract_strided_slice %2 {offsets = [0, 6], sizes = [32, 20], strides = [1, 1]} : vector<32x26xf32> to vector<32x20xf32>
    %10 = tpu.concatenate %3, %4, %5, %6, %7, %8, %9 in 0 : vector<32x20xf32>, vector<32x20xf32>, vector<32x20xf32>, vector<32x20xf32>, vector<32x20xf32>, vector<32x20xf32>, vector<32x20xf32> -> vector<224x20xf32>
    %c0_1 = arith.constant 0 : index
    %c0_2 = arith.constant 0 : index
    %11 = vector.load %arg2[%c0_1, %c0_2] : memref<224x224xf32, #tpu.memory_space<vmem>>, vector<224x224xf32>
    %cst_3 = arith.constant dense<0.000000e+00> : vector<224x20xf32>
    %12 = tpu.matmul %11, %10, %cst_3 {dimension_numbers = #tpu.dot_dimension_numbers<[1], [0], [0], [1], [0, 0, 1, 1], [], []>} : vector<224x224xf32>, vector<224x20xf32>, vector<224x20xf32> -> vector<224x20xf32>
    %c0_4 = arith.constant 0 : index
    %c0_5 = arith.constant 0 : index
    %13 = vector.load %arg3[%c0_4, %c0_5] : memref<224x1xf32, #tpu.memory_space<vmem>>, vector<224x1xf32>
    %14 = vector.broadcast %13 : vector<224x1xf32> to vector<224x20xf32>
    %15 = arith.addf %12, %14 : vector<224x20xf32>
    %16 = vector.extract_strided_slice %15 {offsets = [0, 0], sizes = [32, 20], strides = [1, 1]} : vector<224x20xf32> to vector<32x20xf32>
    %c0_6 = arith.constant 0 : index
    %c0_7 = arith.constant 0 : index
    %17 = vector.load %arg4[%c0_6, %c0_7] : memref<32x32xf32, #tpu.memory_space<vmem>>, vector<32x32xf32>
    %18 = vector.extract_strided_slice %15 {offsets = [32, 0], sizes = [32, 20], strides = [1, 1]} : vector<224x20xf32> to vector<32x20xf32>
    %19 = vector.extract_strided_slice %15 {offsets = [64, 0], sizes = [32, 20], strides = [1, 1]} : vector<224x20xf32> to vector<32x20xf32>
    %20 = vector.extract_strided_slice %15 {offsets = [96, 0], sizes = [32, 20], strides = [1, 1]} : vector<224x20xf32> to vector<32x20xf32>
    %cst_8 = arith.constant dense<0.000000e+00> : vector<32x32xf32>
    %21 = tpu.matmul %18, %19, %cst_8 {dimension_numbers = #tpu.dot_dimension_numbers<[1], [1], [0], [0], [0, 0, 1, 0], [], []>} : vector<32x20xf32>, vector<32x20xf32>, vector<32x32xf32> -> vector<32x32xf32>
    %22 = arith.mulf %21, %17 : vector<32x32xf32>
    %cst_9 = arith.constant dense<0.000000e+00> : vector<32x20xf32>
    %23 = tpu.matmul %22, %20, %cst_9 {dimension_numbers = #tpu.dot_dimension_numbers<[1], [0], [0], [1], [0, 0, 1, 1], [], []>} : vector<32x32xf32>, vector<32x20xf32>, vector<32x20xf32> -> vector<32x20xf32>
    %24 = arith.negf %23 : vector<32x20xf32>
    %25 = math.exp %24 : vector<32x20xf32>
    %cst_10 = arith.constant 1.000000e+00 : f32
    %26 = vector.broadcast %cst_10 : f32 to vector<32x20xf32>
    %27 = arith.addf %26, %25 : vector<32x20xf32>
    %28 = arith.divf %26, %27 : vector<32x20xf32>
    %29 = arith.addf %28, %16 : vector<32x20xf32>
    %30 = vector.extract_strided_slice %15 {offsets = [128, 0], sizes = [32, 20], strides = [1, 1]} : vector<224x20xf32> to vector<32x20xf32>
    %31 = vector.extract_strided_slice %15 {offsets = [160, 0], sizes = [32, 20], strides = [1, 1]} : vector<224x20xf32> to vector<32x20xf32>
    %32 = vector.extract_strided_slice %15 {offsets = [192, 0], sizes = [32, 20], strides = [1, 1]} : vector<224x20xf32> to vector<32x20xf32>
    %cst_11 = arith.constant 0.000000e+00 : f32
    %33 = vector.broadcast %cst_11 : f32 to vector<32x20xf32>
    %c0_12 = arith.constant 0 : index
    %c0_13 = arith.constant 0 : index
    %c0_14 = arith.constant 0 : index
    %34 = vector.load %arg5[%c0_12, %c0_13, %c0_14] : memref<5x1x20xf32, #tpu.memory_space<vmem>>, vector<1x1x20xf32>
    %35 = vector.shape_cast %34 : vector<1x1x20xf32> to vector<1x20xf32>
    %36 = vector.broadcast %35 : vector<1x20xf32> to vector<32x20xf32>
    %37 = arith.mulf %31, %36 : vector<32x20xf32>
    %cst_15 = arith.constant dense<0.000000e+00> : vector<32x32xf32>
    %38 = tpu.matmul %30, %37, %cst_15 {dimension_numbers = #tpu.dot_dimension_numbers<[1], [1], [0], [0], [0, 0, 1, 0], [], []>} : vector<32x20xf32>, vector<32x20xf32>, vector<32x32xf32> -> vector<32x32xf32>
    %39 = arith.mulf %38, %17 : vector<32x32xf32>
    %40 = vector.broadcast %35 : vector<1x20xf32> to vector<32x20xf32>
    %41 = arith.mulf %32, %40 : vector<32x20xf32>
    %cst_16 = arith.constant dense<0.000000e+00> : vector<32x20xf32>
    %42 = tpu.matmul %39, %41, %cst_16 {dimension_numbers = #tpu.dot_dimension_numbers<[1], [0], [0], [1], [0, 0, 1, 1], [], []>} : vector<32x32xf32>, vector<32x20xf32>, vector<32x20xf32> -> vector<32x20xf32>
    %43 = arith.addf %33, %42 : vector<32x20xf32>
    %c1 = arith.constant 1 : index
    %c0_17 = arith.constant 0 : index
    %c0_18 = arith.constant 0 : index
    %44 = vector.load %arg5[%c1, %c0_17, %c0_18] : memref<5x1x20xf32, #tpu.memory_space<vmem>>, vector<1x1x20xf32>
    %45 = vector.shape_cast %44 : vector<1x1x20xf32> to vector<1x20xf32>
    %46 = vector.broadcast %45 : vector<1x20xf32> to vector<32x20xf32>
    %47 = arith.mulf %31, %46 : vector<32x20xf32>
    %cst_19 = arith.constant dense<0.000000e+00> : vector<32x32xf32>
    %48 = tpu.matmul %30, %47, %cst_19 {dimension_numbers = #tpu.dot_dimension_numbers<[1], [1], [0], [0], [0, 0, 1, 0], [], []>} : vector<32x20xf32>, vector<32x20xf32>, vector<32x32xf32> -> vector<32x32xf32>
    %49 = arith.mulf %48, %17 : vector<32x32xf32>
    %50 = vector.broadcast %45 : vector<1x20xf32> to vector<32x20xf32>
    %51 = arith.mulf %32, %50 : vector<32x20xf32>
    %cst_20 = arith.constant dense<0.000000e+00> : vector<32x20xf32>
    %52 = tpu.matmul %49, %51, %cst_20 {dimension_numbers = #tpu.dot_dimension_numbers<[1], [0], [0], [1], [0, 0, 1, 1], [], []>} : vector<32x32xf32>, vector<32x20xf32>, vector<32x20xf32> -> vector<32x20xf32>
    %53 = arith.addf %43, %52 : vector<32x20xf32>
    %c2 = arith.constant 2 : index
    %c0_21 = arith.constant 0 : index
    %c0_22 = arith.constant 0 : index
    %54 = vector.load %arg5[%c2, %c0_21, %c0_22] : memref<5x1x20xf32, #tpu.memory_space<vmem>>, vector<1x1x20xf32>
    %55 = vector.shape_cast %54 : vector<1x1x20xf32> to vector<1x20xf32>
    %56 = vector.broadcast %55 : vector<1x20xf32> to vector<32x20xf32>
    %57 = arith.mulf %31, %56 : vector<32x20xf32>
    %cst_23 = arith.constant dense<0.000000e+00> : vector<32x32xf32>
    %58 = tpu.matmul %30, %57, %cst_23 {dimension_numbers = #tpu.dot_dimension_numbers<[1], [1], [0], [0], [0, 0, 1, 0], [], []>} : vector<32x20xf32>, vector<32x20xf32>, vector<32x32xf32> -> vector<32x32xf32>
    %59 = arith.mulf %58, %17 : vector<32x32xf32>
    %60 = vector.broadcast %55 : vector<1x20xf32> to vector<32x20xf32>
    %61 = arith.mulf %32, %60 : vector<32x20xf32>
    %cst_24 = arith.constant dense<0.000000e+00> : vector<32x20xf32>
    %62 = tpu.matmul %59, %61, %cst_24 {dimension_numbers = #tpu.dot_dimension_numbers<[1], [0], [0], [1], [0, 0, 1, 1], [], []>} : vector<32x32xf32>, vector<32x20xf32>, vector<32x20xf32> -> vector<32x20xf32>
    %63 = arith.addf %53, %62 : vector<32x20xf32>
    %c3 = arith.constant 3 : index
    %c0_25 = arith.constant 0 : index
    %c0_26 = arith.constant 0 : index
    %64 = vector.load %arg5[%c3, %c0_25, %c0_26] : memref<5x1x20xf32, #tpu.memory_space<vmem>>, vector<1x1x20xf32>
    %65 = vector.shape_cast %64 : vector<1x1x20xf32> to vector<1x20xf32>
    %66 = vector.broadcast %65 : vector<1x20xf32> to vector<32x20xf32>
    %67 = arith.mulf %31, %66 : vector<32x20xf32>
    %cst_27 = arith.constant dense<0.000000e+00> : vector<32x32xf32>
    %68 = tpu.matmul %30, %67, %cst_27 {dimension_numbers = #tpu.dot_dimension_numbers<[1], [1], [0], [0], [0, 0, 1, 0], [], []>} : vector<32x20xf32>, vector<32x20xf32>, vector<32x32xf32> -> vector<32x32xf32>
    %69 = arith.mulf %68, %17 : vector<32x32xf32>
    %70 = vector.broadcast %65 : vector<1x20xf32> to vector<32x20xf32>
    %71 = arith.mulf %32, %70 : vector<32x20xf32>
    %cst_28 = arith.constant dense<0.000000e+00> : vector<32x20xf32>
    %72 = tpu.matmul %69, %71, %cst_28 {dimension_numbers = #tpu.dot_dimension_numbers<[1], [0], [0], [1], [0, 0, 1, 1], [], []>} : vector<32x32xf32>, vector<32x20xf32>, vector<32x20xf32> -> vector<32x20xf32>
    %73 = arith.addf %63, %72 : vector<32x20xf32>
    %c4 = arith.constant 4 : index
    %c0_29 = arith.constant 0 : index
    %c0_30 = arith.constant 0 : index
    %74 = vector.load %arg5[%c4, %c0_29, %c0_30] : memref<5x1x20xf32, #tpu.memory_space<vmem>>, vector<1x1x20xf32>
    %75 = vector.shape_cast %74 : vector<1x1x20xf32> to vector<1x20xf32>
    %76 = vector.broadcast %75 : vector<1x20xf32> to vector<32x20xf32>
    %77 = arith.mulf %31, %76 : vector<32x20xf32>
    %cst_31 = arith.constant dense<0.000000e+00> : vector<32x32xf32>
    %78 = tpu.matmul %30, %77, %cst_31 {dimension_numbers = #tpu.dot_dimension_numbers<[1], [1], [0], [0], [0, 0, 1, 0], [], []>} : vector<32x20xf32>, vector<32x20xf32>, vector<32x32xf32> -> vector<32x32xf32>
    %79 = arith.mulf %78, %17 : vector<32x32xf32>
    %80 = vector.broadcast %75 : vector<1x20xf32> to vector<32x20xf32>
    %81 = arith.mulf %32, %80 : vector<32x20xf32>
    %cst_32 = arith.constant dense<0.000000e+00> : vector<32x20xf32>
    %82 = tpu.matmul %79, %81, %cst_32 {dimension_numbers = #tpu.dot_dimension_numbers<[1], [0], [0], [1], [0, 0, 1, 1], [], []>} : vector<32x32xf32>, vector<32x20xf32>, vector<32x20xf32> -> vector<32x20xf32>
    %83 = arith.addf %73, %82 : vector<32x20xf32>
    %84 = arith.negf %83 : vector<32x20xf32>
    %85 = math.exp %84 : vector<32x20xf32>
    %cst_33 = arith.constant 1.000000e+00 : f32
    %86 = vector.broadcast %cst_33 : f32 to vector<32x20xf32>
    %87 = arith.addf %86, %85 : vector<32x20xf32>
    %88 = arith.divf %86, %87 : vector<32x20xf32>
    %89 = arith.addf %88, %16 : vector<32x20xf32>
    %cst_34 = arith.constant 0.000000e+00 : f32
    %90 = vector.broadcast %cst_34 : f32 to vector<8x80xf32>
    %91 = vector.extract_strided_slice %29 {offsets = [0, 0], sizes = [8, 20], strides = [1, 1]} : vector<32x20xf32> to vector<8x20xf32>
    %92 = vector.extract_strided_slice %89 {offsets = [0, 0], sizes = [8, 20], strides = [1, 1]} : vector<32x20xf32> to vector<8x20xf32>
    %c0_35 = arith.constant 0 : index
    %c0_36 = arith.constant 0 : index
    %c0_37 = arith.constant 0 : index
    %93 = vector.load %arg6[%c0_35, %c0_36, %c0_37] : memref<8x20x80xf32, #tpu.memory_space<vmem>>, vector<1x20x80xf32>
    %94 = vector.shape_cast %93 : vector<1x20x80xf32> to vector<20x80xf32>
    %cst_38 = arith.constant dense<0.000000e+00> : vector<8x80xf32>
    %95 = tpu.matmul %91, %94, %cst_38 {dimension_numbers = #tpu.dot_dimension_numbers<[1], [0], [0], [1], [0, 0, 1, 1], [], []>} : vector<8x20xf32>, vector<20x80xf32>, vector<8x80xf32> -> vector<8x80xf32>
    %96 = arith.addf %90, %95 : vector<8x80xf32>
    %c4_39 = arith.constant 4 : index
    %c0_40 = arith.constant 0 : index
    %c0_41 = arith.constant 0 : index
    %97 = vector.load %arg6[%c4_39, %c0_40, %c0_41] : memref<8x20x80xf32, #tpu.memory_space<vmem>>, vector<1x20x80xf32>
    %98 = vector.shape_cast %97 : vector<1x20x80xf32> to vector<20x80xf32>
    %cst_42 = arith.constant dense<0.000000e+00> : vector<8x80xf32>
    %99 = tpu.matmul %92, %98, %cst_42 {dimension_numbers = #tpu.dot_dimension_numbers<[1], [0], [0], [1], [0, 0, 1, 1], [], []>} : vector<8x20xf32>, vector<20x80xf32>, vector<8x80xf32> -> vector<8x80xf32>
    %100 = arith.addf %96, %99 : vector<8x80xf32>
    %101 = vector.extract_strided_slice %29 {offsets = [8, 0], sizes = [8, 20], strides = [1, 1]} : vector<32x20xf32> to vector<8x20xf32>
    %102 = vector.extract_strided_slice %89 {offsets = [8, 0], sizes = [8, 20], strides = [1, 1]} : vector<32x20xf32> to vector<8x20xf32>
    %c1_43 = arith.constant 1 : index
    %c0_44 = arith.constant 0 : index
    %c0_45 = arith.constant 0 : index
    %103 = vector.load %arg6[%c1_43, %c0_44, %c0_45] : memref<8x20x80xf32, #tpu.memory_space<vmem>>, vector<1x20x80xf32>
    %104 = vector.shape_cast %103 : vector<1x20x80xf32> to vector<20x80xf32>
    %cst_46 = arith.constant dense<0.000000e+00> : vector<8x80xf32>
    %105 = tpu.matmul %101, %104, %cst_46 {dimension_numbers = #tpu.dot_dimension_numbers<[1], [0], [0], [1], [0, 0, 1, 1], [], []>} : vector<8x20xf32>, vector<20x80xf32>, vector<8x80xf32> -> vector<8x80xf32>
    %106 = arith.addf %100, %105 : vector<8x80xf32>
    %c5 = arith.constant 5 : index
    %c0_47 = arith.constant 0 : index
    %c0_48 = arith.constant 0 : index
    %107 = vector.load %arg6[%c5, %c0_47, %c0_48] : memref<8x20x80xf32, #tpu.memory_space<vmem>>, vector<1x20x80xf32>
    %108 = vector.shape_cast %107 : vector<1x20x80xf32> to vector<20x80xf32>
    %cst_49 = arith.constant dense<0.000000e+00> : vector<8x80xf32>
    %109 = tpu.matmul %102, %108, %cst_49 {dimension_numbers = #tpu.dot_dimension_numbers<[1], [0], [0], [1], [0, 0, 1, 1], [], []>} : vector<8x20xf32>, vector<20x80xf32>, vector<8x80xf32> -> vector<8x80xf32>
    %110 = arith.addf %106, %109 : vector<8x80xf32>
    %111 = vector.extract_strided_slice %29 {offsets = [16, 0], sizes = [8, 20], strides = [1, 1]} : vector<32x20xf32> to vector<8x20xf32>
    %112 = vector.extract_strided_slice %89 {offsets = [16, 0], sizes = [8, 20], strides = [1, 1]} : vector<32x20xf32> to vector<8x20xf32>
    %c2_50 = arith.constant 2 : index
    %c0_51 = arith.constant 0 : index
    %c0_52 = arith.constant 0 : index
    %113 = vector.load %arg6[%c2_50, %c0_51, %c0_52] : memref<8x20x80xf32, #tpu.memory_space<vmem>>, vector<1x20x80xf32>
    %114 = vector.shape_cast %113 : vector<1x20x80xf32> to vector<20x80xf32>
    %cst_53 = arith.constant dense<0.000000e+00> : vector<8x80xf32>
    %115 = tpu.matmul %111, %114, %cst_53 {dimension_numbers = #tpu.dot_dimension_numbers<[1], [0], [0], [1], [0, 0, 1, 1], [], []>} : vector<8x20xf32>, vector<20x80xf32>, vector<8x80xf32> -> vector<8x80xf32>
    %116 = arith.addf %110, %115 : vector<8x80xf32>
    %c6 = arith.constant 6 : index
    %c0_54 = arith.constant 0 : index
    %c0_55 = arith.constant 0 : index
    %117 = vector.load %arg6[%c6, %c0_54, %c0_55] : memref<8x20x80xf32, #tpu.memory_space<vmem>>, vector<1x20x80xf32>
    %118 = vector.shape_cast %117 : vector<1x20x80xf32> to vector<20x80xf32>
    %cst_56 = arith.constant dense<0.000000e+00> : vector<8x80xf32>
    %119 = tpu.matmul %112, %118, %cst_56 {dimension_numbers = #tpu.dot_dimension_numbers<[1], [0], [0], [1], [0, 0, 1, 1], [], []>} : vector<8x20xf32>, vector<20x80xf32>, vector<8x80xf32> -> vector<8x80xf32>
    %120 = arith.addf %116, %119 : vector<8x80xf32>
    %121 = vector.extract_strided_slice %29 {offsets = [24, 0], sizes = [8, 20], strides = [1, 1]} : vector<32x20xf32> to vector<8x20xf32>
    %122 = vector.extract_strided_slice %89 {offsets = [24, 0], sizes = [8, 20], strides = [1, 1]} : vector<32x20xf32> to vector<8x20xf32>
    %c3_57 = arith.constant 3 : index
    %c0_58 = arith.constant 0 : index
    %c0_59 = arith.constant 0 : index
    %123 = vector.load %arg6[%c3_57, %c0_58, %c0_59] : memref<8x20x80xf32, #tpu.memory_space<vmem>>, vector<1x20x80xf32>
    %124 = vector.shape_cast %123 : vector<1x20x80xf32> to vector<20x80xf32>
    %cst_60 = arith.constant dense<0.000000e+00> : vector<8x80xf32>
    %125 = tpu.matmul %121, %124, %cst_60 {dimension_numbers = #tpu.dot_dimension_numbers<[1], [0], [0], [1], [0, 0, 1, 1], [], []>} : vector<8x20xf32>, vector<20x80xf32>, vector<8x80xf32> -> vector<8x80xf32>
    %126 = arith.addf %120, %125 : vector<8x80xf32>
    %c7 = arith.constant 7 : index
    %c0_61 = arith.constant 0 : index
    %c0_62 = arith.constant 0 : index
    %127 = vector.load %arg6[%c7, %c0_61, %c0_62] : memref<8x20x80xf32, #tpu.memory_space<vmem>>, vector<1x20x80xf32>
    %128 = vector.shape_cast %127 : vector<1x20x80xf32> to vector<20x80xf32>
    %cst_63 = arith.constant dense<0.000000e+00> : vector<8x80xf32>
    %129 = tpu.matmul %122, %128, %cst_63 {dimension_numbers = #tpu.dot_dimension_numbers<[1], [0], [0], [1], [0, 0, 1, 1], [], []>} : vector<8x20xf32>, vector<20x80xf32>, vector<8x80xf32> -> vector<8x80xf32>
    %130 = arith.addf %126, %129 : vector<8x80xf32>
    %c0_64 = arith.constant 0 : index
    %c0_65 = arith.constant 0 : index
    %131 = vector.load %arg7[%c0_64, %c0_65] : memref<1x80xf32, #tpu.memory_space<vmem>>, vector<1x80xf32>
    %132 = vector.broadcast %131 : vector<1x80xf32> to vector<8x80xf32>
    %133 = arith.addf %130, %132 : vector<8x80xf32>
    %c0_66 = arith.constant 0 : index
    %c0_67 = arith.constant 0 : index
    %134 = vector.load %arg8[%c0_66, %c0_67] : memref<8x80xf32, #tpu.memory_space<vmem>>, vector<8x80xf32>
    tpu.vector_store %arg8[%c0_66, %c0_67], %133 {strides = array<i32>} : memref<8x80xf32, #tpu.memory_space<vmem>>, vector<8x80xf32>,
    return
  }
  func.func @transform_0(%arg0: i32) -> (i32, i32) {
    %c0_i32 = arith.constant 0 : i32
    %c0_i32_0 = arith.constant 0 : i32
    return %arg0, %c0_i32 : i32, i32
  }
  func.func @transform_1(%arg0: i32) -> (i32, i32) {
    %c0_i32 = arith.constant 0 : i32
    %c0_i32_0 = arith.constant 0 : i32
    %c0_i32_1 = arith.constant 0 : i32
    return %c0_i32, %c0_i32_0 : i32, i32
  }
  func.func @transform_2(%arg0: i32) -> (i32, i32) {
    %c0_i32 = arith.constant 0 : i32
    %c0_i32_0 = arith.constant 0 : i32
    %c0_i32_1 = arith.constant 0 : i32
    return %c0_i32, %c0_i32_0 : i32, i32
  }
  func.func @transform_3(%arg0: i32) -> (i32, i32) {
    %c0_i32 = arith.constant 0 : i32
    %c0_i32_0 = arith.constant 0 : i32
    %c0_i32_1 = arith.constant 0 : i32
    return %c0_i32, %c0_i32_0 : i32, i32
  }
  func.func @transform_4(%arg0: i32) -> (i32, i32, i32) {
    %c0_i32 = arith.constant 0 : i32
    %c0_i32_0 = arith.constant 0 : i32
    %c0_i32_1 = arith.constant 0 : i32
    %c0_i32_2 = arith.constant 0 : i32
    return %c0_i32, %c0_i32_0, %c0_i32_1 : i32, i32, i32
  }
  func.func @transform_5(%arg0: i32) -> (i32, i32, i32) {
    %c0_i32 = arith.constant 0 : i32
    %c0_i32_0 = arith.constant 0 : i32
    %c0_i32_1 = arith.constant 0 : i32
    %c0_i32_2 = arith.constant 0 : i32
    return %c0_i32, %c0_i32_0, %c0_i32_1 : i32, i32, i32
  }
  func.func @transform_6(%arg0: i32) -> (i32, i32) {
    %c0_i32 = arith.constant 0 : i32
    %c0_i32_0 = arith.constant 0 : i32
    %c0_i32_1 = arith.constant 0 : i32
    return %c0_i32, %c0_i32_0 : i32, i32
  }
  func.func @transform_7(%arg0: i32) -> (i32, i32) {
    %c0_i32 = arith.constant 0 : i32
    %c0_i32_0 = arith.constant 0 : i32
    return %arg0, %c0_i32 : i32, i32
  }
}

</mosaic_0001>

<llo_original>
// kernel: tce_forward.1
$region0: #{tce_forward.1}
  #allocation0 [shape = 'u32[]', space=smem, size = 0x4, offset = 0x4, fixed_abs, tag = 'smem constant byte address 0x4 - core index']
  #allocation1 [shape = 'u32[144,128]{1,0:T(1,128)}', space=vmem, size = 0x12000, scoped, tag = 'internal scratch']
  %s0 = inlined_call_operand.vmem [shape: f32[64,20], index: 0, kind: input, shape index: {}]
  %s1 = inlined_call_operand.vmem [shape: f32[224,224], index: 1, kind: input, shape index: {}]
  %s2 = inlined_call_operand.vmem [shape: f32[224,1], index: 2, kind: input, shape index: {}]
  %s3 = inlined_call_operand.vmem [shape: f32[32,32], index: 3, kind: input, shape index: {}]
  %s4 = inlined_call_operand.vmem [shape: f32[5,1,20], index: 4, kind: input, shape index: {}]
  %s5 = inlined_call_operand.vmem [shape: f32[8,20,80], index: 5, kind: input, shape index: {}]
  %s6 = inlined_call_operand.vmem [shape: f32[1,80], index: 6, kind: input, shape index: {}]
  %s7 = inlined_call_operand.vmem [shape: f32[16,80], index: 7, kind: output, shape index: {}]
  %s8 = sld [smem:[#allocation0]]
  $region61: #{tce_forward.1} parent=0
    _
  %s10 = ssub.s32 1, %s8
  %s11 = scalar_select 0, %s10, %s8
  loop: start=0, step=1, limit=4
  $region2: #{tce_forward.1} parent=0 // loop_pre_header
    _
  $region3: #{tce_forward.1} parent=0 // loop_header
    %s13 = sphi 0, %s17
    %p14 = scmp.ge.s32.totalorder %s13, 4
    %s23 = sphi 0, %s25
    %s26 = sphi 0, %s23
    %s27 = sphi 0, %s26
    %s43 = sphi 0, %s27
    %s47 = sphi 0, %s47
    %s49 = sphi 0, %s47
    %s50 = sphi 0, %s49
    %s64 = sphi 0, %s50
    %s68 = sphi 0, %s68
    %s70 = sphi 0, %s68
    %s71 = sphi 0, %s70
    %s85 = sphi 0, %s71
    %s89 = sphi 0, %s89
    %s91 = sphi 0, %s89
    %s92 = sphi 0, %s91
    %s106 = sphi 0, %s92
    %s110 = sphi 0, %s110
    %s112 = sphi 0, %s110
    %s113 = sphi 0, %s112
    %s127 = sphi 0, %s113
    %s131 = sphi 0, %s131
    %s133 = sphi 0, %s131
    %s134 = sphi 0, %s133
    %s148 = sphi 0, %s134
    %s152 = sphi 0, %s152
    %s154 = sphi 0, %s152
    %s155 = sphi 0, %s154
    %s169 = sphi 0, %s155
    %s175 = sphi 0, %s177
    %s178 = sphi 0, %s175
    %s179 = sphi 0, %s178
    %s195 = sphi 0, %s179
  $region4: #{tce_forward.1} parent=0 // loop_header_branch
    %16 = sbr.rel (%p14) target = $region8
  $region5: #{tce_forward.1} parent=0 // loop_body
    %s18 = ssub.s32 %s13, 1
    %s19 = ssub.s32 %s13, 2
    %s20 = sadd.s32 %s13, 1
    %s21 = ssub.s32 %s13, %s20
    %p22 = scmp.eq.s32.totalorder %s21, 0
    %s24 = sadd.s32 %s23, 1
    %s25 = scalar_select %p22, %s23, %s24
    %p28 = pneg %p22
    %p29 = scmp.eq.s32.totalorder %s13, 1
    %p30 = por %p28, %p29
    %p31 = scmp.ne.s32.totalorder %s23, %s26
    %p32 = scmp.eq.s32.totalorder %s13, 0
    %p33 = por %p31, %p32
    %p34 = scmp.ne.s32.totalorder %s23, %s26
    %p35 = scmp.eq.s32.totalorder %s18, 1
    %p36 = por %p34, %p35
    %p37 = scmp.ne.s32.totalorder %s26, %s27
    %p38 = scmp.eq.s32.totalorder %s18, 0
    %p39 = por %p37, %p38
    %p40 = scmp.ne.s32.totalorder %s26, %s27
    %p41 = scmp.eq.s32.totalorder %s19, 1
    %p42 = por %p40, %p41
    %p44 = scmp.ne.s32.totalorder %s27, %s43
    %p45 = scmp.eq.s32.totalorder %s19, 0
    %p46 = por %p44, %p45
    %s48 = sadd.s32 %s47, 1
    %p51 = scmp.eq.s32.totalorder %s13, 1
    %p52 = scmp.ne.s32.totalorder %s47, %s49
    %p53 = scmp.eq.s32.totalorder %s13, 0
    %p54 = por %p52, %p53
    %p55 = scmp.ne.s32.totalorder %s47, %s49
    %p56 = scmp.eq.s32.totalorder %s18, 1
    %p57 = por %p55, %p56
    %p58 = scmp.ne.s32.totalorder %s49, %s50
    %p59 = scmp.eq.s32.totalorder %s18, 0
    %p60 = por %p58, %p59
    %p61 = scmp.ne.s32.totalorder %s49, %s50
    %p62 = scmp.eq.s32.totalorder %s19, 1
    %p63 = por %p61, %p62
    %p65 = scmp.ne.s32.totalorder %s50, %s64
    %p66 = scmp.eq.s32.totalorder %s19, 0
    %p67 = por %p65, %p66
    %s69 = sadd.s32 %s68, 1
    %p72 = scmp.eq.s32.totalorder %s13, 1
    %p73 = scmp.ne.s32.totalorder %s68, %s70
    %p74 = scmp.eq.s32.totalorder %s13, 0
    %p75 = por %p73, %p74
    %p76 = scmp.ne.s32.totalorder %s68, %s70
    %p77 = scmp.eq.s32.totalorder %s18, 1
    %p78 = por %p76, %p77
    %p79 = scmp.ne.s32.totalorder %s70, %s71
    %p80 = scmp.eq.s32.totalorder %s18, 0
    %p81 = por %p79, %p80
    %p82 = scmp.ne.s32.totalorder %s70, %s71
    %p83 = scmp.eq.s32.totalorder %s19, 1
    %p84 = por %p82, %p83
    %p86 = scmp.ne.s32.totalorder %s71, %s85
    %p87 = scmp.eq.s32.totalorder %s19, 0
    %p88 = por %p86, %p87
    %s90 = sadd.s32 %s89, 1
    %p93 = scmp.eq.s32.totalorder %s13, 1
    %p94 = scmp.ne.s32.totalorder %s89, %s91
    %p95 = scmp.eq.s32.totalorder %s13, 0
    %p96 = por %p94, %p95
    %p97 = scmp.ne.s32.totalorder %s89, %s91
    %p98 = scmp.eq.s32.totalorder %s18, 1
    %p99 = por %p97, %p98
    %p100 = scmp.ne.s32.totalorder %s91, %s92
    %p101 = scmp.eq.s32.totalorder %s18, 0
    %p102 = por %p100, %p101
    %p103 = scmp.ne.s32.totalorder %s91, %s92
    %p104 = scmp.eq.s32.totalorder %s19, 1
    %p105 = por %p103, %p104
    %p107 = scmp.ne.s32.totalorder %s92, %s106
    %p108 = scmp.eq.s32.totalorder %s19, 0
    %p109 = por %p107, %p108
    %s111 = sadd.s32 %s110, 1
    %p114 = scmp.eq.s32.totalorder %s13, 1
    %p115 = scmp.ne.s32.totalorder %s110, %s112
    %p116 = scmp.eq.s32.totalorder %s13, 0
    %p117 = por %p115, %p116
    %p118 = scmp.ne.s32.totalorder %s110, %s112
    %p119 = scmp.eq.s32.totalorder %s18, 1
    %p120 = por %p118, %p119
    %p121 = scmp.ne.s32.totalorder %s112, %s113
    %p122 = scmp.eq.s32.totalorder %s18, 0
    %p123 = por %p121, %p122
    %p124 = scmp.ne.s32.totalorder %s112, %s113
    %p125 = scmp.eq.s32.totalorder %s19, 1
    %p126 = por %p124, %p125
    %p128 = scmp.ne.s32.totalorder %s113, %s127
    %p129 = scmp.eq.s32.totalorder %s19, 0
    %p130 = por %p128, %p129
    %s132 = sadd.s32 %s131, 1
    %p135 = scmp.eq.s32.totalorder %s13, 1
    %p136 = scmp.ne.s32.totalorder %s131, %s133
    %p137 = scmp.eq.s32.totalorder %s13, 0
    %p138 = por %p136, %p137
    %p139 = scmp.ne.s32.totalorder %s131, %s133
    %p140 = scmp.eq.s32.totalorder %s18, 1
    %p141 = por %p139, %p140
    %p142 = scmp.ne.s32.totalorder %s133, %s134
    %p143 = scmp.eq.s32.totalorder %s18, 0
    %p144 = por %p142, %p143
    %p145 = scmp.ne.s32.totalorder %s133, %s134
    %p146 = scmp.eq.s32.totalorder %s19, 1
    %p147 = por %p145, %p146
    %p149 = scmp.ne.s32.totalorder %s134, %s148
    %p150 = scmp.eq.s32.totalorder %s19, 0
    %p151 = por %p149, %p150
    %s153 = sadd.s32 %s152, 1
    %p156 = scmp.eq.s32.totalorder %s13, 1
    %p157 = scmp.ne.s32.totalorder %s152, %s154
    %p158 = scmp.eq.s32.totalorder %s13, 0
    %p159 = por %p157, %p158
    %p160 = scmp.ne.s32.totalorder %s152, %s154
    %p161 = scmp.eq.s32.totalorder %s18, 1
    %p162 = por %p160, %p161
    %p163 = scmp.ne.s32.totalorder %s154, %s155
    %p164 = scmp.eq.s32.totalorder %s18, 0
    %p165 = por %p163, %p164
    %p166 = scmp.ne.s32.totalorder %s154, %s155
    %p167 = scmp.eq.s32.totalorder %s19, 1
    %p168 = por %p166, %p167
    %p170 = scmp.ne.s32.totalorder %s155, %s169
    %p171 = scmp.eq.s32.totalorder %s19, 0
    %p172 = por %p170, %p171
    %s173 = ssub.s32 %s13, %s20
    %p174 = scmp.eq.s32.totalorder %s173, 0
    %s176 = sadd.s32 %s175, 1
    %s177 = scalar_select %p174, %s175, %s176
    %p180 = pneg %p174
    %p181 = scmp.eq.s32.totalorder %s13, 1
    %p182 = por %p180, %p181
    %p183 = scmp.ne.s32.totalorder %s175, %s178
    %p184 = scmp.eq.s32.totalorder %s13, 0
    %p185 = por %p183, %p184
    %p186 = scmp.ne.s32.totalorder %s175, %s178
    %p187 = scmp.eq.s32.totalorder %s18, 1
    %p188 = por %p186, %p187
    %p189 = scmp.ne.s32.totalorder %s178, %s179
    %p190 = scmp.eq.s32.totalorder %s18, 0
    %p191 = por %p189, %p190
    %p192 = scmp.ne.s32.totalorder %s178, %s179
    %p193 = scmp.eq.s32.totalorder %s19, 1
    %p194 = por %p192, %p193
    %p196 = scmp.ne.s32.totalorder %s179, %s195
    %p197 = scmp.eq.s32.totalorder %s19, 0
    %p198 = por %p196, %p197
    %p199 = scmp.le.s32.totalorder 1, %s13
    %p200 = scmp.lt.s32.totalorder %s13, 3
    %p201 = pnand %p199, %p200
    %p202 = pneg %p201
    // Predicated region
    $region9: #{tce_forward.1} parent=5 // pred_check
      _
    $region10: #{tce_forward.1} parent=5 // pred_check_branch
      %204 = sbr.rel (%p201) target = $region12
    $region11: #{tce_forward.1} parent=5 // pred_region
      %s205 = ssub.s32 %s13, 1
      // Predicated region
      $region13: #{tce_forward.1} parent=11 // pred_check
        %p206 = pneg %p60
      $region14: #{tce_forward.1} parent=11 // pred_check_branch
        %208 = sbr.rel (%p206) target = $region16
      $region15: #{tce_forward.1} parent=11 // pred_region
        _
      $region16: #{tce_forward.1} parent=11 // pred_fallthru
        _
      // Predicated region
      $region17: #{tce_forward.1} parent=11 // pred_check
        %p209 = pneg %p81
      $region18: #{tce_forward.1} parent=11 // pred_check_branch
        %211 = sbr.rel (%p209) target = $region20
      $region19: #{tce_forward.1} parent=11 // pred_region
        _
      $region20: #{tce_forward.1} parent=11 // pred_fallthru
        _
      // Predicated region
      $region21: #{tce_forward.1} parent=11 // pred_check
        %p212 = pneg %p102
      $region22: #{tce_forward.1} parent=11 // pred_check_branch
        %214 = sbr.rel (%p212) target = $region24
      $region23: #{tce_forward.1} parent=11 // pred_region
        _
      $region24: #{tce_forward.1} parent=11 // pred_fallthru
        _
      // Predicated region
      $region25: #{tce_forward.1} parent=11 // pred_check
        %p215 = pneg %p123
      $region26: #{tce_forward.1} parent=11 // pred_check_branch
        %217 = sbr.rel (%p215) target = $region28
      $region27: #{tce_forward.1} parent=11 // pred_region
        _
      $region28: #{tce_forward.1} parent=11 // pred_fallthru
        _
      // Predicated region
      $region29: #{tce_forward.1} parent=11 // pred_check
        %p218 = pneg %p144
      $region30: #{tce_forward.1} parent=11 // pred_check_branch
        %220 = sbr.rel (%p218) target = $region32
      $region31: #{tce_forward.1} parent=11 // pred_region
        _
      $region32: #{tce_forward.1} parent=11 // pred_fallthru
        _
      // Predicated region
      $region33: #{tce_forward.1} parent=11 // pred_check
        %p221 = pneg %p165
      $region34: #{tce_forward.1} parent=11 // pred_check_branch
        %223 = sbr.rel (%p221) target = $region36
      $region35: #{tce_forward.1} parent=11 // pred_region
        _
      $region36: #{tce_forward.1} parent=11 // pred_fallthru
        _
    $region12: #{tce_forward.1} parent=5 // pred_fallthru
      _
    %p224 = scmp.lt.s32.totalorder %s13, 2
    // Predicated region
    $region37: #{tce_forward.1} parent=5 // pred_check
      %p225 = pneg %p224
    $region38: #{tce_forward.1} parent=5 // pred_check_branch
      %227 = sbr.rel (%p225) target = $region40
    $region39: #{tce_forward.1} parent=5 // pred_region
      // Predicated region
      $region41: #{tce_forward.1} parent=39 // pred_check
        %p228 = pneg %p33
      $region42: #{tce_forward.1} parent=39 // pred_check_branch
        %230 = sbr.rel (%p228) target = $region44
      $region43: #{tce_forward.1} parent=39 // pred_region
        %s231 = smul.u32 4, %s13
        %p232 = scmp.lt.s32.totalorder %s231, 7
        %s233 = scalar_select %p232, %s231, 7
        %s234 = smul.addr %s233, 8
        %s235 = scalar_lea.vmem %s0, %s234
        %s236 = smul.u32 4, %s13
      $region44: #{tce_forward.1} parent=39 // pred_fallthru
        _
    $region40: #{tce_forward.1} parent=5 // pred_fallthru
      _
    %p237 = scmp.le.s32.totalorder 1, %s13
    %p238 = scmp.lt.s32.totalorder %s13, 3
    %p239 = pnand %p237, %p238
    %p240 = pneg %p239
    // Predicated region
    $region45: #{tce_forward.1} parent=5 // pred_check
      _
    $region46: #{tce_forward.1} parent=5 // pred_check_branch
      %242 = sbr.rel (%p239) target = $region48
    $region47: #{tce_forward.1} parent=5 // pred_region
      %s243 = ssub.s32 %s13, 1
      %s244 = smul.u32 4, %s18
      %p245 = scmp.lt.s32.totalorder %s244, 7
      %s246 = scalar_select %p245, %s244, 7
      %s247 = smul.addr %s246, 8
      %s248 = scalar_lea.vmem %s0, %s247
      %p249 = pneg %p39
      %p250 = pneg %p36
      %p251 = pneg %p60
      %p252 = pneg %p57
      %p253 = pneg %p81
      %p254 = pneg %p78
      %p255 = pneg %p102
      %p256 = pneg %p99
      %p257 = pneg %p123
      %p258 = pneg %p120
      %p259 = pneg %p144
      %p260 = pneg %p141
      %p261 = pneg %p165
      %p262 = pneg %p162
      %p263 = pneg %p191
      %p264 = pneg %p188
      %p265 = scmp.lt.s32.totalorder %s18, 1
      %s266 = scalar_select %p265, %s18, 1
      %s267 = smul.addr %s266, 8
      %s268 = scalar_lea.vmem %s7, %s267
      %s269 = smul.u32 4, %s18
      %p270 = scmp.lt.s32.totalorder %s269, 7
      %s271 = scalar_select %p270, %s269, 7
      %s272 = smul.addr %s271, 8
      %s273 = scalar_lea.vmem %s0, %s272
      %s274 = smul.u32 4, %s18
      %p275 = scmp.lt.s32.totalorder %s18, 1
      %s276 = scalar_select %p275, %s18, 1
      %s277 = smul.addr %s276, 8
      %s278 = scalar_lea.vmem %s7, %s277
      %v279 = vld [vmem:[%s273] sm:$0xff]
      %v280 = vld [vmem:[%s273 + $0x8] sm:$0xff]
      %v281 = vld [vmem:[%s273 + $0x10] sm:$0xff]
      %v282 = vld [vmem:[%s273 + $0x18] sm:$0xff]
      %287 = vrot.lane.b32.xlu0 %v279, 6
      %v288 = vpop.permute.xlu0 %287
      %289 = vrot.lane.b32.xlu0 %v280, 6
      %v290 = vpop.permute.xlu0 %289
      %291 = vrot.lane.b32.xlu0 %v281, 6
      %v292 = vpop.permute.xlu0 %291
      %293 = vrot.lane.b32.xlu0 %v282, 6
      %v294 = vpop.permute.xlu0 %293
      %vm299 = vcmask 48128
      %v300 = vsel %vm299, 0.0, %v288
      %v301 = vsel %vm299, 0.0, %v290
      %v302 = vsel %vm299, 0.0, %v292
      %v303 = vsel %vm299, 0.0, %v294
      %308 = vrot.lane.b32.xlu0 %v300, 127
      %v309 = vpop.permute.xlu0 %308
      %310 = vrot.lane.b32.xlu0 %v301, 127
      %v311 = vpop.permute.xlu0 %310
      %312 = vrot.lane.b32.xlu0 %v302, 127
      %v313 = vpop.permute.xlu0 %312
      %314 = vrot.lane.b32.xlu0 %v303, 127
      %v315 = vpop.permute.xlu0 %314
      %320 = vrot.lane.b32.xlu0 %v300, 126
      %v321 = vpop.permute.xlu0 %320
      %322 = vrot.lane.b32.xlu0 %v301, 126
      %v323 = vpop.permute.xlu0 %322
      %324 = vrot.lane.b32.xlu0 %v302, 126
      %v325 = vpop.permute.xlu0 %324
      %326 = vrot.lane.b32.xlu0 %v303, 126
      %v327 = vpop.permute.xlu0 %326
      %332 = vrot.lane.b32.xlu0 %v300, 125
      %v333 = vpop.permute.xlu0 %332
      %334 = vrot.lane.b32.xlu0 %v301, 125
      %v335 = vpop.permute.xlu0 %334
      %336 = vrot.lane.b32.xlu0 %v302, 125
      %v337 = vpop.permute.xlu0 %336
      %338 = vrot.lane.b32.xlu0 %v303, 125
      %v339 = vpop.permute.xlu0 %338
      %344 = vrot.lane.b32.xlu0 %v300, 124
      %v345 = vpop.permute.xlu0 %344
      %346 = vrot.lane.b32.xlu0 %v301, 124
      %v347 = vpop.permute.xlu0 %346
      %348 = vrot.lane.b32.xlu0 %v302, 124
      %v349 = vpop.permute.xlu0 %348
      %350 = vrot.lane.b32.xlu0 %v303, 124
      %v351 = vpop.permute.xlu0 %350
      %356 = vrot.lane.b32.xlu0 %v300, 123
      %v357 = vpop.permute.xlu0 %356
      %358 = vrot.lane.b32.xlu0 %v301, 123
      %v359 = vpop.permute.xlu0 %358
      %360 = vrot.lane.b32.xlu0 %v302, 123
      %v361 = vpop.permute.xlu0 %360
      %362 = vrot.lane.b32.xlu0 %v303, 123
      %v363 = vpop.permute.xlu0 %362
      %368 = vrot.lane.b32.xlu0 %v300, 122
      %v369 = vpop.permute.xlu0 %368
      %370 = vrot.lane.b32.xlu0 %v301, 122
      %v371 = vpop.permute.xlu0 %370
      %372 = vrot.lane.b32.xlu0 %v302, 122
      %v373 = vpop.permute.xlu0 %372
      %374 = vrot.lane.b32.xlu0 %v303, 122
      %v375 = vpop.permute.xlu0 %374
      %v380 = vld [vmem:[%s1] sm:$0xff]
      %v381 = vld [vmem:[%s1 + $0x8] sm:$0xff]
      %v382 = vld [vmem:[%s1 + $0x10] sm:$0xff]
      %v383 = vld [vmem:[%s1 + $0x18] sm:$0xff]
      %v384 = vld [vmem:[%s1 + $0x20] sm:$0xff]
      %v385 = vld [vmem:[%s1 + $0x28] sm:$0xff]
      %v386 = vld [vmem:[%s1 + $0x30] sm:$0xff]
      %v387 = vld [vmem:[%s1 + $0x38] sm:$0xff]
      %v388 = vld [vmem:[%s1 + $0x40] sm:$0xff]
      %v389 = vld [vmem:[%s1 + $0x48] sm:$0xff]
      %v390 = vld [vmem:[%s1 + $0x50] sm:$0xff]
      %v391 = vld [vmem:[%s1 + $0x58] sm:$0xff]
      %v392 = vld [vmem:[%s1 + $0x60] sm:$0xff]
      %v393 = vld [vmem:[%s1 + $0x68] sm:$0xff]
      %v394 = vld [vmem:[%s1 + $0x70] sm:$0xff]
      %v395 = vld [vmem:[%s1 + $0x78] sm:$0xff]
      %v396 = vld [vmem:[%s1 + $0x80] sm:$0xff]
      %v397 = vld [vmem:[%s1 + $0x88] sm:$0xff]
      %v398 = vld [vmem:[%s1 + $0x90] sm:$0xff]
      %v399 = vld [vmem:[%s1 + $0x98] sm:$0xff]
      %v400 = vld [vmem:[%s1 + $0xa0] sm:$0xff]
      %v401 = vld [vmem:[%s1 + $0xa8] sm:$0xff]
      %v402 = vld [vmem:[%s1 + $0xb0] sm:$0xff]
      %v403 = vld [vmem:[%s1 + $0xb8] sm:$0xff]
      %v404 = vld [vmem:[%s1 + $0xc0] sm:$0xff]
      %v405 = vld [vmem:[%s1 + $0xc8] sm:$0xff]
      %v406 = vld [vmem:[%s1 + $0xd0] sm:$0xff]
      %v407 = vld [vmem:[%s1 + $0xd8] sm:$0xff]
      %v408 = vld [vmem:[%s1 + $0xe0] sm:$0xff]
      %v409 = vld [vmem:[%s1 + $0xe8] sm:$0xff]
      %v410 = vld [vmem:[%s1 + $0xf0] sm:$0xff]
      %v411 = vld [vmem:[%s1 + $0xf8] sm:$0xff]
      %v412 = vld [vmem:[%s1 + $0x100] sm:$0xff]
      %v413 = vld [vmem:[%s1 + $0x108] sm:$0xff]
      %v414 = vld [vmem:[%s1 + $0x110] sm:$0xff]
      %v415 = vld [vmem:[%s1 + $0x118] sm:$0xff]
      %v416 = vld [vmem:[%s1 + $0x120] sm:$0xff]
      %v417 = vld [vmem:[%s1 + $0x128] sm:$0xff]
      %v418 = vld [vmem:[%s1 + $0x130] sm:$0xff]
      %v419 = vld [vmem:[%s1 + $0x138] sm:$0xff]
      %v420 = vld [vmem:[%s1 + $0x140] sm:$0xff]
      %v421 = vld [vmem:[%s1 + $0x148] sm:$0xff]
      %v422 = vld [vmem:[%s1 + $0x150] sm:$0xff]
      %v423 = vld [vmem:[%s1 + $0x158] sm:$0xff]
      %v424 = vld [vmem:[%s1 + $0x160] sm:$0xff]
      %v425 = vld [vmem:[%s1 + $0x168] sm:$0xff]
      %v426 = vld [vmem:[%s1 + $0x170] sm:$0xff]
      %v427 = vld [vmem:[%s1 + $0x178] sm:$0xff]
      %v428 = vld [vmem:[%s1 + $0x180] sm:$0xff]
      %v429 = vld [vmem:[%s1 + $0x188] sm:$0xff]
      %v430 = vld [vmem:[%s1 + $0x190] sm:$0xff]
      %v431 = vld [vmem:[%s1 + $0x198] sm:$0xff]
      %v432 = vld [vmem:[%s1 + $0x1a0] sm:$0xff]
      %v433 = vld [vmem:[%s1 + $0x1a8] sm:$0xff]
      %v434 = vld [vmem:[%s1 + $0x1b0] sm:$0xff]
      %v435 = vld [vmem:[%s1 + $0x1b8] sm:$0xff]
      %v436 = vld [vmem:[%s2] sm:$0xff]
      %v437 = vld [vmem:[%s2 + $0x8] sm:$0xff]
      %v438 = vld [vmem:[%s2 + $0x10] sm:$0xff]
      %v439 = vld [vmem:[%s2 + $0x18] sm:$0xff]
      %v440 = vld [vmem:[%s2 + $0x20] sm:$0xff]
      %v441 = vld [vmem:[%s2 + $0x28] sm:$0xff]
      %v442 = vld [vmem:[%s2 + $0x30] sm:$0xff]
      %v443 = vld [vmem:[%s2 + $0x38] sm:$0xff]
      %v444 = vld [vmem:[%s2 + $0x40] sm:$0xff]
      %v445 = vld [vmem:[%s2 + $0x48] sm:$0xff]
      %v446 = vld [vmem:[%s2 + $0x50] sm:$0xff]
      %v447 = vld [vmem:[%s2 + $0x58] sm:$0xff]
      %v448 = vld [vmem:[%s2 + $0x60] sm:$0xff]
      %v449 = vld [vmem:[%s2 + $0x68] sm:$0xff]
      %v450 = vld [vmem:[%s2 + $0x70] sm:$0xff]
      %v451 = vld [vmem:[%s2 + $0x78] sm:$0xff]
      %v452 = vld [vmem:[%s2 + $0x80] sm:$0xff]
      %v453 = vld [vmem:[%s2 + $0x88] sm:$0xff]
      %v454 = vld [vmem:[%s2 + $0x90] sm:$0xff]
      %v455 = vld [vmem:[%s2 + $0x98] sm:$0xff]
      %v456 = vld [vmem:[%s2 + $0xa0] sm:$0xff]
      %v457 = vld [vmem:[%s2 + $0xa8] sm:$0xff]
      %v458 = vld [vmem:[%s2 + $0xb0] sm:$0xff]
      %v459 = vld [vmem:[%s2 + $0xb8] sm:$0xff]
      %v460 = vld [vmem:[%s2 + $0xc0] sm:$0xff]
      %v461 = vld [vmem:[%s2 + $0xc8] sm:$0xff]
      %v462 = vld [vmem:[%s2 + $0xd0] sm:$0xff]
      %v463 = vld [vmem:[%s2 + $0xd8] sm:$0xff]
      %465 = vset.pattern.permute.xlu0 0
      %466 = vperm.xlu0 %465, %v436
      %v467 = vpop.permute.xlu0 %466
      %470 = vset.pattern.permute.xlu0 0
      %471 = vperm.xlu0 %470, %v437
      %v472 = vpop.permute.xlu0 %471
      %475 = vset.pattern.permute.xlu0 0
      %476 = vperm.xlu0 %475, %v438
      %v477 = vpop.permute.xlu0 %476
      %480 = vset.pattern.permute.xlu0 0
      %481 = vperm.xlu0 %480, %v439
      %v482 = vpop.permute.xlu0 %481
      %485 = vset.pattern.permute.xlu0 0
      %486 = vperm.xlu0 %485, %v440
      %v487 = vpop.permute.xlu0 %486
      %490 = vset.pattern.permute.xlu0 0
      %491 = vperm.xlu0 %490, %v441
      %v492 = vpop.permute.xlu0 %491
      %495 = vset.pattern.permute.xlu0 0
      %496 = vperm.xlu0 %495, %v442
      %v497 = vpop.permute.xlu0 %496
      %500 = vset.pattern.permute.xlu0 0
      %501 = vperm.xlu0 %500, %v443
      %v502 = vpop.permute.xlu0 %501
      %505 = vset.pattern.permute.xlu0 0
      %506 = vperm.xlu0 %505, %v444
      %v507 = vpop.permute.xlu0 %506
      %510 = vset.pattern.permute.xlu0 0
      %511 = vperm.xlu0 %510, %v445
      %v512 = vpop.permute.xlu0 %511
      %515 = vset.pattern.permute.xlu0 0
      %516 = vperm.xlu0 %515, %v446
      %v517 = vpop.permute.xlu0 %516
      %520 = vset.pattern.permute.xlu0 0
      %521 = vperm.xlu0 %520, %v447
      %v522 = vpop.permute.xlu0 %521
      %525 = vset.pattern.permute.xlu0 0
      %526 = vperm.xlu0 %525, %v448
      %v527 = vpop.permute.xlu0 %526
      %530 = vset.pattern.permute.xlu0 0
      %531 = vperm.xlu0 %530, %v449
      %v532 = vpop.permute.xlu0 %531
      %535 = vset.pattern.permute.xlu0 0
      %536 = vperm.xlu0 %535, %v450
      %v537 = vpop.permute.xlu0 %536
      %540 = vset.pattern.permute.xlu0 0
      %541 = vperm.xlu0 %540, %v451
      %v542 = vpop.permute.xlu0 %541
      %545 = vset.pattern.permute.xlu0 0
      %546 = vperm.xlu0 %545, %v452
      %v547 = vpop.permute.xlu0 %546
      %550 = vset.pattern.permute.xlu0 0
      %551 = vperm.xlu0 %550, %v453
      %v552 = vpop.permute.xlu0 %551
      %555 = vset.pattern.permute.xlu0 0
      %556 = vperm.xlu0 %555, %v454
      %v557 = vpop.permute.xlu0 %556
      %560 = vset.pattern.permute.xlu0 0
      %561 = vperm.xlu0 %560, %v455
      %v562 = vpop.permute.xlu0 %561
      %565 = vset.pattern.permute.xlu0 0
      %566 = vperm.xlu0 %565, %v456
      %v567 = vpop.permute.xlu0 %566
      %570 = vset.pattern.permute.xlu0 0
      %571 = vperm.xlu0 %570, %v457
      %v572 = vpop.permute.xlu0 %571
      %575 = vset.pattern.permute.xlu0 0
      %576 = vperm.xlu0 %575, %v458
      %v577 = vpop.permute.xlu0 %576
      %580 = vset.pattern.permute.xlu0 0
      %581 = vperm.xlu0 %580, %v459
      %v582 = vpop.permute.xlu0 %581
      %585 = vset.pattern.permute.xlu0 0
      %586 = vperm.xlu0 %585, %v460
      %v587 = vpop.permute.xlu0 %586
      %590 = vset.pattern.permute.xlu0 0
      %591 = vperm.xlu0 %590, %v461
      %v592 = vpop.permute.xlu0 %591
      %595 = vset.pattern.permute.xlu0 0
      %596 = vperm.xlu0 %595, %v462
      %v597 = vpop.permute.xlu0 %596
      %600 = vset.pattern.permute.xlu0 0
      %601 = vperm.xlu0 %600, %v463
      %v602 = vpop.permute.xlu0 %601
      %vm604 = vcmask 785408
      %v606 = vsel %vm604, %v381, 0
      %v609 = vsel %vm604, %v383, 0
      %v612 = vsel %vm604, %v385, 0
      %v615 = vsel %vm604, %v387, 0
      %v618 = vsel %vm604, %v389, 0
      %v621 = vsel %vm604, %v391, 0
      %v624 = vsel %vm604, %v393, 0
      %v627 = vsel %vm604, %v395, 0
      %v630 = vsel %vm604, %v397, 0
      %v633 = vsel %vm604, %v399, 0
      %v636 = vsel %vm604, %v401, 0
      %v639 = vsel %vm604, %v403, 0
      %v642 = vsel %vm604, %v405, 0
      %v645 = vsel %vm604, %v407, 0
      %v648 = vsel %vm604, %v409, 0
      %v651 = vsel %vm604, %v411, 0
      %v654 = vsel %vm604, %v413, 0
      %v657 = vsel %vm604, %v415, 0
      %v660 = vsel %vm604, %v417, 0
      %v663 = vsel %vm604, %v419, 0
      %v666 = vsel %vm604, %v421, 0
      %v669 = vsel %vm604, %v423, 0
      %v672 = vsel %vm604, %v425, 0
      %v675 = vsel %vm604, %v427, 0
      %v678 = vsel %vm604, %v429, 0
      %v681 = vsel %vm604, %v431, 0
      %v684 = vsel %vm604, %v433, 0
      %v687 = vsel %vm604, %v435, 0
      %689 = vmatprep.subr.mxu0 0.0
      %690 = vmatpush1.msra.mxu0 %v300
      %691 = vmatprep.subr.mxu0 0.0
      %692 = vmatpush1.msra.mxu0 %v301
      %693 = vmatprep.subr.mxu0 0.0
      %694 = vmatpush1.msra.mxu0 %v302
      %695 = vmatprep.subr.mxu0 0.0
      %696 = vmatpush1.msra.mxu0 %v303
      %697 = vmatprep.subr.mxu0 0.0
      %698 = vmatpush1.msra.mxu0 %v309
      %699 = vmatprep.subr.mxu0 0.0
      %700 = vmatpush1.msra.mxu0 %v311
      %701 = vmatprep.subr.mxu0 0.0
      %702 = vmatpush1.msra.mxu0 %v313
      %703 = vmatprep.subr.mxu0 0.0
      %704 = vmatpush1.msra.mxu0 %v315
      %705 = vmatprep.subr.mxu0 0.0
      %706 = vmatpush1.msra.mxu0 %v321
      %707 = vmatprep.subr.mxu0 0.0
      %708 = vmatpush1.msra.mxu0 %v323
      %709 = vmatprep.subr.mxu0 0.0
      %710 = vmatpush1.msra.mxu0 %v325
      %711 = vmatprep.subr.mxu0 0.0
      %712 = vmatpush1.msra.mxu0 %v327
      %713 = vmatprep.subr.mxu0 0.0
      %714 = vmatpush1.msra.mxu0 %v333
      %715 = vmatprep.subr.mxu0 0.0
      %716 = vmatpush1.msra.mxu0 %v335
      %717 = vmatprep.subr.mxu0 0.0
      %718 = vmatpush1.msra.mxu0 %v337
      %719 = vmatprep.subr.mxu0 0.0
      %720 = vmatpush1.msra.mxu0 %v339
      %721 = vmatprep.subr.mxu0 0.0
      %722 = vmatpush1.msra.mxu0 %v345
      %723 = vmatprep.subr.mxu0 0.0
      %724 = vmatpush1.msra.mxu0 %v347
      %725 = vmatprep.subr.mxu0 0.0
      %726 = vmatpush1.msra.mxu0 %v349
      %727 = vmatprep.subr.mxu0 0.0
      %728 = vmatpush1.msra.mxu0 %v351
      %729 = vmatprep.subr.mxu0 0.0
      %730 = vmatpush1.msra.mxu0 %v357
      %731 = vmatprep.subr.mxu0 0.0
      %732 = vmatpush1.msra.mxu0 %v359
      %733 = vmatprep.subr.mxu0 0.0
      %734 = vmatpush1.msra.mxu0 %v361
      %735 = vmatprep.subr.mxu0 0.0
      %736 = vmatpush1.msra.mxu0 %v363
      %737 = vmatprep.subr.mxu0 0.0
      %738 = vmatpush1.msra.mxu0 %v369
      %739 = vmatprep.subr.mxu0 0.0
      %740 = vmatpush1.msra.mxu0 %v371
      %741 = vmatprep.subr.mxu0 0.0
      %742 = vmatpush1.msra.mxu0 %v373
      %743 = vmatprep.subr.mxu0 0.0
      %744 = vmatpush1.msra.mxu0 %v375
      %745 = vmatprep.subr.mxu0 0.0
      %746 = vmatpush1.msra.mxu0 0.0
      %747 = vmatprep.subr.mxu0 0.0
      %748 = vmatpush1.msra.mxu0 0.0
      %749 = vmatprep.subr.mxu0 0.0
      %750 = vmatpush1.msra.mxu0 0.0
      %751 = vmatprep.subr.mxu0 0.0
      %752 = vmatpush1.msra.mxu0 0.0
      %753 = vmatprep.mubr.f32.mxu0 %v606
      %754 = vmatmul.mubr.f32.gmra.mrb[0].mxu0 %v380
      %v755 = vpop.f32.mrb[0].mxu0
      %v756 = vadd.f32 %v467, %v755
      %v757 = vpop.f32.mrb[0].mxu0
      %758 = vmatprep.mubr.f32.mxu0 %v609
      %759 = vmatmul.mubr.f32.gmra.mrb[0].mxu0 %v382
      %v760 = vpop.f32.mrb[0].mxu0
      %v761 = vadd.f32 %v472, %v760
      %v762 = vpop.f32.mrb[0].mxu0
      %763 = vmatprep.mubr.f32.mxu0 %v612
      %764 = vmatmul.mubr.f32.gmra.mrb[0].mxu0 %v384
      %v765 = vpop.f32.mrb[0].mxu0
      %v766 = vadd.f32 %v477, %v765
      %v767 = vpop.f32.mrb[0].mxu0
      %768 = vmatprep.mubr.f32.mxu0 %v615
      %769 = vmatmul.mubr.f32.gmra.mrb[0].mxu0 %v386
      %v770 = vpop.f32.mrb[0].mxu0
      %v771 = vadd.f32 %v482, %v770
      %v772 = vpop.f32.mrb[0].mxu0
      %773 = vmatprep.mubr.f32.mxu0 %v618
      %774 = vmatmul.mubr.f32.gmra.mrb[0].mxu0 %v388
      %v775 = vpop.f32.mrb[0].mxu0
      %v776 = vadd.f32 %v487, %v775
      %v777 = vpop.f32.mrb[0].mxu0
      %778 = vmatprep.mubr.f32.mxu0 %v621
      %779 = vmatmul.mubr.f32.gmra.mrb[0].mxu0 %v390
      %v780 = vpop.f32.mrb[0].mxu0
      %v781 = vadd.f32 %v492, %v780
      %v782 = vpop.f32.mrb[0].mxu0
      %783 = vmatprep.mubr.f32.mxu0 %v624
      %784 = vmatmul.mubr.f32.gmra.mrb[0].mxu0 %v392
      %v785 = vpop.f32.mrb[0].mxu0
      %v786 = vadd.f32 %v497, %v785
      %v787 = vpop.f32.mrb[0].mxu0
      %788 = vmatprep.mubr.f32.mxu0 %v627
      %789 = vmatmul.mubr.f32.gmra.mrb[0].mxu0 %v394
      %v790 = vpop.f32.mrb[0].mxu0
      %v791 = vadd.f32 %v502, %v790
      %v792 = vpop.f32.mrb[0].mxu0
      %793 = vmatprep.mubr.f32.mxu0 %v630
      %794 = vmatmul.mubr.f32.gmra.mrb[0].mxu0 %v396
      %v795 = vpop.f32.mrb[0].mxu0
      %v796 = vadd.f32 %v507, %v795
      %v797 = vpop.f32.mrb[0].mxu0
      %798 = vmatprep.mubr.f32.mxu0 %v633
      %799 = vmatmul.mubr.f32.gmra.mrb[0].mxu0 %v398
      %v800 = vpop.f32.mrb[0].mxu0
      %v801 = vadd.f32 %v512, %v800
      %v802 = vpop.f32.mrb[0].mxu0
      %803 = vmatprep.mubr.f32.mxu0 %v636
      %804 = vmatmul.mubr.f32.gmra.mrb[0].mxu0 %v400
      %v805 = vpop.f32.mrb[0].mxu0
      %v806 = vadd.f32 %v517, %v805
      %v807 = vpop.f32.mrb[0].mxu0
      %808 = vmatprep.mubr.f32.mxu0 %v639
      %809 = vmatmul.mubr.f32.gmra.mrb[0].mxu0 %v402
      %v810 = vpop.f32.mrb[0].mxu0
      %v811 = vadd.f32 %v522, %v810
      %v812 = vpop.f32.mrb[0].mxu0
      %813 = vmatprep.mubr.f32.mxu0 %v642
      %814 = vmatmul.mubr.f32.gmra.mrb[0].mxu0 %v404
      %v815 = vpop.f32.mrb[0].mxu0
      %v816 = vadd.f32 %v527, %v815
      %v817 = vpop.f32.mrb[0].mxu0
      %818 = vmatprep.mubr.f32.mxu0 %v645
      %819 = vmatmul.mubr.f32.gmra.mrb[0].mxu0 %v406
      %v820 = vpop.f32.mrb[0].mxu0
      %v821 = vadd.f32 %v532, %v820
      %v822 = vpop.f32.mrb[0].mxu0
      %823 = vmatprep.mubr.f32.mxu0 %v648
      %824 = vmatmul.mubr.f32.gmra.mrb[0].mxu0 %v408
      %v825 = vpop.f32.mrb[0].mxu0
      %v826 = vadd.f32 %v537, %v825
      %v827 = vpop.f32.mrb[0].mxu0
      %828 = vmatprep.mubr.f32.mxu0 %v651
      %829 = vmatmul.mubr.f32.gmra.mrb[0].mxu0 %v410
      %v830 = vpop.f32.mrb[0].mxu0
      %v831 = vadd.f32 %v542, %v830
      %v832 = vpop.f32.mrb[0].mxu0
      %833 = vmatprep.mubr.f32.mxu0 %v654
      %834 = vmatmul.mubr.f32.gmra.mrb[0].mxu0 %v412
      %v835 = vpop.f32.mrb[0].mxu0
      %v836 = vadd.f32 %v547, %v835
      %v837 = vpop.f32.mrb[0].mxu0
      %838 = vmatprep.mubr.f32.mxu0 %v657
      %839 = vmatmul.mubr.f32.gmra.mrb[0].mxu0 %v414
      %v840 = vpop.f32.mrb[0].mxu0
      %v841 = vadd.f32 %v552, %v840
      %v842 = vpop.f32.mrb[0].mxu0
      %843 = vmatprep.mubr.f32.mxu0 %v660
      %844 = vmatmul.mubr.f32.gmra.mrb[0].mxu0 %v416
      %v845 = vpop.f32.mrb[0].mxu0
      %v846 = vadd.f32 %v557, %v845
      %v847 = vpop.f32.mrb[0].mxu0
      %848 = vmatprep.mubr.f32.mxu0 %v663
      %849 = vmatmul.mubr.f32.gmra.mrb[0].mxu0 %v418
      %v850 = vpop.f32.mrb[0].mxu0
      %v851 = vadd.f32 %v562, %v850
      %v852 = vpop.f32.mrb[0].mxu0
      %853 = vmatprep.mubr.f32.mxu0 %v666
      %854 = vmatmul.mubr.f32.gmra.mrb[0].mxu0 %v420
      %v855 = vpop.f32.mrb[0].mxu0
      %v856 = vadd.f32 %v567, %v855
      %v857 = vpop.f32.mrb[0].mxu0
      %858 = vmatprep.mubr.f32.mxu0 %v669
      %859 = vmatmul.mubr.f32.gmra.mrb[0].mxu0 %v422
      %v860 = vpop.f32.mrb[0].mxu0
      %v861 = vadd.f32 %v572, %v860
      %v862 = vpop.f32.mrb[0].mxu0
      %863 = vmatprep.mubr.f32.mxu0 %v672
      %864 = vmatmul.mubr.f32.gmra.mrb[0].mxu0 %v424
      %v865 = vpop.f32.mrb[0].mxu0
      %v866 = vadd.f32 %v577, %v865
      %v867 = vpop.f32.mrb[0].mxu0
      %868 = vmatprep.mubr.f32.mxu0 %v675
      %869 = vmatmul.mubr.f32.gmra.mrb[0].mxu0 %v426
      %v870 = vpop.f32.mrb[0].mxu0
      %v871 = vadd.f32 %v582, %v870
      %v872 = vpop.f32.mrb[0].mxu0
      %873 = vmatprep.mubr.f32.mxu0 %v678
      %874 = vmatmul.mubr.f32.gmra.mrb[0].mxu0 %v428
      %v875 = vpop.f32.mrb[0].mxu0
      %v876 = vadd.f32 %v587, %v875
      %v877 = vpop.f32.mrb[0].mxu0
      %878 = vmatprep.mubr.f32.mxu0 %v681
      %879 = vmatmul.mubr.f32.gmra.mrb[0].mxu0 %v430
      %v880 = vpop.f32.mrb[0].mxu0
      %v881 = vadd.f32 %v592, %v880
      %v882 = vpop.f32.mrb[0].mxu0
      %883 = vmatprep.mubr.f32.mxu0 %v684
      %884 = vmatmul.mubr.f32.gmra.mrb[0].mxu0 %v432
      %v885 = vpop.f32.mrb[0].mxu0
      %v886 = vadd.f32 %v597, %v885
      %v887 = vpop.f32.mrb[0].mxu0
      %888 = vmatprep.mubr.f32.mxu0 %v687
      %889 = vmatmul.mubr.f32.gmra.mrb[0].mxu0 %v434
      %v890 = vpop.f32.mrb[0].mxu0
      %v891 = vadd.f32 %v602, %v890
      %v892 = vpop.f32.mrb[0].mxu0
      %893 = vdwg.mxu0
      %v894 = vld [vmem:[%s3] sm:$0xff]
      %v895 = vld [vmem:[%s3 + $0x8] sm:$0xff]
      %v896 = vld [vmem:[%s3 + $0x10] sm:$0xff]
      %v897 = vld [vmem:[%s3 + $0x18] sm:$0xff]
      %vm898 = vcmask 162816
      %v900 = vsel %vm898, %v776, 0
      %v903 = vsel %vm898, %v781, 0
      %v906 = vsel %vm898, %v786, 0
      %v909 = vsel %vm898, %v791, 0
      %v912 = vsel %vm898, %v796, 0
      %v915 = vsel %vm898, %v801, 0
      %v918 = vsel %vm898, %v806, 0
      %v921 = vsel %vm898, %v811, 0
      %923 = vmatprep.subr.mxu0 0.0
      %924 = vmatpush1.xpose.msra.mxu0 %v912
      %925 = vmatprep.subr.mxu0 0.0
      %926 = vmatpush1.xpose.msra.mxu0 %v915
      %927 = vmatprep.subr.mxu0 0.0
      %928 = vmatpush1.xpose.msra.mxu0 %v918
      %929 = vmatprep.subr.mxu0 0.0
      %930 = vmatpush1.xpose.msra.mxu0 %v921
      %931 = vmatprep.subr.mxu0 0.0
      %932 = vmatpush1.xpose.msra.mxu0 0.0
      %933 = vmatprep.subr.mxu0 0.0
      %934 = vmatpush1.xpose.msra.mxu0 0.0
      %935 = vmatprep.subr.mxu0 0.0
      %936 = vmatpush1.xpose.msra.mxu0 0.0
      %937 = vmatprep.subr.mxu0 0.0
      %938 = vmatpush1.xpose.msra.mxu0 0.0
      %939 = vmatprep.subr.mxu0 0.0
      %940 = vmatpush1.xpose.msra.mxu0 0.0
      %941 = vmatprep.subr.mxu0 0.0
      %942 = vmatpush1.xpose.msra.mxu0 0.0
      %943 = vmatprep.subr.mxu0 0.0
      %944 = vmatpush1.xpose.msra.mxu0 0.0
      %945 = vmatprep.subr.mxu0 0.0
      %946 = vmatpush1.xpose.msra.mxu0 0.0
      %947 = vmatprep.subr.mxu0 0.0
      %948 = vmatpush1.xpose.msra.mxu0 0.0
      %949 = vmatprep.subr.mxu0 0.0
      %950 = vmatpush1.xpose.msra.mxu0 0.0
      %951 = vmatprep.subr.mxu0 0.0
      %952 = vmatpush1.xpose.msra.mxu0 0.0
      %953 = vmatprep.subr.mxu0 0.0
      %954 = vmatpush1.xpose.msra.mxu0 0.0
      %955 = vmatprep.subr.mxu0 0.0
      %956 = vmatpush1.xpose.msra.mxu0 0.0
      %957 = vmatprep.subr.mxu0 0.0
      %958 = vmatpush1.xpose.msra.mxu0 0.0
      %959 = vmatprep.subr.mxu0 0.0
      %960 = vmatpush1.xpose.msra.mxu0 0.0
      %961 = vmatprep.subr.mxu0 0.0
      %962 = vmatpush1.xpose.msra.mxu0 0.0
      %963 = vmatprep.subr.mxu0 0.0
      %964 = vmatpush1.xpose.msra.mxu0 0.0
      %965 = vmatprep.subr.mxu0 0.0
      %966 = vmatpush1.xpose.msra.mxu0 0.0
      %967 = vmatprep.subr.mxu0 0.0
      %968 = vmatpush1.xpose.msra.mxu0 0.0
      %969 = vmatprep.subr.mxu0 0.0
      %970 = vmatpush1.xpose.msra.mxu0 0.0
      %971 = vmatprep.subr.mxu0 0.0
      %972 = vmatpush1.xpose.msra.mxu0 0.0
      %973 = vmatprep.subr.mxu0 0.0
      %974 = vmatpush1.xpose.msra.mxu0 0.0
      %975 = vmatprep.subr.mxu0 0.0
      %976 = vmatpush1.xpose.msra.mxu0 0.0
      %977 = vmatprep.subr.mxu0 0.0
      %978 = vmatpush1.xpose.msra.mxu0 0.0
      %979 = vmatprep.subr.mxu0 0.0
      %980 = vmatpush1.xpose.msra.mxu0 0.0
      %981 = vmatprep.subr.mxu0 0.0
      %982 = vmatpush1.xpose.msra.mxu0 0.0
      %983 = vmatprep.subr.mxu0 0.0
      %984 = vmatpush1.xpose.msra.mxu0 0.0
      %985 = vmatprep.subr.mxu0 0.0
      %986 = vmatpush1.xpose.msra.mxu0 0.0
      %987 = vmatprep.mubr.f32.mxu0 0.0
      %988 = vmatmul.mubr.f32.gmra.mrb[0].mxu0 %v900
      %v989 = vpop.f32.mrb[0].mxu0
      %v990 = vadd.f32 0.0, %v989
      %v991 = vpop.f32.mrb[0].mxu0
      %992 = vmatprep.mubr.f32.mxu0 0.0
      %993 = vmatmul.mubr.f32.gmra.mrb[0].mxu0 %v903
      %v994 = vpop.f32.mrb[0].mxu0
      %v995 = vadd.f32 0.0, %v994
      %v996 = vpop.f32.mrb[0].mxu0
      %997 = vmatprep.mubr.f32.mxu0 0.0
      %998 = vmatmul.mubr.f32.gmra.mrb[0].mxu0 %v906
      %v999 = vpop.f32.mrb[0].mxu0
      %v1000 = vadd.f32 0.0, %v999
      %v1001 = vpop.f32.mrb[0].mxu0
      %1002 = vmatprep.mubr.f32.mxu0 0.0
      %1003 = vmatmul.mubr.f32.gmra.mrb[0].mxu0 %v909
      %v1004 = vpop.f32.mrb[0].mxu0
      %v1005 = vadd.f32 0.0, %v1004
      %v1006 = vpop.f32.mrb[0].mxu0
      %1007 = vdwg.mxu0
      %v1008 = vmul.f32 %v990, %v894
      %v1009 = vmul.f32 %v995, %v895
      %v1010 = vmul.f32 %v1000, %v896
      %v1011 = vmul.f32 %v1005, %v897
      %vm1012 = vcmask 261120
      %v1014 = vsel %vm1012, %v1008, 0
      %v1017 = vsel %vm1012, %v1009, 0
      %v1020 = vsel %vm1012, %v1010, 0
      %v1023 = vsel %vm1012, %v1011, 0
      %1025 = vmatprep.subr.mxu0 0.0
      %1026 = vmatpush1.msra.mxu0 %v816
      %1027 = vmatprep.subr.mxu0 0.0
      %1028 = vmatpush1.msra.mxu0 %v821
      %1029 = vmatprep.subr.mxu0 0.0
      %1030 = vmatpush1.msra.mxu0 %v826
      %1031 = vmatprep.subr.mxu0 0.0
      %1032 = vmatpush1.msra.mxu0 %v831
      %1033 = vmatprep.subr.mxu0 0.0
      %1034 = vmatpush1.msra.mxu0 0.0
      %1035 = vmatprep.subr.mxu0 0.0
      %1036 = vmatpush1.msra.mxu0 0.0
      %1037 = vmatprep.subr.mxu0 0.0
      %1038 = vmatpush1.msra.mxu0 0.0
      %1039 = vmatprep.subr.mxu0 0.0
      %1040 = vmatpush1.msra.mxu0 0.0
      %1041 = vmatprep.subr.mxu0 0.0
      %1042 = vmatpush1.msra.mxu0 0.0
      %1043 = vmatprep.subr.mxu0 0.0
      %1044 = vmatpush1.msra.mxu0 0.0
      %1045 = vmatprep.subr.mxu0 0.0
      %1046 = vmatpush1.msra.mxu0 0.0
      %1047 = vmatprep.subr.mxu0 0.0
      %1048 = vmatpush1.msra.mxu0 0.0
      %1049 = vmatprep.subr.mxu0 0.0
      %1050 = vmatpush1.msra.mxu0 0.0
      %1051 = vmatprep.subr.mxu0 0.0
      %1052 = vmatpush1.msra.mxu0 0.0
      %1053 = vmatprep.subr.mxu0 0.0
      %1054 = vmatpush1.msra.mxu0 0.0
      %1055 = vmatprep.subr.mxu0 0.0
      %1056 = vmatpush1.msra.mxu0 0.0
      %1057 = vmatprep.subr.mxu0 0.0
      %1058 = vmatpush1.msra.mxu0 0.0
      %1059 = vmatprep.subr.mxu0 0.0
      %1060 = vmatpush1.msra.mxu0 0.0
      %1061 = vmatprep.subr.mxu0 0.0
      %1062 = vmatpush1.msra.mxu0 0.0
      %1063 = vmatprep.subr.mxu0 0.0
      %1064 = vmatpush1.msra.mxu0 0.0
      %1065 = vmatprep.subr.mxu0 0.0
      %1066 = vmatpush1.msra.mxu0 0.0
      %1067 = vmatprep.subr.mxu0 0.0
      %1068 = vmatpush1.msra.mxu0 0.0
      %1069 = vmatprep.subr.mxu0 0.0
      %1070 = vmatpush1.msra.mxu0 0.0
      %1071 = vmatprep.subr.mxu0 0.0
      %1072 = vmatpush1.msra.mxu0 0.0
      %1073 = vmatprep.subr.mxu0 0.0
      %1074 = vmatpush1.msra.mxu0 0.0
      %1075 = vmatprep.subr.mxu0 0.0
      %1076 = vmatpush1.msra.mxu0 0.0
      %1077 = vmatprep.subr.mxu0 0.0
      %1078 = vmatpush1.msra.mxu0 0.0
      %1079 = vmatprep.subr.mxu0 0.0
      %1080 = vmatpush1.msra.mxu0 0.0
      %1081 = vmatprep.subr.mxu0 0.0
      %1082 = vmatpush1.msra.mxu0 0.0
      %1083 = vmatprep.subr.mxu0 0.0
      %1084 = vmatpush1.msra.mxu0 0.0
      %1085 = vmatprep.subr.mxu0 0.0
      %1086 = vmatpush1.msra.mxu0 0.0
      %1087 = vmatprep.subr.mxu0 0.0
      %1088 = vmatpush1.msra.mxu0 0.0
      %1089 = vmatprep.mubr.f32.mxu0 0.0
      %1090 = vmatmul.mubr.f32.gmra.mrb[0].mxu0 %v1014
      %v1091 = vpop.f32.mrb[0].mxu0
      %v1092 = vadd.f32 0.0, %v1091
      %v1093 = vpop.f32.mrb[0].mxu0
      %1094 = vmatprep.mubr.f32.mxu0 0.0
      %1095 = vmatmul.mubr.f32.gmra.mrb[0].mxu0 %v1017
      %v1096 = vpop.f32.mrb[0].mxu0
      %v1097 = vadd.f32 0.0, %v1096
      %v1098 = vpop.f32.mrb[0].mxu0
      %1099 = vmatprep.mubr.f32.mxu0 0.0
      %1100 = vmatmul.mubr.f32.gmra.mrb[0].mxu0 %v1020
      %v1101 = vpop.f32.mrb[0].mxu0
      %v1102 = vadd.f32 0.0, %v1101
      %v1103 = vpop.f32.mrb[0].mxu0
      %1104 = vmatprep.mubr.f32.mxu0 0.0
      %1105 = vmatmul.mubr.f32.gmra.mrb[0].mxu0 %v1023
      %v1106 = vpop.f32.mrb[0].mxu0
      %v1107 = vadd.f32 0.0, %v1106
      %v1108 = vpop.f32.mrb[0].mxu0
      %1109 = vdwg.mxu0
      %v1110 = vxor.u32 %v1092, 2147483648
      %v1111 = vxor.u32 %v1097, 2147483648
      %v1112 = vxor.u32 %v1102, 2147483648
      %v1113 = vxor.u32 %v1107, 2147483648
      %v1114 = vmul.f32 %v1110, 1.442695
      %v1115 = vpow.pop %v1114
      %v1116 = vmul.f32 %v1111, 1.442695
      %v1117 = vpow.pop %v1116
      %v1118 = vmul.f32 %v1112, 1.442695
      %v1119 = vpow.pop %v1118
      %v1120 = vmul.f32 %v1113, 1.442695
      %v1121 = vpow.pop %v1120
      %v1122 = vadd.f32 %v1115, 1.0
      %v1123 = vadd.f32 %v1117, 1.0
      %v1124 = vadd.f32 %v1119, 1.0
      %v1125 = vadd.f32 %v1121, 1.0
      %v1126 = vrcp.pop %v1122
      %v1127 = vmul.f32 1.0, %v1126
      %v1128 = vrcp.pop %v1123
      %v1129 = vmul.f32 1.0, %v1128
      %v1130 = vrcp.pop %v1124
      %v1131 = vmul.f32 1.0, %v1130
      %v1132 = vrcp.pop %v1125
      %v1133 = vmul.f32 1.0, %v1132
      %v1134 = vadd.f32 %v1127, %v756
      %v1135 = vadd.f32 %v1129, %v761
      %v1136 = vadd.f32 %v1131, %v766
      %v1137 = vadd.f32 %v1133, %v771
      %v1138 = vld [vmem:[%s4] sm:$0x1]
      %v1140 = vlaneseq
      %v1141 = vshrl.u32 %v1140, 7
      %v1142 = vsub.s32 0, %v1141
      %v1143 = vrot.slane %v1138, %v1142
      %v1145 = vmul.f32 %v856, %v1143
      %v1146 = vmul.f32 %v861, %v1143
      %v1147 = vmul.f32 %v866, %v1143
      %v1148 = vmul.f32 %v871, %v1143
      %v1150 = vsel %vm898, %v836, 0
      %v1153 = vsel %vm898, %v841, 0
      %v1156 = vsel %vm898, %v846, 0
      %v1159 = vsel %vm898, %v851, 0
      %v1162 = vsel %vm898, %v1145, 0
      %v1165 = vsel %vm898, %v1146, 0
      %v1168 = vsel %vm898, %v1147, 0
      %v1171 = vsel %vm898, %v1148, 0
      %1173 = vmatprep.subr.mxu0 0.0
      %1174 = vmatpush1.xpose.msra.mxu0 %v1162
      %1175 = vmatprep.subr.mxu0 0.0
      %1176 = vmatpush1.xpose.msra.mxu0 %v1165
      %1177 = vmatprep.subr.mxu0 0.0
      %1178 = vmatpush1.xpose.msra.mxu0 %v1168
      %1179 = vmatprep.subr.mxu0 0.0
      %1180 = vmatpush1.xpose.msra.mxu0 %v1171
      %1181 = vmatprep.subr.mxu0 0.0
      %1182 = vmatpush1.xpose.msra.mxu0 0.0
      %1183 = vmatprep.subr.mxu0 0.0
      %1184 = vmatpush1.xpose.msra.mxu0 0.0
      %1185 = vmatprep.subr.mxu0 0.0
      %1186 = vmatpush1.xpose.msra.mxu0 0.0
      %1187 = vmatprep.subr.mxu0 0.0
      %1188 = vmatpush1.xpose.msra.mxu0 0.0
      %1189 = vmatprep.subr.mxu0 0.0
      %1190 = vmatpush1.xpose.msra.mxu0 0.0
      %1191 = vmatprep.subr.mxu0 0.0
      %1192 = vmatpush1.xpose.msra.mxu0 0.0
      %1193 = vmatprep.subr.mxu0 0.0
      %1194 = vmatpush1.xpose.msra.mxu0 0.0
      %1195 = vmatprep.subr.mxu0 0.0
      %1196 = vmatpush1.xpose.msra.mxu0 0.0
      %1197 = vmatprep.subr.mxu0 0.0
      %1198 = vmatpush1.xpose.msra.mxu0 0.0
      %1199 = vmatprep.subr.mxu0 0.0
      %1200 = vmatpush1.xpose.msra.mxu0 0.0
      %1201 = vmatprep.subr.mxu0 0.0
      %1202 = vmatpush1.xpose.msra.mxu0 0.0
      %1203 = vmatprep.subr.mxu0 0.0
      %1204 = vmatpush1.xpose.msra.mxu0 0.0
      %1205 = vmatprep.subr.mxu0 0.0
      %1206 = vmatpush1.xpose.msra.mxu0 0.0
      %1207 = vmatprep.subr.mxu0 0.0
      %1208 = vmatpush1.xpose.msra.mxu0 0.0
      %1209 = vmatprep.subr.mxu0 0.0
      %1210 = vmatpush1.xpose.msra.mxu0 0.0
      %1211 = vmatprep.subr.mxu0 0.0
      %1212 = vmatpush1.xpose.msra.mxu0 0.0
      %1213 = vmatprep.subr.mxu0 0.0
      %1214 = vmatpush1.xpose.msra.mxu0 0.0
      %1215 = vmatprep.subr.mxu0 0.0
      %1216 = vmatpush1.xpose.msra.mxu0 0.0
      %1217 = vmatprep.subr.mxu0 0.0
      %1218 = vmatpush1.xpose.msra.mxu0 0.0
      %1219 = vmatprep.subr.mxu0 0.0
      %1220 = vmatpush1.xpose.msra.mxu0 0.0
      %1221 = vmatprep.subr.mxu0 0.0
      %1222 = vmatpush1.xpose.msra.mxu0 0.0
      %1223 = vmatprep.subr.mxu0 0.0
      %1224 = vmatpush1.xpose.msra.mxu0 0.0
      %1225 = vmatprep.subr.mxu0 0.0
      %1226 = vmatpush1.xpose.msra.mxu0 0.0
      %1227 = vmatprep.subr.mxu0 0.0
      %1228 = vmatpush1.xpose.msra.mxu0 0.0
      %1229 = vmatprep.subr.mxu0 0.0
      %1230 = vmatpush1.xpose.msra.mxu0 0.0
      %1231 = vmatprep.subr.mxu0 0.0
      %1232 = vmatpush1.xpose.msra.mxu0 0.0
      %1233 = vmatprep.subr.mxu0 0.0
      %1234 = vmatpush1.xpose.msra.mxu0 0.0
      %1235 = vmatprep.subr.mxu0 0.0
      %1236 = vmatpush1.xpose.msra.mxu0 0.0
      %1237 = vmatprep.mubr.f32.mxu0 0.0
      %1238 = vmatmul.mubr.f32.gmra.mrb[0].mxu0 %v1150
      %v1239 = vpop.f32.mrb[0].mxu0
      %v1240 = vadd.f32 0.0, %v1239
      %v1241 = vpop.f32.mrb[0].mxu0
      %1242 = vmatprep.mubr.f32.mxu0 0.0
      %1243 = vmatmul.mubr.f32.gmra.mrb[0].mxu0 %v1153
      %v1244 = vpop.f32.mrb[0].mxu0
      %v1245 = vadd.f32 0.0, %v1244
      %v1246 = vpop.f32.mrb[0].mxu0
      %1247 = vmatprep.mubr.f32.mxu0 0.0
      %1248 = vmatmul.mubr.f32.gmra.mrb[0].mxu0 %v1156
      %v1249 = vpop.f32.mrb[0].mxu0
      %v1250 = vadd.f32 0.0, %v1249
      %v1251 = vpop.f32.mrb[0].mxu0
      %1252 = vmatprep.mubr.f32.mxu0 0.0
      %1253 = vmatmul.mubr.f32.gmra.mrb[0].mxu0 %v1159
      %v1254 = vpop.f32.mrb[0].mxu0
      %v1255 = vadd.f32 0.0, %v1254
      %v1256 = vpop.f32.mrb[0].mxu0
      %1257 = vdwg.mxu0
      %v1258 = vmul.f32 %v1240, %v894
      %v1259 = vmul.f32 %v1245, %v895
      %v1260 = vmul.f32 %v1250, %v896
      %v1261 = vmul.f32 %v1255, %v897
      %v1262 = vmul.f32 %v876, %v1143
      %v1263 = vmul.f32 %v881, %v1143
      %v1264 = vmul.f32 %v886, %v1143
      %v1265 = vmul.f32 %v891, %v1143
      %s1266 = scalar_lea.vmem %s4, 1
      %v1267 = vld [vmem:[%s1266] sm:$0x1]
      %v1269 = vlaneseq
      %v1270 = vshrl.u32 %v1269, 7
      %v1271 = vsub.s32 0, %v1270
      %v1272 = vrot.slane %v1267, %v1271
      %v1274 = vmul.f32 %v856, %v1272
      %v1275 = vmul.f32 %v861, %v1272
      %v1276 = vmul.f32 %v866, %v1272
      %v1277 = vmul.f32 %v871, %v1272
      %v1279 = vsel %vm898, %v1274, 0
      %v1282 = vsel %vm898, %v1275, 0
      %v1285 = vsel %vm898, %v1276, 0
      %v1288 = vsel %vm898, %v1277, 0
      %1290 = vmatprep.subr.mxu0 0.0
      %1291 = vmatpush1.xpose.msra.mxu0 %v1279
      %1292 = vmatprep.subr.mxu0 0.0
      %1293 = vmatpush1.xpose.msra.mxu0 %v1282
      %1294 = vmatprep.subr.mxu0 0.0
      %1295 = vmatpush1.xpose.msra.mxu0 %v1285
      %1296 = vmatprep.subr.mxu0 0.0
      %1297 = vmatpush1.xpose.msra.mxu0 %v1288
      %1298 = vmatprep.subr.mxu0 0.0
      %1299 = vmatpush1.xpose.msra.mxu0 0.0
      %1300 = vmatprep.subr.mxu0 0.0
      %1301 = vmatpush1.xpose.msra.mxu0 0.0
      %1302 = vmatprep.subr.mxu0 0.0
      %1303 = vmatpush1.xpose.msra.mxu0 0.0
      %1304 = vmatprep.subr.mxu0 0.0
      %1305 = vmatpush1.xpose.msra.mxu0 0.0
      %1306 = vmatprep.subr.mxu0 0.0
      %1307 = vmatpush1.xpose.msra.mxu0 0.0
      %1308 = vmatprep.subr.mxu0 0.0
      %1309 = vmatpush1.xpose.msra.mxu0 0.0
      %1310 = vmatprep.subr.mxu0 0.0
      %1311 = vmatpush1.xpose.msra.mxu0 0.0
      %1312 = vmatprep.subr.mxu0 0.0
      %1313 = vmatpush1.xpose.msra.mxu0 0.0
      %1314 = vmatprep.subr.mxu0 0.0
      %1315 = vmatpush1.xpose.msra.mxu0 0.0
      %1316 = vmatprep.subr.mxu0 0.0
      %1317 = vmatpush1.xpose.msra.mxu0 0.0
      %1318 = vmatprep.subr.mxu0 0.0
      %1319 = vmatpush1.xpose.msra.mxu0 0.0
      %1320 = vmatprep.subr.mxu0 0.0
      %1321 = vmatpush1.xpose.msra.mxu0 0.0
      %1322 = vmatprep.subr.mxu0 0.0
      %1323 = vmatpush1.xpose.msra.mxu0 0.0
      %1324 = vmatprep.subr.mxu0 0.0
      %1325 = vmatpush1.xpose.msra.mxu0 0.0
      %1326 = vmatprep.subr.mxu0 0.0
      %1327 = vmatpush1.xpose.msra.mxu0 0.0
      %1328 = vmatprep.subr.mxu0 0.0
      %1329 = vmatpush1.xpose.msra.mxu0 0.0
      %1330 = vmatprep.subr.mxu0 0.0
      %1331 = vmatpush1.xpose.msra.mxu0 0.0
      %1332 = vmatprep.subr.mxu0 0.0
      %1333 = vmatpush1.xpose.msra.mxu0 0.0
      %1334 = vmatprep.subr.mxu0 0.0
      %1335 = vmatpush1.xpose.msra.mxu0 0.0
      %1336 = vmatprep.subr.mxu0 0.0
      %1337 = vmatpush1.xpose.msra.mxu0 0.0
      %1338 = vmatprep.subr.mxu0 0.0
      %1339 = vmatpush1.xpose.msra.mxu0 0.0
      %1340 = vmatprep.subr.mxu0 0.0
      %1341 = vmatpush1.xpose.msra.mxu0 0.0
      %1342 = vmatprep.subr.mxu0 0.0
      %1343 = vmatpush1.xpose.msra.mxu0 0.0
      %1344 = vmatprep.subr.mxu0 0.0
      %1345 = vmatpush1.xpose.msra.mxu0 0.0
      %1346 = vmatprep.subr.mxu0 0.0
      %1347 = vmatpush1.xpose.msra.mxu0 0.0
      %1348 = vmatprep.subr.mxu0 0.0
      %1349 = vmatpush1.xpose.msra.mxu0 0.0
      %1350 = vmatprep.subr.mxu0 0.0
      %1351 = vmatpush1.xpose.msra.mxu0 0.0
      %1352 = vmatprep.subr.mxu0 0.0
      %1353 = vmatpush1.xpose.msra.mxu0 0.0
      %1354 = vmatprep.mubr.f32.mxu0 0.0
      %1355 = vmatmul.mubr.f32.gmra.mrb[0].mxu0 %v1150
      %v1356 = vpop.f32.mrb[0].mxu0
      %v1357 = vadd.f32 0.0, %v1356
      %v1358 = vpop.f32.mrb[0].mxu0
      %1359 = vmatprep.mubr.f32.mxu0 0.0
      %1360 = vmatmul.mubr.f32.gmra.mrb[0].mxu0 %v1153
      %v1361 = vpop.f32.mrb[0].mxu0
      %v1362 = vadd.f32 0.0, %v1361
      %v1363 = vpop.f32.mrb[0].mxu0
      %1364 = vmatprep.mubr.f32.mxu0 0.0
      %1365 = vmatmul.mubr.f32.gmra.mrb[0].mxu0 %v1156
      %v1366 = vpop.f32.mrb[0].mxu0
      %v1367 = vadd.f32 0.0, %v1366
      %v1368 = vpop.f32.mrb[0].mxu0
      %1369 = vmatprep.mubr.f32.mxu0 0.0
      %1370 = vmatmul.mubr.f32.gmra.mrb[0].mxu0 %v1159
      %v1371 = vpop.f32.mrb[0].mxu0
      %v1372 = vadd.f32 0.0, %v1371
      %v1373 = vpop.f32.mrb[0].mxu0
      %1374 = vdwg.mxu0
      %v1375 = vmul.f32 %v1357, %v894
      %v1376 = vmul.f32 %v1362, %v895
      %v1377 = vmul.f32 %v1367, %v896
      %v1378 = vmul.f32 %v1372, %v897
      %v1379 = vmul.f32 %v876, %v1272
      %v1380 = vmul.f32 %v881, %v1272
      %v1381 = vmul.f32 %v886, %v1272
      %v1382 = vmul.f32 %v891, %v1272
      %v1384 = vsel %vm1012, %v1375, 0
      %v1387 = vsel %vm1012, %v1376, 0
      %v1390 = vsel %vm1012, %v1377, 0
      %v1393 = vsel %vm1012, %v1378, 0
      %1395 = vmatprep.subr.mxu0 0.0
      %1396 = vmatpush1.msra.mxu0 %v1379
      %1397 = vmatprep.subr.mxu0 0.0
      %1398 = vmatpush1.msra.mxu0 %v1380
      %1399 = vmatprep.subr.mxu0 0.0
      %1400 = vmatpush1.msra.mxu0 %v1381
      %1401 = vmatprep.subr.mxu0 0.0
      %1402 = vmatpush1.msra.mxu0 %v1382
      %1403 = vmatprep.subr.mxu0 0.0
      %1404 = vmatpush1.msra.mxu0 0.0
      %1405 = vmatprep.subr.mxu0 0.0
      %1406 = vmatpush1.msra.mxu0 0.0
      %1407 = vmatprep.subr.mxu0 0.0
      %1408 = vmatpush1.msra.mxu0 0.0
      %1409 = vmatprep.subr.mxu0 0.0
      %1410 = vmatpush1.msra.mxu0 0.0
      %1411 = vmatprep.subr.mxu0 0.0
      %1412 = vmatpush1.msra.mxu0 0.0
      %1413 = vmatprep.subr.mxu0 0.0
      %1414 = vmatpush1.msra.mxu0 0.0
      %1415 = vmatprep.subr.mxu0 0.0
      %1416 = vmatpush1.msra.mxu0 0.0
      %1417 = vmatprep.subr.mxu0 0.0
      %1418 = vmatpush1.msra.mxu0 0.0
      %1419 = vmatprep.subr.mxu0 0.0
      %1420 = vmatpush1.msra.mxu0 0.0
      %1421 = vmatprep.subr.mxu0 0.0
      %1422 = vmatpush1.msra.mxu0 0.0
      %1423 = vmatprep.subr.mxu0 0.0
      %1424 = vmatpush1.msra.mxu0 0.0
      %1425 = vmatprep.subr.mxu0 0.0
      %1426 = vmatpush1.msra.mxu0 0.0
      %1427 = vmatprep.subr.mxu0 0.0
      %1428 = vmatpush1.msra.mxu0 0.0
      %1429 = vmatprep.subr.mxu0 0.0
      %1430 = vmatpush1.msra.mxu0 0.0
      %1431 = vmatprep.subr.mxu0 0.0
      %1432 = vmatpush1.msra.mxu0 0.0
      %1433 = vmatprep.subr.mxu0 0.0
      %1434 = vmatpush1.msra.mxu0 0.0
      %1435 = vmatprep.subr.mxu0 0.0
      %1436 = vmatpush1.msra.mxu0 0.0
      %1437 = vmatprep.subr.mxu0 0.0
      %1438 = vmatpush1.msra.mxu0 0.0
      %1439 = vmatprep.subr.mxu0 0.0
      %1440 = vmatpush1.msra.mxu0 0.0
      %1441 = vmatprep.subr.mxu0 0.0
      %1442 = vmatpush1.msra.mxu0 0.0
      %1443 = vmatprep.subr.mxu0 0.0
      %1444 = vmatpush1.msra.mxu0 0.0
      %1445 = vmatprep.subr.mxu0 0.0
      %1446 = vmatpush1.msra.mxu0 0.0
      %1447 = vmatprep.subr.mxu0 0.0
      %1448 = vmatpush1.msra.mxu0 0.0
      %1449 = vmatprep.subr.mxu0 0.0
      %1450 = vmatpush1.msra.mxu0 0.0
      %1451 = vmatprep.subr.mxu0 0.0
      %1452 = vmatpush1.msra.mxu0 0.0
      %1453 = vmatprep.subr.mxu0 0.0
      %1454 = vmatpush1.msra.mxu0 0.0
      %1455 = vmatprep.subr.mxu0 0.0
      %1456 = vmatpush1.msra.mxu0 0.0
      %1457 = vmatprep.subr.mxu0 0.0
      %1458 = vmatpush1.msra.mxu0 0.0
      %1459 = vmatprep.mubr.f32.mxu0 0.0
      %1460 = vmatmul.mubr.f32.gmra.mrb[0].mxu0 %v1384
      %v1461 = vpop.f32.mrb[0].mxu0
      %v1462 = vadd.f32 0.0, %v1461
      %v1463 = vpop.f32.mrb[0].mxu0
      %1464 = vmatprep.mubr.f32.mxu0 0.0
      %1465 = vmatmul.mubr.f32.gmra.mrb[0].mxu0 %v1387
      %v1466 = vpop.f32.mrb[0].mxu0
      %v1467 = vadd.f32 0.0, %v1466
      %v1468 = vpop.f32.mrb[0].mxu0
      %1469 = vmatprep.mubr.f32.mxu0 0.0
      %1470 = vmatmul.mubr.f32.gmra.mrb[0].mxu0 %v1390
      %v1471 = vpop.f32.mrb[0].mxu0
      %v1472 = vadd.f32 0.0, %v1471
      %v1473 = vpop.f32.mrb[0].mxu0
      %1474 = vmatprep.mubr.f32.mxu0 0.0
      %1475 = vmatmul.mubr.f32.gmra.mrb[0].mxu0 %v1393
      %v1476 = vpop.f32.mrb[0].mxu0
      %v1477 = vadd.f32 0.0, %v1476
      %v1478 = vpop.f32.mrb[0].mxu0
      %1479 = vdwg.mxu0
      %v1481 = vsel %vm1012, %v1258, 0
      %v1484 = vsel %vm1012, %v1259, 0
      %v1487 = vsel %vm1012, %v1260, 0
      %v1490 = vsel %vm1012, %v1261, 0
      %1492 = vmatprep.subr.mxu0 0.0
      %1493 = vmatpush1.msra.mxu0 %v1262
      %1494 = vmatprep.subr.mxu0 0.0
      %1495 = vmatpush1.msra.mxu0 %v1263
      %1496 = vmatprep.subr.mxu0 0.0
      %1497 = vmatpush1.msra.mxu0 %v1264
      %1498 = vmatprep.subr.mxu0 0.0
      %1499 = vmatpush1.msra.mxu0 %v1265
      %1500 = vmatprep.subr.mxu0 0.0
      %1501 = vmatpush1.msra.mxu0 0.0
      %1502 = vmatprep.subr.mxu0 0.0
      %1503 = vmatpush1.msra.mxu0 0.0
      %1504 = vmatprep.subr.mxu0 0.0
      %1505 = vmatpush1.msra.mxu0 0.0
      %1506 = vmatprep.subr.mxu0 0.0
      %1507 = vmatpush1.msra.mxu0 0.0
      %1508 = vmatprep.subr.mxu0 0.0
      %1509 = vmatpush1.msra.mxu0 0.0
      %1510 = vmatprep.subr.mxu0 0.0
      %1511 = vmatpush1.msra.mxu0 0.0
      %1512 = vmatprep.subr.mxu0 0.0
      %1513 = vmatpush1.msra.mxu0 0.0
      %1514 = vmatprep.subr.mxu0 0.0
      %1515 = vmatpush1.msra.mxu0 0.0
      %1516 = vmatprep.subr.mxu0 0.0
      %1517 = vmatpush1.msra.mxu0 0.0
      %1518 = vmatprep.subr.mxu0 0.0
      %1519 = vmatpush1.msra.mxu0 0.0
      %1520 = vmatprep.subr.mxu0 0.0
      %1521 = vmatpush1.msra.mxu0 0.0
      %1522 = vmatprep.subr.mxu0 0.0
      %1523 = vmatpush1.msra.mxu0 0.0
      %1524 = vmatprep.subr.mxu0 0.0
      %1525 = vmatpush1.msra.mxu0 0.0
      %1526 = vmatprep.subr.mxu0 0.0
      %1527 = vmatpush1.msra.mxu0 0.0
      %1528 = vmatprep.subr.mxu0 0.0
      %1529 = vmatpush1.msra.mxu0 0.0
      %1530 = vmatprep.subr.mxu0 0.0
      %1531 = vmatpush1.msra.mxu0 0.0
      %1532 = vmatprep.subr.mxu0 0.0
      %1533 = vmatpush1.msra.mxu0 0.0
      %1534 = vmatprep.subr.mxu0 0.0
      %1535 = vmatpush1.msra.mxu0 0.0
      %1536 = vmatprep.subr.mxu0 0.0
      %1537 = vmatpush1.msra.mxu0 0.0
      %1538 = vmatprep.subr.mxu0 0.0
      %1539 = vmatpush1.msra.mxu0 0.0
      %1540 = vmatprep.subr.mxu0 0.0
      %1541 = vmatpush1.msra.mxu0 0.0
      %1542 = vmatprep.subr.mxu0 0.0
      %1543 = vmatpush1.msra.mxu0 0.0
      %1544 = vmatprep.subr.mxu0 0.0
      %1545 = vmatpush1.msra.mxu0 0.0
      %1546 = vmatprep.subr.mxu0 0.0
      %1547 = vmatpush1.msra.mxu0 0.0
      %1548 = vmatprep.subr.mxu0 0.0
      %1549 = vmatpush1.msra.mxu0 0.0
      %1550 = vmatprep.subr.mxu0 0.0
      %1551 = vmatpush1.msra.mxu0 0.0
      %1552 = vmatprep.subr.mxu0 0.0
      %1553 = vmatpush1.msra.mxu0 0.0
      %1554 = vmatprep.subr.mxu0 0.0
      %1555 = vmatpush1.msra.mxu0 0.0
      %1556 = vmatprep.mubr.f32.mxu0 0.0
      %1557 = vmatmul.mubr.f32.gmra.mrb[0].mxu0 %v1481
      %v1558 = vpop.f32.mrb[0].mxu0
      %v1559 = vadd.f32 %v1462, %v1558
      %v1560 = vpop.f32.mrb[0].mxu0
      %1561 = vmatprep.mubr.f32.mxu0 0.0
      %1562 = vmatmul.mubr.f32.gmra.mrb[0].mxu0 %v1484
      %v1563 = vpop.f32.mrb[0].mxu0
      %v1564 = vadd.f32 %v1467, %v1563
      %v1565 = vpop.f32.mrb[0].mxu0
      %1566 = vmatprep.mubr.f32.mxu0 0.0
      %1567 = vmatmul.mubr.f32.gmra.mrb[0].mxu0 %v1487
      %v1568 = vpop.f32.mrb[0].mxu0
      %v1569 = vadd.f32 %v1472, %v1568
      %v1570 = vpop.f32.mrb[0].mxu0
      %1571 = vmatprep.mubr.f32.mxu0 0.0
      %1572 = vmatmul.mubr.f32.gmra.mrb[0].mxu0 %v1490
      %v1573 = vpop.f32.mrb[0].mxu0
      %v1574 = vadd.f32 %v1477, %v1573
      %v1575 = vpop.f32.mrb[0].mxu0
      %1576 = vdwg.mxu0
      %s1577 = scalar_lea.vmem %s4, 2
      %v1578 = vld [vmem:[%s1577] sm:$0x1]
      %v1580 = vlaneseq
      %v1581 = vshrl.u32 %v1580, 7
      %v1582 = vsub.s32 0, %v1581
      %v1583 = vrot.slane %v1578, %v1582
      %v1585 = vmul.f32 %v856, %v1583
      %v1586 = vmul.f32 %v861, %v1583
      %v1587 = vmul.f32 %v866, %v1583
      %v1588 = vmul.f32 %v871, %v1583
      %v1590 = vsel %vm898, %v1585, 0
      %v1593 = vsel %vm898, %v1586, 0
      %v1596 = vsel %vm898, %v1587, 0
      %v1599 = vsel %vm898, %v1588, 0
      %1601 = vmatprep.subr.mxu0 0.0
      %1602 = vmatpush1.xpose.msra.mxu0 %v1590
      %1603 = vmatprep.subr.mxu0 0.0
      %1604 = vmatpush1.xpose.msra.mxu0 %v1593
      %1605 = vmatprep.subr.mxu0 0.0
      %1606 = vmatpush1.xpose.msra.mxu0 %v1596
      %1607 = vmatprep.subr.mxu0 0.0
      %1608 = vmatpush1.xpose.msra.mxu0 %v1599
      %1609 = vmatprep.subr.mxu0 0.0
      %1610 = vmatpush1.xpose.msra.mxu0 0.0
      %1611 = vmatprep.subr.mxu0 0.0
      %1612 = vmatpush1.xpose.msra.mxu0 0.0
      %1613 = vmatprep.subr.mxu0 0.0
      %1614 = vmatpush1.xpose.msra.mxu0 0.0
      %1615 = vmatprep.subr.mxu0 0.0
      %1616 = vmatpush1.xpose.msra.mxu0 0.0
      %1617 = vmatprep.subr.mxu0 0.0
      %1618 = vmatpush1.xpose.msra.mxu0 0.0
      %1619 = vmatprep.subr.mxu0 0.0
      %1620 = vmatpush1.xpose.msra.mxu0 0.0
      %1621 = vmatprep.subr.mxu0 0.0
      %1622 = vmatpush1.xpose.msra.mxu0 0.0
      %1623 = vmatprep.subr.mxu0 0.0
      %1624 = vmatpush1.xpose.msra.mxu0 0.0
      %1625 = vmatprep.subr.mxu0 0.0
      %1626 = vmatpush1.xpose.msra.mxu0 0.0
      %1627 = vmatprep.subr.mxu0 0.0
      %1628 = vmatpush1.xpose.msra.mxu0 0.0
      %1629 = vmatprep.subr.mxu0 0.0
      %1630 = vmatpush1.xpose.msra.mxu0 0.0
      %1631 = vmatprep.subr.mxu0 0.0
      %1632 = vmatpush1.xpose.msra.mxu0 0.0
      %1633 = vmatprep.subr.mxu0 0.0
      %1634 = vmatpush1.xpose.msra.mxu0 0.0
      %1635 = vmatprep.subr.mxu0 0.0
      %1636 = vmatpush1.xpose.msra.mxu0 0.0
      %1637 = vmatprep.subr.mxu0 0.0
      %1638 = vmatpush1.xpose.msra.mxu0 0.0
      %1639 = vmatprep.subr.mxu0 0.0
      %1640 = vmatpush1.xpose.msra.mxu0 0.0
      %1641 = vmatprep.subr.mxu0 0.0
      %1642 = vmatpush1.xpose.msra.mxu0 0.0
      %1643 = vmatprep.subr.mxu0 0.0
      %1644 = vmatpush1.xpose.msra.mxu0 0.0
      %1645 = vmatprep.subr.mxu0 0.0
      %1646 = vmatpush1.xpose.msra.mxu0 0.0
      %1647 = vmatprep.subr.mxu0 0.0
      %1648 = vmatpush1.xpose.msra.mxu0 0.0
      %1649 = vmatprep.subr.mxu0 0.0
      %1650 = vmatpush1.xpose.msra.mxu0 0.0
      %1651 = vmatprep.subr.mxu0 0.0
      %1652 = vmatpush1.xpose.msra.mxu0 0.0
      %1653 = vmatprep.subr.mxu0 0.0
      %1654 = vmatpush1.xpose.msra.mxu0 0.0
      %1655 = vmatprep.subr.mxu0 0.0
      %1656 = vmatpush1.xpose.msra.mxu0 0.0
      %1657 = vmatprep.subr.mxu0 0.0
      %1658 = vmatpush1.xpose.msra.mxu0 0.0
      %1659 = vmatprep.subr.mxu0 0.0
      %1660 = vmatpush1.xpose.msra.mxu0 0.0
      %1661 = vmatprep.subr.mxu0 0.0
      %1662 = vmatpush1.xpose.msra.mxu0 0.0
      %1663 = vmatprep.subr.mxu0 0.0
      %1664 = vmatpush1.xpose.msra.mxu0 0.0
      %1665 = vmatprep.mubr.f32.mxu0 0.0
      %1666 = vmatmul.mubr.f32.gmra.mrb[0].mxu0 %v1150
      %v1667 = vpop.f32.mrb[0].mxu0
      %v1668 = vadd.f32 0.0, %v1667
      %v1669 = vpop.f32.mrb[0].mxu0
      %1670 = vmatprep.mubr.f32.mxu0 0.0
      %1671 = vmatmul.mubr.f32.gmra.mrb[0].mxu0 %v1153
      %v1672 = vpop.f32.mrb[0].mxu0
      %v1673 = vadd.f32 0.0, %v1672
      %v1674 = vpop.f32.mrb[0].mxu0
      %1675 = vmatprep.mubr.f32.mxu0 0.0
      %1676 = vmatmul.mubr.f32.gmra.mrb[0].mxu0 %v1156
      %v1677 = vpop.f32.mrb[0].mxu0
      %v1678 = vadd.f32 0.0, %v1677
      %v1679 = vpop.f32.mrb[0].mxu0
      %1680 = vmatprep.mubr.f32.mxu0 0.0
      %1681 = vmatmul.mubr.f32.gmra.mrb[0].mxu0 %v1159
      %v1682 = vpop.f32.mrb[0].mxu0
      %v1683 = vadd.f32 0.0, %v1682
      %v1684 = vpop.f32.mrb[0].mxu0
      %1685 = vdwg.mxu0
      %v1686 = vmul.f32 %v1668, %v894
      %v1687 = vmul.f32 %v1673, %v895
      %v1688 = vmul.f32 %v1678, %v896
      %v1689 = vmul.f32 %v1683, %v897
      %v1690 = vmul.f32 %v876, %v1583
      %v1691 = vmul.f32 %v881, %v1583
      %v1692 = vmul.f32 %v886, %v1583
      %v1693 = vmul.f32 %v891, %v1583
      %v1695 = vsel %vm1012, %v1686, 0
      %v1698 = vsel %vm1012, %v1687, 0
      %v1701 = vsel %vm1012, %v1688, 0
      %v1704 = vsel %vm1012, %v1689, 0
      %1706 = vmatprep.subr.mxu0 0.0
      %1707 = vmatpush1.msra.mxu0 %v1690
      %1708 = vmatprep.subr.mxu0 0.0
      %1709 = vmatpush1.msra.mxu0 %v1691
      %1710 = vmatprep.subr.mxu0 0.0
      %1711 = vmatpush1.msra.mxu0 %v1692
      %1712 = vmatprep.subr.mxu0 0.0
      %1713 = vmatpush1.msra.mxu0 %v1693
      %1714 = vmatprep.subr.mxu0 0.0
      %1715 = vmatpush1.msra.mxu0 0.0
      %1716 = vmatprep.subr.mxu0 0.0
      %1717 = vmatpush1.msra.mxu0 0.0
      %1718 = vmatprep.subr.mxu0 0.0
      %1719 = vmatpush1.msra.mxu0 0.0
      %1720 = vmatprep.subr.mxu0 0.0
      %1721 = vmatpush1.msra.mxu0 0.0
      %1722 = vmatprep.subr.mxu0 0.0
      %1723 = vmatpush1.msra.mxu0 0.0
      %1724 = vmatprep.subr.mxu0 0.0
      %1725 = vmatpush1.msra.mxu0 0.0
      %1726 = vmatprep.subr.mxu0 0.0
      %1727 = vmatpush1.msra.mxu0 0.0
      %1728 = vmatprep.subr.mxu0 0.0
      %1729 = vmatpush1.msra.mxu0 0.0
      %1730 = vmatprep.subr.mxu0 0.0
      %1731 = vmatpush1.msra.mxu0 0.0
      %1732 = vmatprep.subr.mxu0 0.0
      %1733 = vmatpush1.msra.mxu0 0.0
      %1734 = vmatprep.subr.mxu0 0.0
      %1735 = vmatpush1.msra.mxu0 0.0
      %1736 = vmatprep.subr.mxu0 0.0
      %1737 = vmatpush1.msra.mxu0 0.0
      %1738 = vmatprep.subr.mxu0 0.0
      %1739 = vmatpush1.msra.mxu0 0.0
      %1740 = vmatprep.subr.mxu0 0.0
      %1741 = vmatpush1.msra.mxu0 0.0
      %1742 = vmatprep.subr.mxu0 0.0
      %1743 = vmatpush1.msra.mxu0 0.0
      %1744 = vmatprep.subr.mxu0 0.0
      %1745 = vmatpush1.msra.mxu0 0.0
      %1746 = vmatprep.subr.mxu0 0.0
      %1747 = vmatpush1.msra.mxu0 0.0
      %1748 = vmatprep.subr.mxu0 0.0
      %1749 = vmatpush1.msra.mxu0 0.0
      %1750 = vmatprep.subr.mxu0 0.0
      %1751 = vmatpush1.msra.mxu0 0.0
      %1752 = vmatprep.subr.mxu0 0.0
      %1753 = vmatpush1.msra.mxu0 0.0
      %1754 = vmatprep.subr.mxu0 0.0
      %1755 = vmatpush1.msra.mxu0 0.0
      %1756 = vmatprep.subr.mxu0 0.0
      %1757 = vmatpush1.msra.mxu0 0.0
      %1758 = vmatprep.subr.mxu0 0.0
      %1759 = vmatpush1.msra.mxu0 0.0
      %1760 = vmatprep.subr.mxu0 0.0
      %1761 = vmatpush1.msra.mxu0 0.0
      %1762 = vmatprep.subr.mxu0 0.0
      %1763 = vmatpush1.msra.mxu0 0.0
      %1764 = vmatprep.subr.mxu0 0.0
      %1765 = vmatpush1.msra.mxu0 0.0
      %1766 = vmatprep.subr.mxu0 0.0
      %1767 = vmatpush1.msra.mxu0 0.0
      %1768 = vmatprep.subr.mxu0 0.0
      %1769 = vmatpush1.msra.mxu0 0.0
      %1770 = vmatprep.mubr.f32.mxu0 0.0
      %1771 = vmatmul.mubr.f32.gmra.mrb[0].mxu0 %v1695
      %v1772 = vpop.f32.mrb[0].mxu0
      %v1773 = vadd.f32 0.0, %v1772
      %v1774 = vpop.f32.mrb[0].mxu0
      %1775 = vmatprep.mubr.f32.mxu0 0.0
      %1776 = vmatmul.mubr.f32.gmra.mrb[0].mxu0 %v1698
      %v1777 = vpop.f32.mrb[0].mxu0
      %v1778 = vadd.f32 0.0, %v1777
      %v1779 = vpop.f32.mrb[0].mxu0
      %1780 = vmatprep.mubr.f32.mxu0 0.0
      %1781 = vmatmul.mubr.f32.gmra.mrb[0].mxu0 %v1701
      %v1782 = vpop.f32.mrb[0].mxu0
      %v1783 = vadd.f32 0.0, %v1782
      %v1784 = vpop.f32.mrb[0].mxu0
      %1785 = vmatprep.mubr.f32.mxu0 0.0
      %1786 = vmatmul.mubr.f32.gmra.mrb[0].mxu0 %v1704
      %v1787 = vpop.f32.mrb[0].mxu0
      %v1788 = vadd.f32 0.0, %v1787
      %v1789 = vpop.f32.mrb[0].mxu0
      %1790 = vdwg.mxu0
      %v1791 = vadd.f32 %v1559, %v1773
      %v1792 = vadd.f32 %v1564, %v1778
      %v1793 = vadd.f32 %v1569, %v1783
      %v1794 = vadd.f32 %v1574, %v1788
      %s1795 = scalar_lea.vmem %s4, 3
      %v1796 = vld [vmem:[%s1795] sm:$0x1]
      %v1798 = vlaneseq
      %v1799 = vshrl.u32 %v1798, 7
      %v1800 = vsub.s32 0, %v1799
      %v1801 = vrot.slane %v1796, %v1800
      %v1803 = vmul.f32 %v856, %v1801
      %v1804 = vmul.f32 %v861, %v1801
      %v1805 = vmul.f32 %v866, %v1801
      %v1806 = vmul.f32 %v871, %v1801
      %v1808 = vsel %vm898, %v1803, 0
      %v1811 = vsel %vm898, %v1804, 0
      %v1814 = vsel %vm898, %v1805, 0
      %v1817 = vsel %vm898, %v1806, 0
      %1819 = vmatprep.subr.mxu0 0.0
      %1820 = vmatpush1.xpose.msra.mxu0 %v1808
      %1821 = vmatprep.subr.mxu0 0.0
      %1822 = vmatpush1.xpose.msra.mxu0 %v1811
      %1823 = vmatprep.subr.mxu0 0.0
      %1824 = vmatpush1.xpose.msra.mxu0 %v1814
      %1825 = vmatprep.subr.mxu0 0.0
      %1826 = vmatpush1.xpose.msra.mxu0 %v1817
      %1827 = vmatprep.subr.mxu0 0.0
      %1828 = vmatpush1.xpose.msra.mxu0 0.0
      %1829 = vmatprep.subr.mxu0 0.0
      %1830 = vmatpush1.xpose.msra.mxu0 0.0
      %1831 = vmatprep.subr.mxu0 0.0
      %1832 = vmatpush1.xpose.msra.mxu0 0.0
      %1833 = vmatprep.subr.mxu0 0.0
      %1834 = vmatpush1.xpose.msra.mxu0 0.0
      %1835 = vmatprep.subr.mxu0 0.0
      %1836 = vmatpush1.xpose.msra.mxu0 0.0
      %1837 = vmatprep.subr.mxu0 0.0
      %1838 = vmatpush1.xpose.msra.mxu0 0.0
      %1839 = vmatprep.subr.mxu0 0.0
      %1840 = vmatpush1.xpose.msra.mxu0 0.0
      %1841 = vmatprep.subr.mxu0 0.0
      %1842 = vmatpush1.xpose.msra.mxu0 0.0
      %1843 = vmatprep.subr.mxu0 0.0
      %1844 = vmatpush1.xpose.msra.mxu0 0.0
      %1845 = vmatprep.subr.mxu0 0.0
      %1846 = vmatpush1.xpose.msra.mxu0 0.0
      %1847 = vmatprep.subr.mxu0 0.0
      %1848 = vmatpush1.xpose.msra.mxu0 0.0
      %1849 = vmatprep.subr.mxu0 0.0
      %1850 = vmatpush1.xpose.msra.mxu0 0.0
      %1851 = vmatprep.subr.mxu0 0.0
      %1852 = vmatpush1.xpose.msra.mxu0 0.0
      %1853 = vmatprep.subr.mxu0 0.0
      %1854 = vmatpush1.xpose.msra.mxu0 0.0
      %1855 = vmatprep.subr.mxu0 0.0
      %1856 = vmatpush1.xpose.msra.mxu0 0.0
      %1857 = vmatprep.subr.mxu0 0.0
      %1858 = vmatpush1.xpose.msra.mxu0 0.0
      %1859 = vmatprep.subr.mxu0 0.0
      %1860 = vmatpush1.xpose.msra.mxu0 0.0
      %1861 = vmatprep.subr.mxu0 0.0
      %1862 = vmatpush1.xpose.msra.mxu0 0.0
      %1863 = vmatprep.subr.mxu0 0.0
      %1864 = vmatpush1.xpose.msra.mxu0 0.0
      %1865 = vmatprep.subr.mxu0 0.0
      %1866 = vmatpush1.xpose.msra.mxu0 0.0
      %1867 = vmatprep.subr.mxu0 0.0
      %1868 = vmatpush1.xpose.msra.mxu0 0.0
      %1869 = vmatprep.subr.mxu0 0.0
      %1870 = vmatpush1.xpose.msra.mxu0 0.0
      %1871 = vmatprep.subr.mxu0 0.0
      %1872 = vmatpush1.xpose.msra.mxu0 0.0
      %1873 = vmatprep.subr.mxu0 0.0
      %1874 = vmatpush1.xpose.msra.mxu0 0.0
      %1875 = vmatprep.subr.mxu0 0.0
      %1876 = vmatpush1.xpose.msra.mxu0 0.0
      %1877 = vmatprep.subr.mxu0 0.0
      %1878 = vmatpush1.xpose.msra.mxu0 0.0
      %1879 = vmatprep.subr.mxu0 0.0
      %1880 = vmatpush1.xpose.msra.mxu0 0.0
      %1881 = vmatprep.subr.mxu0 0.0
      %1882 = vmatpush1.xpose.msra.mxu0 0.0
      %1883 = vmatprep.mubr.f32.mxu0 0.0
      %1884 = vmatmul.mubr.f32.gmra.mrb[0].mxu0 %v1150
      %v1885 = vpop.f32.mrb[0].mxu0
      %v1886 = vadd.f32 0.0, %v1885
      %v1887 = vpop.f32.mrb[0].mxu0
      %1888 = vmatprep.mubr.f32.mxu0 0.0
      %1889 = vmatmul.mubr.f32.gmra.mrb[0].mxu0 %v1153
      %v1890 = vpop.f32.mrb[0].mxu0
      %v1891 = vadd.f32 0.0, %v1890
      %v1892 = vpop.f32.mrb[0].mxu0
      %1893 = vmatprep.mubr.f32.mxu0 0.0
      %1894 = vmatmul.mubr.f32.gmra.mrb[0].mxu0 %v1156
      %v1895 = vpop.f32.mrb[0].mxu0
      %v1896 = vadd.f32 0.0, %v1895
      %v1897 = vpop.f32.mrb[0].mxu0
      %1898 = vmatprep.mubr.f32.mxu0 0.0
      %1899 = vmatmul.mubr.f32.gmra.mrb[0].mxu0 %v1159
      %v1900 = vpop.f32.mrb[0].mxu0
      %v1901 = vadd.f32 0.0, %v1900
      %v1902 = vpop.f32.mrb[0].mxu0
      %1903 = vdwg.mxu0
      %v1904 = vmul.f32 %v1886, %v894
      %v1905 = vmul.f32 %v1891, %v895
      %v1906 = vmul.f32 %v1896, %v896
      %v1907 = vmul.f32 %v1901, %v897
      %v1908 = vmul.f32 %v876, %v1801
      %v1909 = vmul.f32 %v881, %v1801
      %v1910 = vmul.f32 %v886, %v1801
      %v1911 = vmul.f32 %v891, %v1801
      %v1913 = vsel %vm1012, %v1904, 0
      %v1916 = vsel %vm1012, %v1905, 0
      %v1919 = vsel %vm1012, %v1906, 0
      %v1922 = vsel %vm1012, %v1907, 0
      %1924 = vmatprep.subr.mxu0 0.0
      %1925 = vmatpush1.msra.mxu0 %v1908
      %1926 = vmatprep.subr.mxu0 0.0
      %1927 = vmatpush1.msra.mxu0 %v1909
      %1928 = vmatprep.subr.mxu0 0.0
      %1929 = vmatpush1.msra.mxu0 %v1910
      %1930 = vmatprep.subr.mxu0 0.0
      %1931 = vmatpush1.msra.mxu0 %v1911
      %1932 = vmatprep.subr.mxu0 0.0
      %1933 = vmatpush1.msra.mxu0 0.0
      %1934 = vmatprep.subr.mxu0 0.0
      %1935 = vmatpush1.msra.mxu0 0.0
      %1936 = vmatprep.subr.mxu0 0.0
      %1937 = vmatpush1.msra.mxu0 0.0
      %1938 = vmatprep.subr.mxu0 0.0
      %1939 = vmatpush1.msra.mxu0 0.0
      %1940 = vmatprep.subr.mxu0 0.0
      %1941 = vmatpush1.msra.mxu0 0.0
      %1942 = vmatprep.subr.mxu0 0.0
      %1943 = vmatpush1.msra.mxu0 0.0
      %1944 = vmatprep.subr.mxu0 0.0
      %1945 = vmatpush1.msra.mxu0 0.0
      %1946 = vmatprep.subr.mxu0 0.0
      %1947 = vmatpush1.msra.mxu0 0.0
      %1948 = vmatprep.subr.mxu0 0.0
      %1949 = vmatpush1.msra.mxu0 0.0
      %1950 = vmatprep.subr.mxu0 0.0
      %1951 = vmatpush1.msra.mxu0 0.0
      %1952 = vmatprep.subr.mxu0 0.0
      %1953 = vmatpush1.msra.mxu0 0.0
      %1954 = vmatprep.subr.mxu0 0.0
      %1955 = vmatpush1.msra.mxu0 0.0
      %1956 = vmatprep.subr.mxu0 0.0
      %1957 = vmatpush1.msra.mxu0 0.0
      %1958 = vmatprep.subr.mxu0 0.0
      %1959 = vmatpush1.msra.mxu0 0.0
      %1960 = vmatprep.subr.mxu0 0.0
      %1961 = vmatpush1.msra.mxu0 0.0
      %1962 = vmatprep.subr.mxu0 0.0
      %1963 = vmatpush1.msra.mxu0 0.0
      %1964 = vmatprep.subr.mxu0 0.0
      %1965 = vmatpush1.msra.mxu0 0.0
      %1966 = vmatprep.subr.mxu0 0.0
      %1967 = vmatpush1.msra.mxu0 0.0
      %1968 = vmatprep.subr.mxu0 0.0
      %1969 = vmatpush1.msra.mxu0 0.0
      %1970 = vmatprep.subr.mxu0 0.0
      %1971 = vmatpush1.msra.mxu0 0.0
      %1972 = vmatprep.subr.mxu0 0.0
      %1973 = vmatpush1.msra.mxu0 0.0
      %1974 = vmatprep.subr.mxu0 0.0
      %1975 = vmatpush1.msra.mxu0 0.0
      %1976 = vmatprep.subr.mxu0 0.0
      %1977 = vmatpush1.msra.mxu0 0.0
      %1978 = vmatprep.subr.mxu0 0.0
      %1979 = vmatpush1.msra.mxu0 0.0
      %1980 = vmatprep.subr.mxu0 0.0
      %1981 = vmatpush1.msra.mxu0 0.0
      %1982 = vmatprep.subr.mxu0 0.0
      %1983 = vmatpush1.msra.mxu0 0.0
      %1984 = vmatprep.subr.mxu0 0.0
      %1985 = vmatpush1.msra.mxu0 0.0
      %1986 = vmatprep.subr.mxu0 0.0
      %1987 = vmatpush1.msra.mxu0 0.0
      %1988 = vmatprep.mubr.f32.mxu0 0.0
      %1989 = vmatmul.mubr.f32.gmra.mrb[0].mxu0 %v1913
      %v1990 = vpop.f32.mrb[0].mxu0
      %v1991 = vadd.f32 0.0, %v1990
      %v1992 = vpop.f32.mrb[0].mxu0
      %1993 = vmatprep.mubr.f32.mxu0 0.0
      %1994 = vmatmul.mubr.f32.gmra.mrb[0].mxu0 %v1916
      %v1995 = vpop.f32.mrb[0].mxu0
      %v1996 = vadd.f32 0.0, %v1995
      %v1997 = vpop.f32.mrb[0].mxu0
      %1998 = vmatprep.mubr.f32.mxu0 0.0
      %1999 = vmatmul.mubr.f32.gmra.mrb[0].mxu0 %v1919
      %v2000 = vpop.f32.mrb[0].mxu0
      %v2001 = vadd.f32 0.0, %v2000
      %v2002 = vpop.f32.mrb[0].mxu0
      %2003 = vmatprep.mubr.f32.mxu0 0.0
      %2004 = vmatmul.mubr.f32.gmra.mrb[0].mxu0 %v1922
      %v2005 = vpop.f32.mrb[0].mxu0
      %v2006 = vadd.f32 0.0, %v2005
      %v2007 = vpop.f32.mrb[0].mxu0
      %2008 = vdwg.mxu0
      %v2009 = vadd.f32 %v1791, %v1991
      %v2010 = vadd.f32 %v1792, %v1996
      %v2011 = vadd.f32 %v1793, %v2001
      %v2012 = vadd.f32 %v1794, %v2006
      %s2013 = scalar_lea.vmem %s4, 4
      %v2014 = vld [vmem:[%s2013] sm:$0x1]
      %v2016 = vlaneseq
      %v2017 = vshrl.u32 %v2016, 7
      %v2018 = vsub.s32 0, %v2017
      %v2019 = vrot.slane %v2014, %v2018
      %v2021 = vmul.f32 %v856, %v2019
      %v2022 = vmul.f32 %v861, %v2019
      %v2023 = vmul.f32 %v866, %v2019
      %v2024 = vmul.f32 %v871, %v2019
      %v2026 = vsel %vm898, %v2021, 0
      %v2029 = vsel %vm898, %v2022, 0
      %v2032 = vsel %vm898, %v2023, 0
      %v2035 = vsel %vm898, %v2024, 0
      %2037 = vmatprep.subr.mxu0 0.0
      %2038 = vmatpush1.xpose.msra.mxu0 %v2026
      %2039 = vmatprep.subr.mxu0 0.0
      %2040 = vmatpush1.xpose.msra.mxu0 %v2029
      %2041 = vmatprep.subr.mxu0 0.0
      %2042 = vmatpush1.xpose.msra.mxu0 %v2032
      %2043 = vmatprep.subr.mxu0 0.0
      %2044 = vmatpush1.xpose.msra.mxu0 %v2035
      %2045 = vmatprep.subr.mxu0 0.0
      %2046 = vmatpush1.xpose.msra.mxu0 0.0
      %2047 = vmatprep.subr.mxu0 0.0
      %2048 = vmatpush1.xpose.msra.mxu0 0.0
      %2049 = vmatprep.subr.mxu0 0.0
      %2050 = vmatpush1.xpose.msra.mxu0 0.0
      %2051 = vmatprep.subr.mxu0 0.0
      %2052 = vmatpush1.xpose.msra.mxu0 0.0
      %2053 = vmatprep.subr.mxu0 0.0
      %2054 = vmatpush1.xpose.msra.mxu0 0.0
      %2055 = vmatprep.subr.mxu0 0.0
      %2056 = vmatpush1.xpose.msra.mxu0 0.0
      %2057 = vmatprep.subr.mxu0 0.0
      %2058 = vmatpush1.xpose.msra.mxu0 0.0
      %2059 = vmatprep.subr.mxu0 0.0
      %2060 = vmatpush1.xpose.msra.mxu0 0.0
      %2061 = vmatprep.subr.mxu0 0.0
      %2062 = vmatpush1.xpose.msra.mxu0 0.0
      %2063 = vmatprep.subr.mxu0 0.0
      %2064 = vmatpush1.xpose.msra.mxu0 0.0
      %2065 = vmatprep.subr.mxu0 0.0
      %2066 = vmatpush1.xpose.msra.mxu0 0.0
      %2067 = vmatprep.subr.mxu0 0.0
      %2068 = vmatpush1.xpose.msra.mxu0 0.0
      %2069 = vmatprep.subr.mxu0 0.0
      %2070 = vmatpush1.xpose.msra.mxu0 0.0
      %2071 = vmatprep.subr.mxu0 0.0
      %2072 = vmatpush1.xpose.msra.mxu0 0.0
      %2073 = vmatprep.subr.mxu0 0.0
      %2074 = vmatpush1.xpose.msra.mxu0 0.0
      %2075 = vmatprep.subr.mxu0 0.0
      %2076 = vmatpush1.xpose.msra.mxu0 0.0
      %2077 = vmatprep.subr.mxu0 0.0
      %2078 = vmatpush1.xpose.msra.mxu0 0.0
      %2079 = vmatprep.subr.mxu0 0.0
      %2080 = vmatpush1.xpose.msra.mxu0 0.0
      %2081 = vmatprep.subr.mxu0 0.0
      %2082 = vmatpush1.xpose.msra.mxu0 0.0
      %2083 = vmatprep.subr.mxu0 0.0
      %2084 = vmatpush1.xpose.msra.mxu0 0.0
      %2085 = vmatprep.subr.mxu0 0.0
      %2086 = vmatpush1.xpose.msra.mxu0 0.0
      %2087 = vmatprep.subr.mxu0 0.0
      %2088 = vmatpush1.xpose.msra.mxu0 0.0
      %2089 = vmatprep.subr.mxu0 0.0
      %2090 = vmatpush1.xpose.msra.mxu0 0.0
      %2091 = vmatprep.subr.mxu0 0.0
      %2092 = vmatpush1.xpose.msra.mxu0 0.0
      %2093 = vmatprep.subr.mxu0 0.0
      %2094 = vmatpush1.xpose.msra.mxu0 0.0
      %2095 = vmatprep.subr.mxu0 0.0
      %2096 = vmatpush1.xpose.msra.mxu0 0.0
      %2097 = vmatprep.subr.mxu0 0.0
      %2098 = vmatpush1.xpose.msra.mxu0 0.0
      %2099 = vmatprep.subr.mxu0 0.0
      %2100 = vmatpush1.xpose.msra.mxu0 0.0
      %2101 = vmatprep.mubr.f32.mxu0 0.0
      %2102 = vmatmul.mubr.f32.gmra.mrb[0].mxu0 %v1150
      %v2103 = vpop.f32.mrb[0].mxu0
      %v2104 = vadd.f32 0.0, %v2103
      %v2105 = vpop.f32.mrb[0].mxu0
      %2106 = vmatprep.mubr.f32.mxu0 0.0
      %2107 = vmatmul.mubr.f32.gmra.mrb[0].mxu0 %v1153
      %v2108 = vpop.f32.mrb[0].mxu0
      %v2109 = vadd.f32 0.0, %v2108
      %v2110 = vpop.f32.mrb[0].mxu0
      %2111 = vmatprep.mubr.f32.mxu0 0.0
      %2112 = vmatmul.mubr.f32.gmra.mrb[0].mxu0 %v1156
      %v2113 = vpop.f32.mrb[0].mxu0
      %v2114 = vadd.f32 0.0, %v2113
      %v2115 = vpop.f32.mrb[0].mxu0
      %2116 = vmatprep.mubr.f32.mxu0 0.0
      %2117 = vmatmul.mubr.f32.gmra.mrb[0].mxu0 %v1159
      %v2118 = vpop.f32.mrb[0].mxu0
      %v2119 = vadd.f32 0.0, %v2118
      %v2120 = vpop.f32.mrb[0].mxu0
      %2121 = vdwg.mxu0
      %v2122 = vmul.f32 %v2104, %v894
      %v2123 = vmul.f32 %v2109, %v895
      %v2124 = vmul.f32 %v2114, %v896
      %v2125 = vmul.f32 %v2119, %v897
      %v2126 = vmul.f32 %v876, %v2019
      %v2127 = vmul.f32 %v881, %v2019
      %v2128 = vmul.f32 %v886, %v2019
      %v2129 = vmul.f32 %v891, %v2019
      %v2131 = vsel %vm1012, %v2122, 0
      %v2134 = vsel %vm1012, %v2123, 0
      %v2137 = vsel %vm1012, %v2124, 0
      %v2140 = vsel %vm1012, %v2125, 0
      %2142 = vmatprep.subr.mxu0 0.0
      %2143 = vmatpush1.msra.mxu0 %v2126
      %2144 = vmatprep.subr.mxu0 0.0
      %2145 = vmatpush1.msra.mxu0 %v2127
      %2146 = vmatprep.subr.mxu0 0.0
      %2147 = vmatpush1.msra.mxu0 %v2128
      %2148 = vmatprep.subr.mxu0 0.0
      %2149 = vmatpush1.msra.mxu0 %v2129
      %2150 = vmatprep.subr.mxu0 0.0
      %2151 = vmatpush1.msra.mxu0 0.0
      %2152 = vmatprep.subr.mxu0 0.0
      %2153 = vmatpush1.msra.mxu0 0.0
      %2154 = vmatprep.subr.mxu0 0.0
      %2155 = vmatpush1.msra.mxu0 0.0
      %2156 = vmatprep.subr.mxu0 0.0
      %2157 = vmatpush1.msra.mxu0 0.0
      %2158 = vmatprep.subr.mxu0 0.0
      %2159 = vmatpush1.msra.mxu0 0.0
      %2160 = vmatprep.subr.mxu0 0.0
      %2161 = vmatpush1.msra.mxu0 0.0
      %2162 = vmatprep.subr.mxu0 0.0
      %2163 = vmatpush1.msra.mxu0 0.0
      %2164 = vmatprep.subr.mxu0 0.0
      %2165 = vmatpush1.msra.mxu0 0.0
      %2166 = vmatprep.subr.mxu0 0.0
      %2167 = vmatpush1.msra.mxu0 0.0
      %2168 = vmatprep.subr.mxu0 0.0
      %2169 = vmatpush1.msra.mxu0 0.0
      %2170 = vmatprep.subr.mxu0 0.0
      %2171 = vmatpush1.msra.mxu0 0.0
      %2172 = vmatprep.subr.mxu0 0.0
      %2173 = vmatpush1.msra.mxu0 0.0
      %2174 = vmatprep.subr.mxu0 0.0
      %2175 = vmatpush1.msra.mxu0 0.0
      %2176 = vmatprep.subr.mxu0 0.0
      %2177 = vmatpush1.msra.mxu0 0.0
      %2178 = vmatprep.subr.mxu0 0.0
      %2179 = vmatpush1.msra.mxu0 0.0
      %2180 = vmatprep.subr.mxu0 0.0
      %2181 = vmatpush1.msra.mxu0 0.0
      %2182 = vmatprep.subr.mxu0 0.0
      %2183 = vmatpush1.msra.mxu0 0.0
      %2184 = vmatprep.subr.mxu0 0.0
      %2185 = vmatpush1.msra.mxu0 0.0
      %2186 = vmatprep.subr.mxu0 0.0
      %2187 = vmatpush1.msra.mxu0 0.0
      %2188 = vmatprep.subr.mxu0 0.0
      %2189 = vmatpush1.msra.mxu0 0.0
      %2190 = vmatprep.subr.mxu0 0.0
      %2191 = vmatpush1.msra.mxu0 0.0
      %2192 = vmatprep.subr.mxu0 0.0
      %2193 = vmatpush1.msra.mxu0 0.0
      %2194 = vmatprep.subr.mxu0 0.0
      %2195 = vmatpush1.msra.mxu0 0.0
      %2196 = vmatprep.subr.mxu0 0.0
      %2197 = vmatpush1.msra.mxu0 0.0
      %2198 = vmatprep.subr.mxu0 0.0
      %2199 = vmatpush1.msra.mxu0 0.0
      %2200 = vmatprep.subr.mxu0 0.0
      %2201 = vmatpush1.msra.mxu0 0.0
      %2202 = vmatprep.subr.mxu0 0.0
      %2203 = vmatpush1.msra.mxu0 0.0
      %2204 = vmatprep.subr.mxu0 0.0
      %2205 = vmatpush1.msra.mxu0 0.0
      %2206 = vmatprep.mubr.f32.mxu0 0.0
      %2207 = vmatmul.mubr.f32.gmra.mrb[0].mxu0 %v2131
      %v2208 = vpop.f32.mrb[0].mxu0
      %v2209 = vadd.f32 0.0, %v2208
      %v2210 = vpop.f32.mrb[0].mxu0
      %2211 = vmatprep.mubr.f32.mxu0 0.0
      %2212 = vmatmul.mubr.f32.gmra.mrb[0].mxu0 %v2134
      %v2213 = vpop.f32.mrb[0].mxu0
      %v2214 = vadd.f32 0.0, %v2213
      %v2215 = vpop.f32.mrb[0].mxu0
      %2216 = vmatprep.mubr.f32.mxu0 0.0
      %2217 = vmatmul.mubr.f32.gmra.mrb[0].mxu0 %v2137
      %v2218 = vpop.f32.mrb[0].mxu0
      %v2219 = vadd.f32 0.0, %v2218
      %v2220 = vpop.f32.mrb[0].mxu0
      %2221 = vmatprep.mubr.f32.mxu0 0.0
      %2222 = vmatmul.mubr.f32.gmra.mrb[0].mxu0 %v2140
      %v2223 = vpop.f32.mrb[0].mxu0
      %v2224 = vadd.f32 0.0, %v2223
      %v2225 = vpop.f32.mrb[0].mxu0
      %2226 = vdwg.mxu0
      %v2227 = vadd.f32 %v2009, %v2209
      %v2228 = vadd.f32 %v2010, %v2214
      %v2229 = vadd.f32 %v2011, %v2219
      %v2230 = vadd.f32 %v2012, %v2224
      %v2231 = vxor.u32 %v2227, 2147483648
      %v2232 = vxor.u32 %v2228, 2147483648
      %v2233 = vxor.u32 %v2229, 2147483648
      %v2234 = vxor.u32 %v2230, 2147483648
      %v2235 = vmul.f32 %v2231, 1.442695
      %v2236 = vpow.pop %v2235
      %v2237 = vmul.f32 %v2232, 1.442695
      %v2238 = vpow.pop %v2237
      %v2239 = vmul.f32 %v2233, 1.442695
      %v2240 = vpow.pop %v2239
      %v2241 = vmul.f32 %v2234, 1.442695
      %v2242 = vpow.pop %v2241
      %v2243 = vadd.f32 %v2236, 1.0
      %v2244 = vadd.f32 %v2238, 1.0
      %v2245 = vadd.f32 %v2240, 1.0
      %v2246 = vadd.f32 %v2242, 1.0
      %v2247 = vrcp.pop %v2243
      %v2248 = vmul.f32 1.0, %v2247
      %v2249 = vrcp.pop %v2244
      %v2250 = vmul.f32 1.0, %v2249
      %v2251 = vrcp.pop %v2245
      %v2252 = vmul.f32 1.0, %v2251
      %v2253 = vrcp.pop %v2246
      %v2254 = vmul.f32 1.0, %v2253
      %v2255 = vadd.f32 %v2248, %v756
      %v2256 = vadd.f32 %v2250, %v761
      %v2257 = vadd.f32 %v2252, %v766
      %v2258 = vadd.f32 %v2254, %v771
      %v2259 = vld [vmem:[%s5] sm:$0xff]
      %v2260 = vld [vmem:[%s5 + $0x8] sm:$0xff]
      %v2261 = vld [vmem:[%s5 + $0x10] sm:$0xf]
      %s2262 = scalar_lea.vmem %s5, 96
      %v2263 = vld [vmem:[%s2262] sm:$0xff]
      %v2264 = vld [vmem:[%s2262 + $0x8] sm:$0xff]
      %v2265 = vld [vmem:[%s2262 + $0x10] sm:$0xf]
      %v2267 = vsel %vm898, %v2255, 0
      %vm2269 = vcmask 1043456
      %v2271 = vsel %vm2269, %v2265, 0
      %2273 = vmatprep.subr.mxu0 0.0
      %2274 = vmatpush1.msra.mxu0 %v2263
      %2275 = vmatprep.subr.mxu0 0.0
      %2276 = vmatpush1.msra.mxu0 %v2264
      %2277 = vmatprep.subr.mxu0 0.0
      %2278 = vmatpush1.msra.mxu0 %v2271
      %2279 = vmatprep.subr.mxu0 0.0
      %2280 = vmatpush1.msra.mxu0 0.0
      %2281 = vmatprep.subr.mxu0 0.0
      %2282 = vmatpush1.msra.mxu0 0.0
      %2283 = vmatprep.subr.mxu0 0.0
      %2284 = vmatpush1.msra.mxu0 0.0
      %2285 = vmatprep.subr.mxu0 0.0
      %2286 = vmatpush1.msra.mxu0 0.0
      %2287 = vmatprep.subr.mxu0 0.0
      %2288 = vmatpush1.msra.mxu0 0.0
      %2289 = vmatprep.subr.mxu0 0.0
      %2290 = vmatpush1.msra.mxu0 0.0
      %2291 = vmatprep.subr.mxu0 0.0
      %2292 = vmatpush1.msra.mxu0 0.0
      %2293 = vmatprep.subr.mxu0 0.0
      %2294 = vmatpush1.msra.mxu0 0.0
      %2295 = vmatprep.subr.mxu0 0.0
      %2296 = vmatpush1.msra.mxu0 0.0
      %2297 = vmatprep.subr.mxu0 0.0
      %2298 = vmatpush1.msra.mxu0 0.0
      %2299 = vmatprep.subr.mxu0 0.0
      %2300 = vmatpush1.msra.mxu0 0.0
      %2301 = vmatprep.subr.mxu0 0.0
      %2302 = vmatpush1.msra.mxu0 0.0
      %2303 = vmatprep.subr.mxu0 0.0
      %2304 = vmatpush1.msra.mxu0 0.0
      %2305 = vmatprep.subr.mxu0 0.0
      %2306 = vmatpush1.msra.mxu0 0.0
      %2307 = vmatprep.subr.mxu0 0.0
      %2308 = vmatpush1.msra.mxu0 0.0
      %2309 = vmatprep.subr.mxu0 0.0
      %2310 = vmatpush1.msra.mxu0 0.0
      %2311 = vmatprep.subr.mxu0 0.0
      %2312 = vmatpush1.msra.mxu0 0.0
      %2313 = vmatprep.subr.mxu0 0.0
      %2314 = vmatpush1.msra.mxu0 0.0
      %2315 = vmatprep.subr.mxu0 0.0
      %2316 = vmatpush1.msra.mxu0 0.0
      %2317 = vmatprep.subr.mxu0 0.0
      %2318 = vmatpush1.msra.mxu0 0.0
      %2319 = vmatprep.subr.mxu0 0.0
      %2320 = vmatpush1.msra.mxu0 0.0
      %2321 = vmatprep.subr.mxu0 0.0
      %2322 = vmatpush1.msra.mxu0 0.0
      %2323 = vmatprep.subr.mxu0 0.0
      %2324 = vmatpush1.msra.mxu0 0.0
      %2325 = vmatprep.subr.mxu0 0.0
      %2326 = vmatpush1.msra.mxu0 0.0
      %2327 = vmatprep.subr.mxu0 0.0
      %2328 = vmatpush1.msra.mxu0 0.0
      %2329 = vmatprep.subr.mxu0 0.0
      %2330 = vmatpush1.msra.mxu0 0.0
      %2331 = vmatprep.subr.mxu0 0.0
      %2332 = vmatpush1.msra.mxu0 0.0
      %2333 = vmatprep.subr.mxu0 0.0
      %2334 = vmatpush1.msra.mxu0 0.0
      %2335 = vmatprep.subr.mxu0 0.0
      %2336 = vmatpush1.msra.mxu0 0.0
      %2337 = vmatprep.mubr.f32.mxu0 0.0
      %2338 = vmatmul.mubr.f32.gmra.mrb[0].mxu0 %v2267
      %v2339 = vpop.f32.mrb[0].mxu0
      %v2340 = vadd.f32 0.0, %v2339
      %v2341 = vpop.f32.mrb[0].mxu0
      %2342 = vdwg.mxu0
      %v2344 = vsel %vm898, %v1134, 0
      %v2347 = vsel %vm2269, %v2261, 0
      %2349 = vmatprep.subr.mxu0 0.0
      %2350 = vmatpush1.msra.mxu0 %v2259
      %2351 = vmatprep.subr.mxu0 0.0
      %2352 = vmatpush1.msra.mxu0 %v2260
      %2353 = vmatprep.subr.mxu0 0.0
      %2354 = vmatpush1.msra.mxu0 %v2347
      %2355 = vmatprep.subr.mxu0 0.0
      %2356 = vmatpush1.msra.mxu0 0.0
      %2357 = vmatprep.subr.mxu0 0.0
      %2358 = vmatpush1.msra.mxu0 0.0
      %2359 = vmatprep.subr.mxu0 0.0
      %2360 = vmatpush1.msra.mxu0 0.0
      %2361 = vmatprep.subr.mxu0 0.0
      %2362 = vmatpush1.msra.mxu0 0.0
      %2363 = vmatprep.subr.mxu0 0.0
      %2364 = vmatpush1.msra.mxu0 0.0
      %2365 = vmatprep.subr.mxu0 0.0
      %2366 = vmatpush1.msra.mxu0 0.0
      %2367 = vmatprep.subr.mxu0 0.0
      %2368 = vmatpush1.msra.mxu0 0.0
      %2369 = vmatprep.subr.mxu0 0.0
      %2370 = vmatpush1.msra.mxu0 0.0
      %2371 = vmatprep.subr.mxu0 0.0
      %2372 = vmatpush1.msra.mxu0 0.0
      %2373 = vmatprep.subr.mxu0 0.0
      %2374 = vmatpush1.msra.mxu0 0.0
      %2375 = vmatprep.subr.mxu0 0.0
      %2376 = vmatpush1.msra.mxu0 0.0
      %2377 = vmatprep.subr.mxu0 0.0
      %2378 = vmatpush1.msra.mxu0 0.0
      %2379 = vmatprep.subr.mxu0 0.0
      %2380 = vmatpush1.msra.mxu0 0.0
      %2381 = vmatprep.subr.mxu0 0.0
      %2382 = vmatpush1.msra.mxu0 0.0
      %2383 = vmatprep.subr.mxu0 0.0
      %2384 = vmatpush1.msra.mxu0 0.0
      %2385 = vmatprep.subr.mxu0 0.0
      %2386 = vmatpush1.msra.mxu0 0.0
      %2387 = vmatprep.subr.mxu0 0.0
      %2388 = vmatpush1.msra.mxu0 0.0
      %2389 = vmatprep.subr.mxu0 0.0
      %2390 = vmatpush1.msra.mxu0 0.0
      %2391 = vmatprep.subr.mxu0 0.0
      %2392 = vmatpush1.msra.mxu0 0.0
      %2393 = vmatprep.subr.mxu0 0.0
      %2394 = vmatpush1.msra.mxu0 0.0
      %2395 = vmatprep.subr.mxu0 0.0
      %2396 = vmatpush1.msra.mxu0 0.0
      %2397 = vmatprep.subr.mxu0 0.0
      %2398 = vmatpush1.msra.mxu0 0.0
      %2399 = vmatprep.subr.mxu0 0.0
      %2400 = vmatpush1.msra.mxu0 0.0
      %2401 = vmatprep.subr.mxu0 0.0
      %2402 = vmatpush1.msra.mxu0 0.0
      %2403 = vmatprep.subr.mxu0 0.0
      %2404 = vmatpush1.msra.mxu0 0.0
      %2405 = vmatprep.subr.mxu0 0.0
      %2406 = vmatpush1.msra.mxu0 0.0
      %2407 = vmatprep.subr.mxu0 0.0
      %2408 = vmatpush1.msra.mxu0 0.0
      %2409 = vmatprep.subr.mxu0 0.0
      %2410 = vmatpush1.msra.mxu0 0.0
      %2411 = vmatprep.subr.mxu0 0.0
      %2412 = vmatpush1.msra.mxu0 0.0
      %2413 = vmatprep.mubr.f32.mxu0 0.0
      %2414 = vmatmul.mubr.f32.gmra.mrb[0].mxu0 %v2344
      %v2415 = vpop.f32.mrb[0].mxu0
      %v2416 = vadd.f32 %v2340, %v2415
      %v2417 = vpop.f32.mrb[0].mxu0
      %2418 = vdwg.mxu0
      %s2419 = scalar_lea.vmem %s5, 24
      %v2420 = vld [vmem:[%s2419] sm:$0xff]
      %v2421 = vld [vmem:[%s2419 + $0x8] sm:$0xff]
      %v2422 = vld [vmem:[%s2419 + $0x10] sm:$0xf]
      %v2424 = vsel %vm898, %v1135, 0
      %v2427 = vsel %vm2269, %v2422, 0
      %2429 = vmatprep.subr.mxu0 0.0
      %2430 = vmatpush1.msra.mxu0 %v2420
      %2431 = vmatprep.subr.mxu0 0.0
      %2432 = vmatpush1.msra.mxu0 %v2421
      %2433 = vmatprep.subr.mxu0 0.0
      %2434 = vmatpush1.msra.mxu0 %v2427
      %2435 = vmatprep.subr.mxu0 0.0
      %2436 = vmatpush1.msra.mxu0 0.0
      %2437 = vmatprep.subr.mxu0 0.0
      %2438 = vmatpush1.msra.mxu0 0.0
      %2439 = vmatprep.subr.mxu0 0.0
      %2440 = vmatpush1.msra.mxu0 0.0
      %2441 = vmatprep.subr.mxu0 0.0
      %2442 = vmatpush1.msra.mxu0 0.0
      %2443 = vmatprep.subr.mxu0 0.0
      %2444 = vmatpush1.msra.mxu0 0.0
      %2445 = vmatprep.subr.mxu0 0.0
      %2446 = vmatpush1.msra.mxu0 0.0
      %2447 = vmatprep.subr.mxu0 0.0
      %2448 = vmatpush1.msra.mxu0 0.0
      %2449 = vmatprep.subr.mxu0 0.0
      %2450 = vmatpush1.msra.mxu0 0.0
      %2451 = vmatprep.subr.mxu0 0.0
      %2452 = vmatpush1.msra.mxu0 0.0
      %2453 = vmatprep.subr.mxu0 0.0
      %2454 = vmatpush1.msra.mxu0 0.0
      %2455 = vmatprep.subr.mxu0 0.0
      %2456 = vmatpush1.msra.mxu0 0.0
      %2457 = vmatprep.subr.mxu0 0.0
      %2458 = vmatpush1.msra.mxu0 0.0
      %2459 = vmatprep.subr.mxu0 0.0
      %2460 = vmatpush1.msra.mxu0 0.0
      %2461 = vmatprep.subr.mxu0 0.0
      %2462 = vmatpush1.msra.mxu0 0.0
      %2463 = vmatprep.subr.mxu0 0.0
      %2464 = vmatpush1.msra.mxu0 0.0
      %2465 = vmatprep.subr.mxu0 0.0
      %2466 = vmatpush1.msra.mxu0 0.0
      %2467 = vmatprep.subr.mxu0 0.0
      %2468 = vmatpush1.msra.mxu0 0.0
      %2469 = vmatprep.subr.mxu0 0.0
      %2470 = vmatpush1.msra.mxu0 0.0
      %2471 = vmatprep.subr.mxu0 0.0
      %2472 = vmatpush1.msra.mxu0 0.0
      %2473 = vmatprep.subr.mxu0 0.0
      %2474 = vmatpush1.msra.mxu0 0.0
      %2475 = vmatprep.subr.mxu0 0.0
      %2476 = vmatpush1.msra.mxu0 0.0
      %2477 = vmatprep.subr.mxu0 0.0
      %2478 = vmatpush1.msra.mxu0 0.0
      %2479 = vmatprep.subr.mxu0 0.0
      %2480 = vmatpush1.msra.mxu0 0.0
      %2481 = vmatprep.subr.mxu0 0.0
      %2482 = vmatpush1.msra.mxu0 0.0
      %2483 = vmatprep.subr.mxu0 0.0
      %2484 = vmatpush1.msra.mxu0 0.0
      %2485 = vmatprep.subr.mxu0 0.0
      %2486 = vmatpush1.msra.mxu0 0.0
      %2487 = vmatprep.subr.mxu0 0.0
      %2488 = vmatpush1.msra.mxu0 0.0
      %2489 = vmatprep.subr.mxu0 0.0
      %2490 = vmatpush1.msra.mxu0 0.0
      %2491 = vmatprep.subr.mxu0 0.0
      %2492 = vmatpush1.msra.mxu0 0.0
      %2493 = vmatprep.mubr.f32.mxu0 0.0
      %2494 = vmatmul.mubr.f32.gmra.mrb[0].mxu0 %v2424
      %v2495 = vpop.f32.mrb[0].mxu0
      %v2496 = vadd.f32 0.0, %v2495
      %v2497 = vpop.f32.mrb[0].mxu0
      %2498 = vdwg.mxu0
      %v2499 = vadd.f32 %v2416, %v2496
      %s2500 = scalar_lea.vmem %s5, 120
      %v2501 = vld [vmem:[%s2500] sm:$0xff]
      %v2502 = vld [vmem:[%s2500 + $0x8] sm:$0xff]
      %v2503 = vld [vmem:[%s2500 + $0x10] sm:$0xf]
      %v2505 = vsel %vm898, %v2256, 0
      %v2508 = vsel %vm2269, %v2503, 0
      %2510 = vmatprep.subr.mxu0 0.0
      %2511 = vmatpush1.msra.mxu0 %v2501
      %2512 = vmatprep.subr.mxu0 0.0
      %2513 = vmatpush1.msra.mxu0 %v2502
      %2514 = vmatprep.subr.mxu0 0.0
      %2515 = vmatpush1.msra.mxu0 %v2508
      %2516 = vmatprep.subr.mxu0 0.0
      %2517 = vmatpush1.msra.mxu0 0.0
      %2518 = vmatprep.subr.mxu0 0.0
      %2519 = vmatpush1.msra.mxu0 0.0
      %2520 = vmatprep.subr.mxu0 0.0
      %2521 = vmatpush1.msra.mxu0 0.0
      %2522 = vmatprep.subr.mxu0 0.0
      %2523 = vmatpush1.msra.mxu0 0.0
      %2524 = vmatprep.subr.mxu0 0.0
      %2525 = vmatpush1.msra.mxu0 0.0
      %2526 = vmatprep.subr.mxu0 0.0
      %2527 = vmatpush1.msra.mxu0 0.0
      %2528 = vmatprep.subr.mxu0 0.0
      %2529 = vmatpush1.msra.mxu0 0.0
      %2530 = vmatprep.subr.mxu0 0.0
      %2531 = vmatpush1.msra.mxu0 0.0
      %2532 = vmatprep.subr.mxu0 0.0
      %2533 = vmatpush1.msra.mxu0 0.0
      %2534 = vmatprep.subr.mxu0 0.0
      %2535 = vmatpush1.msra.mxu0 0.0
      %2536 = vmatprep.subr.mxu0 0.0
      %2537 = vmatpush1.msra.mxu0 0.0
      %2538 = vmatprep.subr.mxu0 0.0
      %2539 = vmatpush1.msra.mxu0 0.0
      %2540 = vmatprep.subr.mxu0 0.0
      %2541 = vmatpush1.msra.mxu0 0.0
      %2542 = vmatprep.subr.mxu0 0.0
      %2543 = vmatpush1.msra.mxu0 0.0
      %2544 = vmatprep.subr.mxu0 0.0
      %2545 = vmatpush1.msra.mxu0 0.0
      %2546 = vmatprep.subr.mxu0 0.0
      %2547 = vmatpush1.msra.mxu0 0.0
      %2548 = vmatprep.subr.mxu0 0.0
      %2549 = vmatpush1.msra.mxu0 0.0
      %2550 = vmatprep.subr.mxu0 0.0
      %2551 = vmatpush1.msra.mxu0 0.0
      %2552 = vmatprep.subr.mxu0 0.0
      %2553 = vmatpush1.msra.mxu0 0.0
      %2554 = vmatprep.subr.mxu0 0.0
      %2555 = vmatpush1.msra.mxu0 0.0
      %2556 = vmatprep.subr.mxu0 0.0
      %2557 = vmatpush1.msra.mxu0 0.0
      %2558 = vmatprep.subr.mxu0 0.0
      %2559 = vmatpush1.msra.mxu0 0.0
      %2560 = vmatprep.subr.mxu0 0.0
      %2561 = vmatpush1.msra.mxu0 0.0
      %2562 = vmatprep.subr.mxu0 0.0
      %2563 = vmatpush1.msra.mxu0 0.0
      %2564 = vmatprep.subr.mxu0 0.0
      %2565 = vmatpush1.msra.mxu0 0.0
      %2566 = vmatprep.subr.mxu0 0.0
      %2567 = vmatpush1.msra.mxu0 0.0
      %2568 = vmatprep.subr.mxu0 0.0
      %2569 = vmatpush1.msra.mxu0 0.0
      %2570 = vmatprep.subr.mxu0 0.0
      %2571 = vmatpush1.msra.mxu0 0.0
      %2572 = vmatprep.subr.mxu0 0.0
      %2573 = vmatpush1.msra.mxu0 0.0
      %2574 = vmatprep.mubr.f32.mxu0 0.0
      %2575 = vmatmul.mubr.f32.gmra.mrb[0].mxu0 %v2505
      %v2576 = vpop.f32.mrb[0].mxu0
      %v2577 = vadd.f32 0.0, %v2576
      %v2578 = vpop.f32.mrb[0].mxu0
      %2579 = vdwg.mxu0
      %v2580 = vadd.f32 %v2499, %v2577
      %s2581 = scalar_lea.vmem %s5, 48
      %v2582 = vld [vmem:[%s2581] sm:$0xff]
      %v2583 = vld [vmem:[%s2581 + $0x8] sm:$0xff]
      %v2584 = vld [vmem:[%s2581 + $0x10] sm:$0xf]
      %v2586 = vsel %vm898, %v1136, 0
      %v2589 = vsel %vm2269, %v2584, 0
      %2591 = vmatprep.subr.mxu0 0.0
      %2592 = vmatpush1.msra.mxu0 %v2582
      %2593 = vmatprep.subr.mxu0 0.0
      %2594 = vmatpush1.msra.mxu0 %v2583
      %2595 = vmatprep.subr.mxu0 0.0
      %2596 = vmatpush1.msra.mxu0 %v2589
      %2597 = vmatprep.subr.mxu0 0.0
      %2598 = vmatpush1.msra.mxu0 0.0
      %2599 = vmatprep.subr.mxu0 0.0
      %2600 = vmatpush1.msra.mxu0 0.0
      %2601 = vmatprep.subr.mxu0 0.0
      %2602 = vmatpush1.msra.mxu0 0.0
      %2603 = vmatprep.subr.mxu0 0.0
      %2604 = vmatpush1.msra.mxu0 0.0
      %2605 = vmatprep.subr.mxu0 0.0
      %2606 = vmatpush1.msra.mxu0 0.0
      %2607 = vmatprep.subr.mxu0 0.0
      %2608 = vmatpush1.msra.mxu0 0.0
      %2609 = vmatprep.subr.mxu0 0.0
      %2610 = vmatpush1.msra.mxu0 0.0
      %2611 = vmatprep.subr.mxu0 0.0
      %2612 = vmatpush1.msra.mxu0 0.0
      %2613 = vmatprep.subr.mxu0 0.0
      %2614 = vmatpush1.msra.mxu0 0.0
      %2615 = vmatprep.subr.mxu0 0.0
      %2616 = vmatpush1.msra.mxu0 0.0
      %2617 = vmatprep.subr.mxu0 0.0
      %2618 = vmatpush1.msra.mxu0 0.0
      %2619 = vmatprep.subr.mxu0 0.0
      %2620 = vmatpush1.msra.mxu0 0.0
      %2621 = vmatprep.subr.mxu0 0.0
      %2622 = vmatpush1.msra.mxu0 0.0
      %2623 = vmatprep.subr.mxu0 0.0
      %2624 = vmatpush1.msra.mxu0 0.0
      %2625 = vmatprep.subr.mxu0 0.0
      %2626 = vmatpush1.msra.mxu0 0.0
      %2627 = vmatprep.subr.mxu0 0.0
      %2628 = vmatpush1.msra.mxu0 0.0
      %2629 = vmatprep.subr.mxu0 0.0
      %2630 = vmatpush1.msra.mxu0 0.0
      %2631 = vmatprep.subr.mxu0 0.0
      %2632 = vmatpush1.msra.mxu0 0.0
      %2633 = vmatprep.subr.mxu0 0.0
      %2634 = vmatpush1.msra.mxu0 0.0
      %2635 = vmatprep.subr.mxu0 0.0
      %2636 = vmatpush1.msra.mxu0 0.0
      %2637 = vmatprep.subr.mxu0 0.0
      %2638 = vmatpush1.msra.mxu0 0.0
      %2639 = vmatprep.subr.mxu0 0.0
      %2640 = vmatpush1.msra.mxu0 0.0
      %2641 = vmatprep.subr.mxu0 0.0
      %2642 = vmatpush1.msra.mxu0 0.0
      %2643 = vmatprep.subr.mxu0 0.0
      %2644 = vmatpush1.msra.mxu0 0.0
      %2645 = vmatprep.subr.mxu0 0.0
      %2646 = vmatpush1.msra.mxu0 0.0
      %2647 = vmatprep.subr.mxu0 0.0
      %2648 = vmatpush1.msra.mxu0 0.0
      %2649 = vmatprep.subr.mxu0 0.0
      %2650 = vmatpush1.msra.mxu0 0.0
      %2651 = vmatprep.subr.mxu0 0.0
      %2652 = vmatpush1.msra.mxu0 0.0
      %2653 = vmatprep.subr.mxu0 0.0
      %2654 = vmatpush1.msra.mxu0 0.0
      %2655 = vmatprep.mubr.f32.mxu0 0.0
      %2656 = vmatmul.mubr.f32.gmra.mrb[0].mxu0 %v2586
      %v2657 = vpop.f32.mrb[0].mxu0
      %v2658 = vadd.f32 0.0, %v2657
      %v2659 = vpop.f32.mrb[0].mxu0
      %2660 = vdwg.mxu0
      %v2661 = vadd.f32 %v2580, %v2658
      %s2662 = scalar_lea.vmem %s5, 144
      %v2663 = vld [vmem:[%s2662] sm:$0xff]
      %v2664 = vld [vmem:[%s2662 + $0x8] sm:$0xff]
      %v2665 = vld [vmem:[%s2662 + $0x10] sm:$0xf]
      %v2667 = vsel %vm898, %v2257, 0
      %v2670 = vsel %vm2269, %v2665, 0
      %2672 = vmatprep.subr.mxu0 0.0
      %2673 = vmatpush1.msra.mxu0 %v2663
      %2674 = vmatprep.subr.mxu0 0.0
      %2675 = vmatpush1.msra.mxu0 %v2664
      %2676 = vmatprep.subr.mxu0 0.0
      %2677 = vmatpush1.msra.mxu0 %v2670
      %2678 = vmatprep.subr.mxu0 0.0
      %2679 = vmatpush1.msra.mxu0 0.0
      %2680 = vmatprep.subr.mxu0 0.0
      %2681 = vmatpush1.msra.mxu0 0.0
      %2682 = vmatprep.subr.mxu0 0.0
      %2683 = vmatpush1.msra.mxu0 0.0
      %2684 = vmatprep.subr.mxu0 0.0
      %2685 = vmatpush1.msra.mxu0 0.0
      %2686 = vmatprep.subr.mxu0 0.0
      %2687 = vmatpush1.msra.mxu0 0.0
      %2688 = vmatprep.subr.mxu0 0.0
      %2689 = vmatpush1.msra.mxu0 0.0
      %2690 = vmatprep.subr.mxu0 0.0
      %2691 = vmatpush1.msra.mxu0 0.0
      %2692 = vmatprep.subr.mxu0 0.0
      %2693 = vmatpush1.msra.mxu0 0.0
      %2694 = vmatprep.subr.mxu0 0.0
      %2695 = vmatpush1.msra.mxu0 0.0
      %2696 = vmatprep.subr.mxu0 0.0
      %2697 = vmatpush1.msra.mxu0 0.0
      %2698 = vmatprep.subr.mxu0 0.0
      %2699 = vmatpush1.msra.mxu0 0.0
      %2700 = vmatprep.subr.mxu0 0.0
      %2701 = vmatpush1.msra.mxu0 0.0
      %2702 = vmatprep.subr.mxu0 0.0
      %2703 = vmatpush1.msra.mxu0 0.0
      %2704 = vmatprep.subr.mxu0 0.0
      %2705 = vmatpush1.msra.mxu0 0.0
      %2706 = vmatprep.subr.mxu0 0.0
      %2707 = vmatpush1.msra.mxu0 0.0
      %2708 = vmatprep.subr.mxu0 0.0
      %2709 = vmatpush1.msra.mxu0 0.0
      %2710 = vmatprep.subr.mxu0 0.0
      %2711 = vmatpush1.msra.mxu0 0.0
      %2712 = vmatprep.subr.mxu0 0.0
      %2713 = vmatpush1.msra.mxu0 0.0
      %2714 = vmatprep.subr.mxu0 0.0
      %2715 = vmatpush1.msra.mxu0 0.0
      %2716 = vmatprep.subr.mxu0 0.0
      %2717 = vmatpush1.msra.mxu0 0.0
      %2718 = vmatprep.subr.mxu0 0.0
      %2719 = vmatpush1.msra.mxu0 0.0
      %2720 = vmatprep.subr.mxu0 0.0
      %2721 = vmatpush1.msra.mxu0 0.0
      %2722 = vmatprep.subr.mxu0 0.0
      %2723 = vmatpush1.msra.mxu0 0.0
      %2724 = vmatprep.subr.mxu0 0.0
      %2725 = vmatpush1.msra.mxu0 0.0
      %2726 = vmatprep.subr.mxu0 0.0
      %2727 = vmatpush1.msra.mxu0 0.0
      %2728 = vmatprep.subr.mxu0 0.0
      %2729 = vmatpush1.msra.mxu0 0.0
      %2730 = vmatprep.subr.mxu0 0.0
      %2731 = vmatpush1.msra.mxu0 0.0
      %2732 = vmatprep.subr.mxu0 0.0
      %2733 = vmatpush1.msra.mxu0 0.0
      %2734 = vmatprep.subr.mxu0 0.0
      %2735 = vmatpush1.msra.mxu0 0.0
      %2736 = vmatprep.mubr.f32.mxu0 0.0
      %2737 = vmatmul.mubr.f32.gmra.mrb[0].mxu0 %v2667
      %v2738 = vpop.f32.mrb[0].mxu0
      %v2739 = vadd.f32 0.0, %v2738
      %v2740 = vpop.f32.mrb[0].mxu0
      %2741 = vdwg.mxu0
      %v2742 = vadd.f32 %v2661, %v2739
      %s2743 = scalar_lea.vmem %s5, 72
      %v2744 = vld [vmem:[%s2743] sm:$0xff]
      %v2745 = vld [vmem:[%s2743 + $0x8] sm:$0xff]
      %v2746 = vld [vmem:[%s2743 + $0x10] sm:$0xf]
      %v2748 = vsel %vm898, %v1137, 0
      %v2751 = vsel %vm2269, %v2746, 0
      %2753 = vmatprep.subr.mxu0 0.0
      %2754 = vmatpush1.msra.mxu0 %v2744
      %2755 = vmatprep.subr.mxu0 0.0
      %2756 = vmatpush1.msra.mxu0 %v2745
      %2757 = vmatprep.subr.mxu0 0.0
      %2758 = vmatpush1.msra.mxu0 %v2751
      %2759 = vmatprep.subr.mxu0 0.0
      %2760 = vmatpush1.msra.mxu0 0.0
      %2761 = vmatprep.subr.mxu0 0.0
      %2762 = vmatpush1.msra.mxu0 0.0
      %2763 = vmatprep.subr.mxu0 0.0
      %2764 = vmatpush1.msra.mxu0 0.0
      %2765 = vmatprep.subr.mxu0 0.0
      %2766 = vmatpush1.msra.mxu0 0.0
      %2767 = vmatprep.subr.mxu0 0.0
      %2768 = vmatpush1.msra.mxu0 0.0
      %2769 = vmatprep.subr.mxu0 0.0
      %2770 = vmatpush1.msra.mxu0 0.0
      %2771 = vmatprep.subr.mxu0 0.0
      %2772 = vmatpush1.msra.mxu0 0.0
      %2773 = vmatprep.subr.mxu0 0.0
      %2774 = vmatpush1.msra.mxu0 0.0
      %2775 = vmatprep.subr.mxu0 0.0
      %2776 = vmatpush1.msra.mxu0 0.0
      %2777 = vmatprep.subr.mxu0 0.0
      %2778 = vmatpush1.msra.mxu0 0.0
      %2779 = vmatprep.subr.mxu0 0.0
      %2780 = vmatpush1.msra.mxu0 0.0
      %2781 = vmatprep.subr.mxu0 0.0
      %2782 = vmatpush1.msra.mxu0 0.0
      %2783 = vmatprep.subr.mxu0 0.0
      %2784 = vmatpush1.msra.mxu0 0.0
      %2785 = vmatprep.subr.mxu0 0.0
      %2786 = vmatpush1.msra.mxu0 0.0
      %2787 = vmatprep.subr.mxu0 0.0
      %2788 = vmatpush1.msra.mxu0 0.0
      %2789 = vmatprep.subr.mxu0 0.0
      %2790 = vmatpush1.msra.mxu0 0.0
      %2791 = vmatprep.subr.mxu0 0.0
      %2792 = vmatpush1.msra.mxu0 0.0
      %2793 = vmatprep.subr.mxu0 0.0
      %2794 = vmatpush1.msra.mxu0 0.0
      %2795 = vmatprep.subr.mxu0 0.0
      %2796 = vmatpush1.msra.mxu0 0.0
      %2797 = vmatprep.subr.mxu0 0.0
      %2798 = vmatpush1.msra.mxu0 0.0
      %2799 = vmatprep.subr.mxu0 0.0
      %2800 = vmatpush1.msra.mxu0 0.0
      %2801 = vmatprep.subr.mxu0 0.0
      %2802 = vmatpush1.msra.mxu0 0.0
      %2803 = vmatprep.subr.mxu0 0.0
      %2804 = vmatpush1.msra.mxu0 0.0
      %2805 = vmatprep.subr.mxu0 0.0
      %2806 = vmatpush1.msra.mxu0 0.0
      %2807 = vmatprep.subr.mxu0 0.0
      %2808 = vmatpush1.msra.mxu0 0.0
      %2809 = vmatprep.subr.mxu0 0.0
      %2810 = vmatpush1.msra.mxu0 0.0
      %2811 = vmatprep.subr.mxu0 0.0
      %2812 = vmatpush1.msra.mxu0 0.0
      %2813 = vmatprep.subr.mxu0 0.0
      %2814 = vmatpush1.msra.mxu0 0.0
      %2815 = vmatprep.subr.mxu0 0.0
      %2816 = vmatpush1.msra.mxu0 0.0
      %2817 = vmatprep.mubr.f32.mxu0 0.0
      %2818 = vmatmul.mubr.f32.gmra.mrb[0].mxu0 %v2748
      %v2819 = vpop.f32.mrb[0].mxu0
      %v2820 = vadd.f32 0.0, %v2819
      %v2821 = vpop.f32.mrb[0].mxu0
      %2822 = vdwg.mxu0
      %v2823 = vadd.f32 %v2742, %v2820
      %s2824 = scalar_lea.vmem %s5, 168
      %v2825 = vld [vmem:[%s2824] sm:$0xff]
      %v2826 = vld [vmem:[%s2824 + $0x8] sm:$0xff]
      %v2827 = vld [vmem:[%s2824 + $0x10] sm:$0xf]
      %v2829 = vsel %vm898, %v2258, 0
      %v2832 = vsel %vm2269, %v2827, 0
      %2834 = vmatprep.subr.mxu0 0.0
      %2835 = vmatpush1.msra.mxu0 %v2825
      %2836 = vmatprep.subr.mxu0 0.0
      %2837 = vmatpush1.msra.mxu0 %v2826
      %2838 = vmatprep.subr.mxu0 0.0
      %2839 = vmatpush1.msra.mxu0 %v2832
      %2840 = vmatprep.subr.mxu0 0.0
      %2841 = vmatpush1.msra.mxu0 0.0
      %2842 = vmatprep.subr.mxu0 0.0
      %2843 = vmatpush1.msra.mxu0 0.0
      %2844 = vmatprep.subr.mxu0 0.0
      %2845 = vmatpush1.msra.mxu0 0.0
      %2846 = vmatprep.subr.mxu0 0.0
      %2847 = vmatpush1.msra.mxu0 0.0
      %2848 = vmatprep.subr.mxu0 0.0
      %2849 = vmatpush1.msra.mxu0 0.0
      %2850 = vmatprep.subr.mxu0 0.0
      %2851 = vmatpush1.msra.mxu0 0.0
      %2852 = vmatprep.subr.mxu0 0.0
      %2853 = vmatpush1.msra.mxu0 0.0
      %2854 = vmatprep.subr.mxu0 0.0
      %2855 = vmatpush1.msra.mxu0 0.0
      %2856 = vmatprep.subr.mxu0 0.0
      %2857 = vmatpush1.msra.mxu0 0.0
      %2858 = vmatprep.subr.mxu0 0.0
      %2859 = vmatpush1.msra.mxu0 0.0
      %2860 = vmatprep.subr.mxu0 0.0
      %2861 = vmatpush1.msra.mxu0 0.0
      %2862 = vmatprep.subr.mxu0 0.0
      %2863 = vmatpush1.msra.mxu0 0.0
      %2864 = vmatprep.subr.mxu0 0.0
      %2865 = vmatpush1.msra.mxu0 0.0
      %2866 = vmatprep.subr.mxu0 0.0
      %2867 = vmatpush1.msra.mxu0 0.0
      %2868 = vmatprep.subr.mxu0 0.0
      %2869 = vmatpush1.msra.mxu0 0.0
      %2870 = vmatprep.subr.mxu0 0.0
      %2871 = vmatpush1.msra.mxu0 0.0
      %2872 = vmatprep.subr.mxu0 0.0
      %2873 = vmatpush1.msra.mxu0 0.0
      %2874 = vmatprep.subr.mxu0 0.0
      %2875 = vmatpush1.msra.mxu0 0.0
      %2876 = vmatprep.subr.mxu0 0.0
      %2877 = vmatpush1.msra.mxu0 0.0
      %2878 = vmatprep.subr.mxu0 0.0
      %2879 = vmatpush1.msra.mxu0 0.0
      %2880 = vmatprep.subr.mxu0 0.0
      %2881 = vmatpush1.msra.mxu0 0.0
      %2882 = vmatprep.subr.mxu0 0.0
      %2883 = vmatpush1.msra.mxu0 0.0
      %2884 = vmatprep.subr.mxu0 0.0
      %2885 = vmatpush1.msra.mxu0 0.0
      %2886 = vmatprep.subr.mxu0 0.0
      %2887 = vmatpush1.msra.mxu0 0.0
      %2888 = vmatprep.subr.mxu0 0.0
      %2889 = vmatpush1.msra.mxu0 0.0
      %2890 = vmatprep.subr.mxu0 0.0
      %2891 = vmatpush1.msra.mxu0 0.0
      %2892 = vmatprep.subr.mxu0 0.0
      %2893 = vmatpush1.msra.mxu0 0.0
      %2894 = vmatprep.subr.mxu0 0.0
      %2895 = vmatpush1.msra.mxu0 0.0
      %2896 = vmatprep.subr.mxu0 0.0
      %2897 = vmatpush1.msra.mxu0 0.0
      %2898 = vmatprep.mubr.f32.mxu0 0.0
      %2899 = vmatmul.mubr.f32.gmra.mrb[0].mxu0 %v2829
      %v2900 = vpop.f32.mrb[0].mxu0
      %v2901 = vadd.f32 0.0, %v2900
      %v2902 = vpop.f32.mrb[0].mxu0
      %2903 = vdwg.mxu0
      %v2904 = vadd.f32 %v2823, %v2901
      %v2905 = vld [vmem:[%s6] sm:$0x1]
      %v2907 = vlaneseq
      %v2908 = vshrl.u32 %v2907, 7
      %v2909 = vsub.s32 0, %v2908
      %v2910 = vrot.slane %v2905, %v2909
      %v2912 = vadd.f32 %v2904, %v2910
      %vm2913 = vcmask 654336
      %2914 = vst.msk [vmem:[%s278] sm:$0xff] %vm2913, %v2912
      %p2915 = scmp.lt.s32.totalorder %s18, 1
      %s2916 = scalar_select %p2915, %s18, 1
      %s2917 = smul.addr %s2916, 8
      %s2918 = scalar_lea.vmem %s7, %s2917
      // Predicated region
      $region49: #{tce_forward.1} parent=47 // pred_check
        %p2919 = pneg %p188
      $region50: #{tce_forward.1} parent=47 // pred_check_branch
        %2921 = sbr.rel (%p2919) target = $region52
      $region51: #{tce_forward.1} parent=47 // pred_region
        _
      $region52: #{tce_forward.1} parent=47 // pred_fallthru
        _
    $region48: #{tce_forward.1} parent=5 // pred_fallthru
      _
    %p2922 = scmp.le.s32.totalorder 2, %s13
    // Predicated region
    $region53: #{tce_forward.1} parent=5 // pred_check
      %p2923 = pneg %p2922
    $region54: #{tce_forward.1} parent=5 // pred_check_branch
      %2925 = sbr.rel (%p2923) target = $region56
    $region55: #{tce_forward.1} parent=5 // pred_region
      %s2926 = ssub.s32 %s13, 2
      // Predicated region
      $region57: #{tce_forward.1} parent=55 // pred_check
        %p2927 = pneg %p194
      $region58: #{tce_forward.1} parent=55 // pred_check_branch
        %2929 = sbr.rel (%p2927) target = $region60
      $region59: #{tce_forward.1} parent=55 // pred_region
        %p2930 = scmp.lt.s32.totalorder %s19, 1
        %s2931 = scalar_select %p2930, %s19, 1
        %s2932 = smul.addr %s2931, 8
        %s2933 = scalar_lea.vmem %s7, %s2932
      $region60: #{tce_forward.1} parent=55 // pred_fallthru
        _
    $region56: #{tce_forward.1} parent=5 // pred_fallthru
      _
  $region6: #{tce_forward.1} parent=0 // loop_footer
    %s17 = sadd.s32 1, %s13
  $region7: #{tce_forward.1} parent=0 // loop_footer_branch
    %12 = sbr.rel target = $region3
  $region8: #{tce_forward.1} parent=0 // loop_exit
    _

</llo_original>
